<compile_context>
chip_gen: v5e
topology: v5e:2x2
jax: 0.10.0
libtpu: 0.0.40
codegen_flags: <defaults>
</compile_context>

<pallas_src>
import functools

import numpy as np
import jax
import jax.numpy as jnp
from jax.experimental import pallas as pl
from jax.experimental.pallas import tpu as pltpu


# f32 matmul precision: HIGHEST keeps results within ~1e-6 of PyTorch's fp32
# bicubic (default bf16-pass matmuls differ by ~1e-3); the extra MXU passes are
# hidden while the kernel is memory-bound.
_MM_PRECISION = jax.lax.Precision.HIGHEST


@functools.lru_cache(maxsize=None)
def _bicubic_upsample_matrix(in_size: int, scale: int = 2) -> np.ndarray:
    """Dense [scale*in_size, in_size] matrix reproducing PyTorch's
    upsample_bicubic2d (align_corners=False, A=-0.75) along one axis."""
    A = -0.75
    out_size = scale * in_size
    r = np.arange(out_size, dtype=np.float64)
    src = (r + 0.5) / scale - 0.5                 # align_corners=False mapping
    floor = np.floor(src).astype(np.int64)
    t = src - floor

    def cubic1(t):  # |t| <= 1
        return ((A + 2.0) * t - (A + 3.0)) * t * t + 1.0

    def cubic2(t):  # 1 < |t| <= 2
        return ((A * t - 5.0 * A) * t + 8.0 * A) * t - 4.0 * A

    # taps at floor-1, floor, floor+1, floor+2
    w = np.stack([cubic2(t + 1.0), cubic1(t), cubic1(1.0 - t), cubic2(2.0 - t)],
                 axis=1)                           # (out, 4)

    M = np.zeros((out_size, in_size), dtype=np.float64)
    for k in range(4):
        idx = np.clip(floor - 1 + k, 0, in_size - 1)   # edge clamp (replicate)
        np.add.at(M, (r.astype(np.int64), idx), w[:, k])
    return M.astype(np.float32)


def _bicubic_kernel(x_ref, wy_ref, wxT_ref, o_ref):
    # x_ref:   (Bt, H, W)    batch tile of images
    # wy_ref:  (2H, H)       height upsampling matrix
    # wxT_ref: (W, 2W)       width upsampling matrix (transposed)
    # o_ref:   (Bt, 2H, 2W)  natural per-image output layout
    bt, h, w = x_ref.shape
    ho = wy_ref.shape[0]
    wo = wxT_ref.shape[1]

    # Stage 1 (height): fold the batch into the lane (N) dimension.
    xt = x_ref[...].transpose(1, 0, 2).reshape(h, bt * w)              # (H, Bt*W)
    u = jnp.dot(wy_ref[...], xt, precision=_MM_PRECISION,
                preferred_element_type=jnp.float32)                    # (2H, Bt*W)
    # Relayout: batch back into rows so the width matmul's output is already in
    # per-image layout.  This touches the 2x-sized intermediate once in VMEM,
    # instead of the old scheme's extra full-HBM un-fold pass over the 4x output.
    u = u.reshape(ho, bt, w).transpose(1, 0, 2).reshape(bt * ho, w)    # (Bt*2H, W)
    # Stage 2 (width): batch folded into the MXU M dimension.
    y = jnp.dot(u, wxT_ref[...], precision=_MM_PRECISION,
                preferred_element_type=jnp.float32)                    # (Bt*2H, 2W)
    o_ref[...] = y.reshape(bt, ho, wo).astype(o_ref.dtype)


def _vmem_limit_bytes() -> int:
    """Scoped-VMEM limit: most of physical VMEM minus headroom for compiler
    scratch.  128 MiB parts (v5e/v6e) -> 96 MiB, 64 MiB parts (v7x) -> 48 MiB."""
    mib = 1024 * 1024
    try:
        cap = int(pltpu.get_tpu_info().vmem_capacity_bytes)
    except Exception:
        cap = 64 * mib                      # conservative (v7x-sized) fallback
    if cap <= 0:
        cap = 64 * mib
    return int(max(32 * mib, min(cap - 16 * mib, 96 * mib)))


def _choose_batch_tile(nc: int, h: int, w: int, vmem_limit: int) -> int:
    """How many (n, c) images to process per grid step."""
    img_bytes = h * w * 4                                  # one f32 input image
    # Worst case: weights end up double-buffered (if Buffered(1) is rejected).
    weight_bytes = 2 * (2 * h * h + 2 * w * w) * 4
    budget = max(vmem_limit - weight_bytes - 8 * 1024 * 1024, 1024 * 1024)
    # Per image per step (f32): 2x input (double-buffered) + 8x output (4x-sized,
    # double-buffered) + ~6x live intermediates ~= 16x; use 20x for headroom
    # (relayout temporaries, compiler-internal scratch).
    bt = max(1, budget // (20 * img_bytes))
    bt = min(bt, nc)
    if nc >= 2:
        # Keep >= 2 roughly-even grid tiles so the v7x megacore's 2nd core has
        # work; a no-op on v5e/v6e (single TensorCore).
        bt = min(bt, -(-nc // 2))
    return int(max(1, bt))


def bicubic_x2(x: jax.Array) -> jax.Array:
    """x: (N, C, H, W) float32 -> (N, C, 2H, 2W), bicubic, align_corners=False."""
    N, C, H, W = x.shape
    Ho, Wo = 2 * H, 2 * W
    NC = N * C

    wy = jnp.asarray(_bicubic_upsample_matrix(H))        # (2H, H)
    wxT = jnp.asarray(_bicubic_upsample_matrix(W).T)     # (W, 2W)

    vmem_limit = _vmem_limit_bytes()
    bt = _choose_batch_tile(NC, H, W, vmem_limit)
    num_tiles = -(-NC // bt)

    x_flat = x.reshape(NC, H, W)                         # free reshape, no pad

    cost = pl.CostEstimate(
        flops=4 * NC * H * W * (H + 2 * W),
        transcendentals=0,
        bytes_accessed=4 * (NC * H * W + NC * Ho * Wo + Ho * H + W * Wo),
    )

    def build(single_buffer_weights: bool):
        w_kwargs = ({"pipeline_mode": pl.Buffered(1)}
                    if single_buffer_weights else {})
        return pl.pallas_call(
            _bicubic_kernel,
            out_shape=jax.ShapeDtypeStruct((NC, Ho, Wo), x.dtype),
            grid_spec=pltpu.PrefetchScalarGridSpec(
                num_scalar_prefetch=0,
                grid=(num_tiles,),
                in_specs=[
                    pl.BlockSpec((bt, H, W), lambda i: (i, 0, 0)),
                    pl.BlockSpec((Ho, H), lambda i: (0, 0), **w_kwargs),
                    pl.BlockSpec((W, Wo), lambda i: (0, 0), **w_kwargs),
                ],
                out_specs=pl.BlockSpec((bt, Ho, Wo), lambda i: (i, 0, 0)),
            ),
            compiler_params=pltpu.CompilerParams(
                dimension_semantics=("parallel",),
                vmem_limit_bytes=vmem_limit,
            ),
            cost_estimate=cost,
        )

    try:
        out = build(True)(x_flat, wy, wxT)
    except Exception:
        # Pallas version without pipeline_mode / Buffered(1): fall back to the
        # default double-buffered weight specs (already covered by the budget).
        out = build(False)(x_flat, wy, wxT)

    return out.reshape(N, C, Ho, Wo)


if __name__ == "__main__":
    key = jax.random.PRNGKey(0)
    N, C, H, W = 2, 4, 16, 16
    x = jax.random.normal(key, (N, C, H, W), dtype=jnp.float32)

    out = bicubic_x2(x)
    jax.block_until_ready(out)

    # Reference: same separable bicubic evaluated in plain JAX at high precision.
    wy = jnp.asarray(_bicubic_upsample_matrix(H))
    wx = jnp.asarray(_bicubic_upsample_matrix(W))
    ref = jnp.einsum('oh,nchw,pw->ncop', wy, x, wx,
                     precision=jax.lax.Precision.HIGHEST)
    assert out.shape == (N, C, 2 * H, 2 * W)
    assert jnp.allclose(out, ref, atol=1e-4, rtol=1e-4)

    print("KERNEL_OK")
</pallas_src>

<mosaic_0001>
module attributes {stable_mosaic.version = 11 : i64} {
  func.func @_bicubic_kernel(%arg0: i32, %arg1: memref<4x16x16xf32, #tpu.memory_space<vmem>>, %arg2: memref<32x16xf32, #tpu.memory_space<vmem>>, %arg3: memref<16x32xf32, #tpu.memory_space<vmem>>, %arg4: memref<4x32x32xf32, #tpu.memory_space<vmem>>) attributes {dimension_semantics = [#tpu.dimension_semantics<parallel>], iteration_bounds = array<i64: 2>, scalar_prefetch = 0 : i64, scratch_operands = 0 : i64, tpu.core_type = #tpu.core_type<tc>, window_params = [{transform_indices = @transform_0, window_bounds = array<i64: 4, 16, 16>}, {pipeline_mode = #tpu.pipeline_mode<synchronous>, transform_indices = @transform_1, window_bounds = array<i64: 32, 16>}, {pipeline_mode = #tpu.pipeline_mode<synchronous>, transform_indices = @transform_2, window_bounds = array<i64: 16, 32>}, {transform_indices = @transform_3, window_bounds = array<i64: 4, 32, 32>}]} {
    %c0 = arith.constant 0 : index
    %c0_0 = arith.constant 0 : index
    %c0_1 = arith.constant 0 : index
    %0 = vector.load %arg1[%c0, %c0_0, %c0_1] : memref<4x16x16xf32, #tpu.memory_space<vmem>>, vector<4x16x16xf32>
    %1 = tpu.transpose %0, [1, 0, 2] : vector<4x16x16xf32> -> vector<16x4x16xf32>
    %2 = vector.shape_cast %1 : vector<16x4x16xf32> to vector<16x64xf32>
    %c0_2 = arith.constant 0 : index
    %c0_3 = arith.constant 0 : index
    %3 = vector.load %arg2[%c0_2, %c0_3] : memref<32x16xf32, #tpu.memory_space<vmem>>, vector<32x16xf32>
    %cst = arith.constant dense<0.000000e+00> : vector<32x64xf32>
    %4 = tpu.matmul %3, %2, %cst {dimension_numbers = #tpu.dot_dimension_numbers<[1], [0], [0], [1], [0, 0, 1, 1], [], []>, precision = #tpu.contract_precision<fp32>} : vector<32x16xf32>, vector<16x64xf32>, vector<32x64xf32> -> vector<32x64xf32>
    %5 = vector.shape_cast %4 : vector<32x64xf32> to vector<32x4x16xf32>
    %6 = tpu.transpose %5, [1, 0, 2] : vector<32x4x16xf32> -> vector<4x32x16xf32>
    %7 = vector.shape_cast %6 : vector<4x32x16xf32> to vector<128x16xf32>
    %c0_4 = arith.constant 0 : index
    %c0_5 = arith.constant 0 : index
    %8 = vector.load %arg3[%c0_4, %c0_5] : memref<16x32xf32, #tpu.memory_space<vmem>>, vector<16x32xf32>
    %cst_6 = arith.constant dense<0.000000e+00> : vector<128x32xf32>
    %9 = tpu.matmul %7, %8, %cst_6 {dimension_numbers = #tpu.dot_dimension_numbers<[1], [0], [0], [1], [0, 0, 1, 1], [], []>, precision = #tpu.contract_precision<fp32>} : vector<128x16xf32>, vector<16x32xf32>, vector<128x32xf32> -> vector<128x32xf32>
    %10 = vector.shape_cast %9 : vector<128x32xf32> to vector<4x32x32xf32>
    %c0_7 = arith.constant 0 : index
    %c0_8 = arith.constant 0 : index
    %c0_9 = arith.constant 0 : index
    %11 = vector.load %arg4[%c0_7, %c0_8, %c0_9] : memref<4x32x32xf32, #tpu.memory_space<vmem>>, vector<4x32x32xf32>
    tpu.vector_store %arg4[%c0_7, %c0_8, %c0_9], %10 {strides = array<i32>} : memref<4x32x32xf32, #tpu.memory_space<vmem>>, vector<4x32x32xf32>,
    return
  }
  func.func @transform_0(%arg0: i32) -> (i32, i32, i32) {
    %c0_i32 = arith.constant 0 : i32
    %c0_i32_0 = arith.constant 0 : i32
    %c0_i32_1 = arith.constant 0 : i32
    return %arg0, %c0_i32, %c0_i32_0 : i32, i32, i32
  }
  func.func @transform_1(%arg0: i32) -> (i32, i32) {
    %c0_i32 = arith.constant 0 : i32
    %c0_i32_0 = arith.constant 0 : i32
    %c0_i32_1 = arith.constant 0 : i32
    return %c0_i32, %c0_i32_0 : i32, i32
  }
  func.func @transform_2(%arg0: i32) -> (i32, i32) {
    %c0_i32 = arith.constant 0 : i32
    %c0_i32_0 = arith.constant 0 : i32
    %c0_i32_1 = arith.constant 0 : i32
    return %c0_i32, %c0_i32_0 : i32, i32
  }
  func.func @transform_3(%arg0: i32) -> (i32, i32, i32) {
    %c0_i32 = arith.constant 0 : i32
    %c0_i32_0 = arith.constant 0 : i32
    %c0_i32_1 = arith.constant 0 : i32
    return %arg0, %c0_i32, %c0_i32_0 : i32, i32, i32
  }
}

module attributes {stable_mosaic.version = 11 : i64} {
  func.func @_bicubic_kernel(%arg0: i32, %arg1: memref<4x16x16xf32, #tpu.memory_space<vmem>>, %arg2: memref<32x16xf32, #tpu.memory_space<vmem>>, %arg3: memref<16x32xf32, #tpu.memory_space<vmem>>, %arg4: memref<4x32x32xf32, #tpu.memory_space<vmem>>) attributes {dimension_semantics = [#tpu.dimension_semantics<parallel>], iteration_bounds = array<i64: 2>, scalar_prefetch = 0 : i64, scratch_operands = 0 : i64, tpu.core_type = #tpu.core_type<tc>, window_params = [{transform_indices = @transform_0, window_bounds = array<i64: 4, 16, 16>}, {pipeline_mode = #tpu.pipeline_mode<synchronous>, transform_indices = @transform_1, window_bounds = array<i64: 32, 16>}, {pipeline_mode = #tpu.pipeline_mode<synchronous>, transform_indices = @transform_2, window_bounds = array<i64: 16, 32>}, {transform_indices = @transform_3, window_bounds = array<i64: 4, 32, 32>}]} {
    %c0 = arith.constant 0 : index
    %c0_0 = arith.constant 0 : index
    %c0_1 = arith.constant 0 : index
    %0 = vector.load %arg1[%c0, %c0_0, %c0_1] : memref<4x16x16xf32, #tpu.memory_space<vmem>>, vector<4x16x16xf32>
    %1 = tpu.transpose %0, [1, 0, 2] : vector<4x16x16xf32> -> vector<16x4x16xf32>
    %2 = vector.shape_cast %1 : vector<16x4x16xf32> to vector<16x64xf32>
    %c0_2 = arith.constant 0 : index
    %c0_3 = arith.constant 0 : index
    %3 = vector.load %arg2[%c0_2, %c0_3] : memref<32x16xf32, #tpu.memory_space<vmem>>, vector<32x16xf32>
    %cst = arith.constant dense<0.000000e+00> : vector<32x64xf32>
    %4 = tpu.matmul %3, %2, %cst {dimension_numbers = #tpu.dot_dimension_numbers<[1], [0], [0], [1], [0, 0, 1, 1], [], []>, precision = #tpu.contract_precision<fp32>} : vector<32x16xf32>, vector<16x64xf32>, vector<32x64xf32> -> vector<32x64xf32>
    %5 = vector.shape_cast %4 : vector<32x64xf32> to vector<32x4x16xf32>
    %6 = tpu.transpose %5, [1, 0, 2] : vector<32x4x16xf32> -> vector<4x32x16xf32>
    %7 = vector.shape_cast %6 : vector<4x32x16xf32> to vector<128x16xf32>
    %c0_4 = arith.constant 0 : index
    %c0_5 = arith.constant 0 : index
    %8 = vector.load %arg3[%c0_4, %c0_5] : memref<16x32xf32, #tpu.memory_space<vmem>>, vector<16x32xf32>
    %cst_6 = arith.constant dense<0.000000e+00> : vector<128x32xf32>
    %9 = tpu.matmul %7, %8, %cst_6 {dimension_numbers = #tpu.dot_dimension_numbers<[1], [0], [0], [1], [0, 0, 1, 1], [], []>, precision = #tpu.contract_precision<fp32>} : vector<128x16xf32>, vector<16x32xf32>, vector<128x32xf32> -> vector<128x32xf32>
    %10 = vector.shape_cast %9 : vector<128x32xf32> to vector<4x32x32xf32>
    %c0_7 = arith.constant 0 : index
    %c0_8 = arith.constant 0 : index
    %c0_9 = arith.constant 0 : index
    %11 = vector.load %arg4[%c0_7, %c0_8, %c0_9] : memref<4x32x32xf32, #tpu.memory_space<vmem>>, vector<4x32x32xf32>
    tpu.vector_store %arg4[%c0_7, %c0_8, %c0_9], %10 {strides = array<i32>} : memref<4x32x32xf32, #tpu.memory_space<vmem>>, vector<4x32x32xf32>,
    return
  }
  func.func @transform_0(%arg0: i32) -> (i32, i32, i32) {
    %c0_i32 = arith.constant 0 : i32
    %c0_i32_0 = arith.constant 0 : i32
    %c0_i32_1 = arith.constant 0 : i32
    return %arg0, %c0_i32, %c0_i32_0 : i32, i32, i32
  }
  func.func @transform_1(%arg0: i32) -> (i32, i32) {
    %c0_i32 = arith.constant 0 : i32
    %c0_i32_0 = arith.constant 0 : i32
    %c0_i32_1 = arith.constant 0 : i32
    return %c0_i32, %c0_i32_0 : i32, i32
  }
  func.func @transform_2(%arg0: i32) -> (i32, i32) {
    %c0_i32 = arith.constant 0 : i32
    %c0_i32_0 = arith.constant 0 : i32
    %c0_i32_1 = arith.constant 0 : i32
    return %c0_i32, %c0_i32_0 : i32, i32
  }
  func.func @transform_3(%arg0: i32) -> (i32, i32, i32) {
    %c0_i32 = arith.constant 0 : i32
    %c0_i32_0 = arith.constant 0 : i32
    %c0_i32_1 = arith.constant 0 : i32
    return %arg0, %c0_i32, %c0_i32_0 : i32, i32, i32
  }
}

</mosaic_0001>

<llo_original>
// kernel: tpu_custom_call.1
$region0: #{tpu_custom_call.1}
  #allocation0 [shape = 'u32[]', space=smem, size = 0x4, offset = 0x4, fixed_abs, tag = 'smem constant byte address 0x4 - core index']
  #allocation1 [shape = 'u32[72,128]{1,0:T(1,128)}', space=vmem, size = 0x9000, scoped, tag = 'internal scratch']
  %s0 = inlined_call_operand.hbm [shape: f32[8,16,16], index: 0, kind: input, shape index: {}]
  %s1 = inlined_call_operand.vmem [shape: f32[32,16], index: 1, kind: input, shape index: {}]
  %s2 = inlined_call_operand.vmem [shape: f32[16,32], index: 2, kind: input, shape index: {}]
  %s3 = inlined_call_operand.hbm [shape: f32[8,32,32], index: 3, kind: output, shape index: {}]
  %s4 = sld [smem:[#allocation0]]
  $region49: #{tpu_custom_call.1} parent=0
    _
  %s6 = ssub.s32 1, %s4
  %s7 = scalar_select 0, %s6, %s4
  $region1: #{tpu_custom_call.1} parent=0
    #allocation2 [shape = 'u8[65536]{0}', space=vmem, size = 0x10000, scoped, tag = 'input window, operand 0']
    #allocation3 [shape = 's32[2]{0}', space=sflag, size = 0x8, scoped, tag = 'scoped memory for tpu_custom_call.1']
    #allocation4 [shape = 's32[2]{0}', space=sflag, size = 0x8, scoped, tag = 'scoped memory for tpu_custom_call.1']
    #allocation5 [shape = 'u8[131072]{0}', space=vmem, size = 0x20000, scoped, tag = 'output window, operand 0']
    %8 = vsyncpa [#allocation3], 0
    %s9 = scalar_lea.sflag [#allocation3], 1
    %10 = vsyncpa %s9, 0
    %11 = vsyncpa [#allocation4], 0
    %s12 = scalar_lea.sflag [#allocation4], 1
    %13 = vsyncpa %s12, 0
    loop: start=0, step=1, limit=4
    $region2: #{tpu_custom_call.1} parent=1 // loop_pre_header
      _
    $region3: #{tpu_custom_call.1} parent=1 // loop_header
      %s15 = sphi 0, %s19
      %p16 = scmp.ge.s32.totalorder %s15, 4
      %s25 = sphi 0, %s27
      %s28 = sphi 0, %s25
      %s29 = sphi 0, %s28
      %s45 = sphi 0, %s29
      %s49 = sphi 0, %s49
      %s51 = sphi 0, %s49
      %s52 = sphi 0, %s51
      %s66 = sphi 0, %s52
      %s70 = sphi 0, %s70
      %s72 = sphi 0, %s70
      %s73 = sphi 0, %s72
      %s87 = sphi 0, %s73
      %s93 = sphi 0, %s95
      %s96 = sphi 0, %s93
      %s97 = sphi 0, %s96
      %s113 = sphi 0, %s97
    $region4: #{tpu_custom_call.1} parent=1 // loop_header_branch
      %18 = sbr.rel (%p16) target = $region8
    $region5: #{tpu_custom_call.1} parent=1 // loop_body
      %s20 = ssub.s32 %s15, 1
      %s21 = ssub.s32 %s15, 2
      %s22 = sadd.s32 %s15, 1
      %s23 = ssub.s32 %s15, %s22
      %p24 = scmp.eq.s32.totalorder %s23, 0
      %s26 = sadd.s32 %s25, 1
      %s27 = scalar_select %p24, %s25, %s26
      %p30 = pneg %p24
      %p31 = scmp.eq.s32.totalorder %s15, 1
      %p32 = por %p30, %p31
      %p33 = scmp.ne.s32.totalorder %s25, %s28
      %p34 = scmp.eq.s32.totalorder %s15, 0
      %p35 = por %p33, %p34
      %p36 = scmp.ne.s32.totalorder %s25, %s28
      %p37 = scmp.eq.s32.totalorder %s20, 1
      %p38 = por %p36, %p37
      %p39 = scmp.ne.s32.totalorder %s28, %s29
      %p40 = scmp.eq.s32.totalorder %s20, 0
      %p41 = por %p39, %p40
      %p42 = scmp.ne.s32.totalorder %s28, %s29
      %p43 = scmp.eq.s32.totalorder %s21, 1
      %p44 = por %p42, %p43
      %p46 = scmp.ne.s32.totalorder %s29, %s45
      %p47 = scmp.eq.s32.totalorder %s21, 0
      %p48 = por %p46, %p47
      %s50 = sadd.s32 %s49, 1
      %p53 = scmp.eq.s32.totalorder %s15, 1
      %p54 = scmp.ne.s32.totalorder %s49, %s51
      %p55 = scmp.eq.s32.totalorder %s15, 0
      %p56 = por %p54, %p55
      %p57 = scmp.ne.s32.totalorder %s49, %s51
      %p58 = scmp.eq.s32.totalorder %s20, 1
      %p59 = por %p57, %p58
      %p60 = scmp.ne.s32.totalorder %s51, %s52
      %p61 = scmp.eq.s32.totalorder %s20, 0
      %p62 = por %p60, %p61
      %p63 = scmp.ne.s32.totalorder %s51, %s52
      %p64 = scmp.eq.s32.totalorder %s21, 1
      %p65 = por %p63, %p64
      %p67 = scmp.ne.s32.totalorder %s52, %s66
      %p68 = scmp.eq.s32.totalorder %s21, 0
      %p69 = por %p67, %p68
      %s71 = sadd.s32 %s70, 1
      %p74 = scmp.eq.s32.totalorder %s15, 1
      %p75 = scmp.ne.s32.totalorder %s70, %s72
      %p76 = scmp.eq.s32.totalorder %s15, 0
      %p77 = por %p75, %p76
      %p78 = scmp.ne.s32.totalorder %s70, %s72
      %p79 = scmp.eq.s32.totalorder %s20, 1
      %p80 = por %p78, %p79
      %p81 = scmp.ne.s32.totalorder %s72, %s73
      %p82 = scmp.eq.s32.totalorder %s20, 0
      %p83 = por %p81, %p82
      %p84 = scmp.ne.s32.totalorder %s72, %s73
      %p85 = scmp.eq.s32.totalorder %s21, 1
      %p86 = por %p84, %p85
      %p88 = scmp.ne.s32.totalorder %s73, %s87
      %p89 = scmp.eq.s32.totalorder %s21, 0
      %p90 = por %p88, %p89
      %s91 = ssub.s32 %s15, %s22
      %p92 = scmp.eq.s32.totalorder %s91, 0
      %s94 = sadd.s32 %s93, 1
      %s95 = scalar_select %p92, %s93, %s94
      %p98 = pneg %p92
      %p99 = scmp.eq.s32.totalorder %s15, 1
      %p100 = por %p98, %p99
      %p101 = scmp.ne.s32.totalorder %s93, %s96
      %p102 = scmp.eq.s32.totalorder %s15, 0
      %p103 = por %p101, %p102
      %p104 = scmp.ne.s32.totalorder %s93, %s96
      %p105 = scmp.eq.s32.totalorder %s20, 1
      %p106 = por %p104, %p105
      %p107 = scmp.ne.s32.totalorder %s96, %s97
      %p108 = scmp.eq.s32.totalorder %s20, 0
      %p109 = por %p107, %p108
      %p110 = scmp.ne.s32.totalorder %s96, %s97
      %p111 = scmp.eq.s32.totalorder %s21, 1
      %p112 = por %p110, %p111
      %p114 = scmp.ne.s32.totalorder %s97, %s113
      %p115 = scmp.eq.s32.totalorder %s21, 0
      %p116 = por %p114, %p115
      %p117 = scmp.le.s32.totalorder 1, %s15
      %p118 = scmp.lt.s32.totalorder %s15, 3
      %p119 = pnand %p117, %p118
      %p120 = pneg %p119
      // Predicated region
      $region9: #{tpu_custom_call.1} parent=5 // pred_check
        _
      $region10: #{tpu_custom_call.1} parent=5 // pred_check_branch
        %122 = sbr.rel (%p119) target = $region12
      $region11: #{tpu_custom_call.1} parent=5 // pred_region
        %s123 = ssub.s32 %s15, 1
        // Predicated region
        $region13: #{tpu_custom_call.1} parent=11 // pred_check
          %p124 = pneg %p62
        $region14: #{tpu_custom_call.1} parent=11 // pred_check_branch
          %126 = sbr.rel (%p124) target = $region16
        $region15: #{tpu_custom_call.1} parent=11 // pred_region
          _
        $region16: #{tpu_custom_call.1} parent=11 // pred_fallthru
          _
        // Predicated region
        $region17: #{tpu_custom_call.1} parent=11 // pred_check
          %p127 = pneg %p83
        $region18: #{tpu_custom_call.1} parent=11 // pred_check_branch
          %129 = sbr.rel (%p127) target = $region20
        $region19: #{tpu_custom_call.1} parent=11 // pred_region
          _
        $region20: #{tpu_custom_call.1} parent=11 // pred_fallthru
          _
      $region12: #{tpu_custom_call.1} parent=5 // pred_fallthru
        _
      %p130 = scmp.lt.s32.totalorder %s15, 2
      // Predicated region
      $region21: #{tpu_custom_call.1} parent=5 // pred_check
        %p131 = pneg %p130
      $region22: #{tpu_custom_call.1} parent=5 // pred_check_branch
        %133 = sbr.rel (%p131) target = $region24
      $region23: #{tpu_custom_call.1} parent=5 // pred_region
        // Predicated region
        $region25: #{tpu_custom_call.1} parent=23 // pred_check
          %p134 = pneg %p35
        $region26: #{tpu_custom_call.1} parent=23 // pred_check_branch
          %136 = sbr.rel (%p134) target = $region28
        $region27: #{tpu_custom_call.1} parent=23 // pred_region
          %s137 = sand.u32 %s25, 1
          %s138 = scalar_lea.sflag [#allocation3], %s137
          %s139 = sand.u32 %s25, 1
          %s140 = smul.addr %s139, 64
          %s141 = scalar_lea.vmem [#allocation2], %s140
          %s142 = smul.u32 4, %s15
          %144 = vsyncadd %s138, 0
          %s145 = smul.addr %s142, 2
          %s146 = smul.addr %s145, 8
          %s147 = scalar_lea.hbm %s0, %s146
          %s148 = sshll.u32 %s147, 4
          %s149 = int_to_ptr.hbm [resolvable:$true] %s148
          %s150 = sshll.u32 %s141, 4
          %s151 = int_to_ptr.vmem [resolvable:$true] %s150
          %156 = dma.hbm_to_vmem [thread:$0]  %s149, 1024, %s151, %s138, 128, 128, 8
        $region28: #{tpu_custom_call.1} parent=23 // pred_fallthru
          _
      $region24: #{tpu_custom_call.1} parent=5 // pred_fallthru
        _
      %p157 = scmp.le.s32.totalorder 1, %s15
      %p158 = scmp.lt.s32.totalorder %s15, 3
      %p159 = pnand %p157, %p158
      %p160 = pneg %p159
      // Predicated region
      $region29: #{tpu_custom_call.1} parent=5 // pred_check
        _
      $region30: #{tpu_custom_call.1} parent=5 // pred_check_branch
        %162 = sbr.rel (%p159) target = $region32
      $region31: #{tpu_custom_call.1} parent=5 // pred_region
        %s163 = ssub.s32 %s15, 1
        %s164 = sand.u32 %s28, 1
        %s165 = scalar_lea.sflag [#allocation3], %s164
        %s166 = sand.u32 %s28, 1
        %s167 = smul.addr %s166, 64
        %s168 = scalar_lea.vmem [#allocation2], %s167
        // Predicated region
        $region33: #{tpu_custom_call.1} parent=31 // pred_check
          %p169 = pneg %p41
        $region34: #{tpu_custom_call.1} parent=31 // pred_check_branch
          %171 = sbr.rel (%p169) target = $region36
        $region35: #{tpu_custom_call.1} parent=31 // pred_region
          %173 = dma.done %s165, 1024
        $region36: #{tpu_custom_call.1} parent=31 // pred_fallthru
          _
        %s174 = sand.u32 %s28, 1
        %s175 = scalar_lea.sflag [#allocation3], %s174
        %s176 = sand.u32 %s28, 1
        %s177 = smul.addr %s176, 64
        %s178 = scalar_lea.vmem [#allocation2], %s177
        %p179 = pneg %p41
        %p180 = pneg %p38
        %p181 = pneg %p62
        %p182 = pneg %p59
        %p183 = pneg %p83
        %p184 = pneg %p80
        %p185 = pneg %p109
        %p186 = pneg %p106
        %s187 = sand.u32 %s96, 1
        %s188 = scalar_lea.sflag [#allocation4], %s187
        %s189 = sand.u32 %s96, 1
        %s190 = smul.addr %s189, 128
        %s191 = scalar_lea.vmem [#allocation5], %s190
        %s192 = smul.u32 4, %s20
        %s193 = smul.u32 4, %s20
        %v194 = vld [vmem:[%s168] sm:$0xff]
        %v195 = vld [vmem:[%s168 + $0x8] sm:$0xff]
        %v196 = vld [vmem:[%s168 + $0x10] sm:$0xff]
        %v197 = vld [vmem:[%s168 + $0x18] sm:$0xff]
        %v198 = vld [vmem:[%s168 + $0x20] sm:$0xff]
        %v199 = vld [vmem:[%s168 + $0x28] sm:$0xff]
        %v200 = vld [vmem:[%s168 + $0x30] sm:$0xff]
        %v201 = vld [vmem:[%s168 + $0x38] sm:$0xff]
        %v202 = vrot.slane %v198, 4
        %vm203 = vcmask 1047556
        %v204 = vsel %vm203, %v202, %v194
        %v205 = vrot.slane %v194, 4
        %v206 = vsel %vm203, %v198, %v205
        %v208 = vunpack.c.l.s4 1983009808
        %v209 = vunpack.c.0.s8 %v208
        %v210 = vperm.slane %v204, %v209
        %v212 = vunpack.c.l.s4 1983009808
        %v213 = vunpack.c.0.s8 %v212
        %v214 = vperm.slane %v206, %v213
        %v215 = vrot.slane %v200, 4
        %v216 = vsel %vm203, %v215, %v196
        %v217 = vrot.slane %v196, 4
        %v218 = vsel %vm203, %v200, %v217
        %v220 = vunpack.c.l.s4 1983009808
        %v221 = vunpack.c.0.s8 %v220
        %v222 = vperm.slane %v216, %v221
        %v224 = vunpack.c.l.s4 1983009808
        %v225 = vunpack.c.0.s8 %v224
        %v226 = vperm.slane %v218, %v225
        %v227 = vrot.slane %v222, 4
        %v228 = vsel %vm203, %v227, %v210
        %v229 = vrot.slane %v210, 4
        %v230 = vsel %vm203, %v222, %v229
        %v232 = vunpack.c.l.s4 1934713408
        %v233 = vunpack.c.0.s8 %v232
        %v234 = vperm.slane %v228, %v233
        %v236 = vunpack.c.l.s4 1934713408
        %v237 = vunpack.c.0.s8 %v236
        %v238 = vperm.slane %v230, %v237
        %v239 = vrot.slane %v226, 4
        %v240 = vsel %vm203, %v239, %v214
        %v241 = vrot.slane %v214, 4
        %v242 = vsel %vm203, %v226, %v241
        %v244 = vunpack.c.l.s4 1934713408
        %v245 = vunpack.c.0.s8 %v244
        %v246 = vperm.slane %v240, %v245
        %v248 = vunpack.c.l.s4 1934713408
        %v249 = vunpack.c.0.s8 %v248
        %v250 = vperm.slane %v242, %v249
        %v251 = vrot.slane %v234, 4
        %v252 = vsel %vm203, 0.0, %v251
        %v253 = vrot.slane %v238, 4
        %v254 = vsel %vm203, 0.0, %v253
        %v255 = vrot.slane %v246, 4
        %v256 = vsel %vm203, 0.0, %v255
        %v257 = vrot.slane %v250, 4
        %v258 = vsel %vm203, 0.0, %v257
        %v259 = vrot.slane %v199, 4
        %v260 = vsel %vm203, %v259, %v195
        %v261 = vrot.slane %v195, 4
        %v262 = vsel %vm203, %v199, %v261
        %v264 = vunpack.c.l.s4 1983009808
        %v265 = vunpack.c.0.s8 %v264
        %v266 = vperm.slane %v260, %v265
        %v268 = vunpack.c.l.s4 1983009808
        %v269 = vunpack.c.0.s8 %v268
        %v270 = vperm.slane %v262, %v269
        %v271 = vrot.slane %v201, 4
        %v272 = vsel %vm203, %v271, %v197
        %v273 = vrot.slane %v197, 4
        %v274 = vsel %vm203, %v201, %v273
        %v276 = vunpack.c.l.s4 1983009808
        %v277 = vunpack.c.0.s8 %v276
        %v278 = vperm.slane %v272, %v277
        %v280 = vunpack.c.l.s4 1983009808
        %v281 = vunpack.c.0.s8 %v280
        %v282 = vperm.slane %v274, %v281
        %v283 = vrot.slane %v278, 4
        %v284 = vsel %vm203, %v283, %v266
        %v285 = vrot.slane %v266, 4
        %v286 = vsel %vm203, %v278, %v285
        %v288 = vunpack.c.l.s4 1934713408
        %v289 = vunpack.c.0.s8 %v288
        %v290 = vperm.slane %v284, %v289
        %v292 = vunpack.c.l.s4 1934713408
        %v293 = vunpack.c.0.s8 %v292
        %v294 = vperm.slane %v286, %v293
        %v295 = vrot.slane %v282, 4
        %v296 = vsel %vm203, %v295, %v270
        %v297 = vrot.slane %v270, 4
        %v298 = vsel %vm203, %v282, %v297
        %v300 = vunpack.c.l.s4 1934713408
        %v301 = vunpack.c.0.s8 %v300
        %v302 = vperm.slane %v296, %v301
        %v304 = vunpack.c.l.s4 1934713408
        %v305 = vunpack.c.0.s8 %v304
        %v306 = vperm.slane %v298, %v305
        %v307 = vrot.slane %v290, 4
        %v308 = vsel %vm203, 0.0, %v307
        %v309 = vrot.slane %v294, 4
        %v310 = vsel %vm203, 0.0, %v309
        %v311 = vrot.slane %v302, 4
        %v312 = vsel %vm203, 0.0, %v311
        %v313 = vrot.slane %v306, 4
        %v314 = vsel %vm203, 0.0, %v313
        %v315 = vsel %vm203, %v253, %v234
        %v317 = vunpack.c.l.s4 1983009808
        %v318 = vunpack.c.0.s8 %v317
        %v319 = vperm.slane %v315, %v318
        %v320 = vrot.slane %v254, 4
        %v321 = vsel %vm203, %v320, %v252
        %v323 = vunpack.c.l.s4 1983009808
        %v324 = vunpack.c.0.s8 %v323
        %v325 = vperm.slane %v321, %v324
        %v326 = vsel %vm203, %v257, %v246
        %v328 = vunpack.c.l.s4 1983009808
        %v329 = vunpack.c.0.s8 %v328
        %v330 = vperm.slane %v326, %v329
        %v331 = vrot.slane %v258, 4
        %v332 = vsel %vm203, %v331, %v256
        %v334 = vunpack.c.l.s4 1983009808
        %v335 = vunpack.c.0.s8 %v334
        %v336 = vperm.slane %v332, %v335
        %v337 = vrot.slane %v325, 4
        %v338 = vsel %vm203, %v337, %v319
        %v339 = vrot.slane %v319, 4
        %v340 = vsel %vm203, %v325, %v339
        %v342 = vunpack.c.l.s4 1934713408
        %v343 = vunpack.c.0.s8 %v342
        %v344 = vperm.slane %v338, %v343
        %v346 = vunpack.c.l.s4 1934713408
        %v347 = vunpack.c.0.s8 %v346
        %v348 = vperm.slane %v340, %v347
        %v349 = vrot.slane %v336, 4
        %v350 = vsel %vm203, %v349, %v330
        %v351 = vrot.slane %v330, 4
        %v352 = vsel %vm203, %v336, %v351
        %v354 = vunpack.c.l.s4 1934713408
        %v355 = vunpack.c.0.s8 %v354
        %v356 = vperm.slane %v350, %v355
        %v358 = vunpack.c.l.s4 1934713408
        %v359 = vunpack.c.0.s8 %v358
        %v360 = vperm.slane %v352, %v359
        %v361 = vrot.slane %v356, 4
        %v362 = vsel %vm203, %v361, %v344
        %v363 = vrot.slane %v344, 4
        %v364 = vsel %vm203, %v356, %v363
        %v365 = vrot.slane %v360, 4
        %v366 = vsel %vm203, %v365, %v348
        %v367 = vrot.slane %v348, 4
        %v368 = vsel %vm203, %v360, %v367
        %v369 = vsel %vm203, %v309, %v290
        %v371 = vunpack.c.l.s4 1983009808
        %v372 = vunpack.c.0.s8 %v371
        %v373 = vperm.slane %v369, %v372
        %v374 = vrot.slane %v310, 4
        %v375 = vsel %vm203, %v374, %v308
        %v377 = vunpack.c.l.s4 1983009808
        %v378 = vunpack.c.0.s8 %v377
        %v379 = vperm.slane %v375, %v378
        %v380 = vsel %vm203, %v313, %v302
        %v382 = vunpack.c.l.s4 1983009808
        %v383 = vunpack.c.0.s8 %v382
        %v384 = vperm.slane %v380, %v383
        %v385 = vrot.slane %v314, 4
        %v386 = vsel %vm203, %v385, %v312
        %v388 = vunpack.c.l.s4 1983009808
        %v389 = vunpack.c.0.s8 %v388
        %v390 = vperm.slane %v386, %v389
        %v391 = vrot.slane %v379, 4
        %v392 = vsel %vm203, %v391, %v373
        %v393 = vrot.slane %v373, 4
        %v394 = vsel %vm203, %v379, %v393
        %v396 = vunpack.c.l.s4 1934713408
        %v397 = vunpack.c.0.s8 %v396
        %v398 = vperm.slane %v392, %v397
        %v400 = vunpack.c.l.s4 1934713408
        %v401 = vunpack.c.0.s8 %v400
        %v402 = vperm.slane %v394, %v401
        %v403 = vrot.slane %v390, 4
        %v404 = vsel %vm203, %v403, %v384
        %v405 = vrot.slane %v384, 4
        %v406 = vsel %vm203, %v390, %v405
        %v408 = vunpack.c.l.s4 1934713408
        %v409 = vunpack.c.0.s8 %v408
        %v410 = vperm.slane %v404, %v409
        %v412 = vunpack.c.l.s4 1934713408
        %v413 = vunpack.c.0.s8 %v412
        %v414 = vperm.slane %v406, %v413
        %v415 = vrot.slane %v410, 4
        %v416 = vsel %vm203, %v415, %v398
        %v417 = vrot.slane %v398, 4
        %v418 = vsel %vm203, %v410, %v417
        %v419 = vrot.slane %v414, 4
        %v420 = vsel %vm203, %v419, %v402
        %v421 = vrot.slane %v402, 4
        %v422 = vsel %vm203, %v414, %v421
        %425 = vrot.lane.b32.xlu0 %v364, 16
        %v426 = vpop.permute.xlu0 %425
        %427 = vrot.lane.b32.xlu0 %v418, 16
        %v428 = vpop.permute.xlu0 %427
        %433 = vrot.lane.b32.xlu0 %v366, 32
        %v434 = vpop.permute.xlu0 %433
        %435 = vrot.lane.b32.xlu0 %v420, 32
        %v436 = vpop.permute.xlu0 %435
        %441 = vrot.lane.b32.xlu0 %v368, 48
        %v442 = vpop.permute.xlu0 %441
        %443 = vrot.lane.b32.xlu0 %v422, 48
        %v444 = vpop.permute.xlu0 %443
        %vm447 = vcmask 130048
        %v448 = vsel %vm447, %v362, %v426
        %v449 = vsel %vm447, %v416, %v428
        %vm450 = vcmask 261120
        %v451 = vsel %vm450, %v448, %v434
        %v452 = vsel %vm450, %v449, %v436
        %vm453 = vcmask 392192
        %v454 = vsel %vm453, %v451, %v442
        %v455 = vsel %vm453, %v452, %v444
        %v456 = vld [vmem:[%s1] sm:$0xff]
        %v457 = vld [vmem:[%s1 + $0x8] sm:$0xff]
        %v458 = vld [vmem:[%s1 + $0x10] sm:$0xff]
        %v459 = vld [vmem:[%s1 + $0x18] sm:$0xff]
        %v461 = vsel %vm447, %v456, 0
        %v464 = vsel %vm447, %v457, 0
        %v467 = vsel %vm447, %v458, 0
        %v470 = vsel %vm447, %v459, 0
        %472 = vmatpush.msra.mxu0 0.0
        %473 = vmatpush.msra.mxu0 0.0
        %474 = vmatpush.msra.mxu0 0.0
        %475 = vmatpush.msra.mxu0 0.0
        %476 = vmatpush.msra.mxu0 0.0
        %477 = vmatpush.msra.mxu0 0.0
        %478 = vmatpush.msra.mxu0 0.0
        %479 = vmatpush.msra.mxu0 0.0
        %480 = vmatpush.msra.mxu0 0.0
        %481 = vmatpush.msra.mxu0 0.0
        %482 = vmatpush.msra.mxu0 0.0
        %483 = vmatpush.msra.mxu0 0.0
        %484 = vmatpush.msra.mxu0 0.0
        %485 = vmatpush.msra.mxu0 0.0
        %v486 = vand.u32 %v455, 4294901760
        %487 = vmatpush.msra.mxu0 %v486
        %v488 = vand.u32 %v454, 4294901760
        %489 = vmatpush.msra.mxu0 %v488
        %v490 = vand.u32 %v461, 4294901760
        %v491 = vsub.f32 %v461, %v490
        %v492 = vand.u32 %v491, 4294901760
        %v493 = vsub.f32 %v491, %v492
        %v494 = vand.u32 %v493, 4294901760
        %495 = vmatmul.f32.gmra.mxu0 %v494
        %v496 = vpop.f32.mrf.mxu0
        %v497 = vadd.f32 0.0, %v496
        %v498 = vand.u32 %v464, 4294901760
        %v499 = vsub.f32 %v464, %v498
        %v500 = vand.u32 %v499, 4294901760
        %v501 = vsub.f32 %v499, %v500
        %v502 = vand.u32 %v501, 4294901760
        %503 = vmatmul.f32.gmra.mxu0 %v502
        %v504 = vpop.f32.mrf.mxu0
        %v505 = vadd.f32 0.0, %v504
        %v506 = vand.u32 %v467, 4294901760
        %v507 = vsub.f32 %v467, %v506
        %v508 = vand.u32 %v507, 4294901760
        %v509 = vsub.f32 %v507, %v508
        %v510 = vand.u32 %v509, 4294901760
        %511 = vmatmul.f32.gmra.mxu0 %v510
        %v512 = vpop.f32.mrf.mxu0
        %v513 = vadd.f32 0.0, %v512
        %v514 = vand.u32 %v470, 4294901760
        %v515 = vsub.f32 %v470, %v514
        %v516 = vand.u32 %v515, 4294901760
        %v517 = vsub.f32 %v515, %v516
        %v518 = vand.u32 %v517, 4294901760
        %519 = vmatmul.f32.gmra.mxu0 %v518
        %v520 = vpop.f32.mrf.mxu0
        %v521 = vadd.f32 0.0, %v520
        %522 = vdwg.mxu0
        %523 = vmatpush.msra.mxu0 0.0
        %524 = vmatpush.msra.mxu0 0.0
        %525 = vmatpush.msra.mxu0 0.0
        %526 = vmatpush.msra.mxu0 0.0
        %527 = vmatpush.msra.mxu0 0.0
        %528 = vmatpush.msra.mxu0 0.0
        %529 = vmatpush.msra.mxu0 0.0
        %530 = vmatpush.msra.mxu0 0.0
        %531 = vmatpush.msra.mxu0 0.0
        %532 = vmatpush.msra.mxu0 0.0
        %533 = vmatpush.msra.mxu0 0.0
        %534 = vmatpush.msra.mxu0 0.0
        %535 = vmatpush.msra.mxu0 0.0
        %536 = vmatpush.msra.mxu0 0.0
        %v537 = vand.u32 %v455, 4294901760
        %v538 = vsub.f32 %v455, %v537
        %v539 = vand.u32 %v538, 4294901760
        %v540 = vsub.f32 %v538, %v539
        %v541 = vand.u32 %v540, 4294901760
        %542 = vmatpush.msra.mxu0 %v541
        %v543 = vand.u32 %v454, 4294901760
        %v544 = vsub.f32 %v454, %v543
        %v545 = vand.u32 %v544, 4294901760
        %v546 = vsub.f32 %v544, %v545
        %v547 = vand.u32 %v546, 4294901760
        %548 = vmatpush.msra.mxu0 %v547
        %v549 = vand.u32 %v461, 4294901760
        %550 = vmatmul.f32.gmra.mxu0 %v549
        %v551 = vpop.f32.mrf.mxu0
        %v552 = vadd.f32 %v497, %v551
        %v553 = vand.u32 %v464, 4294901760
        %554 = vmatmul.f32.gmra.mxu0 %v553
        %v555 = vpop.f32.mrf.mxu0
        %v556 = vadd.f32 %v505, %v555
        %v557 = vand.u32 %v467, 4294901760
        %558 = vmatmul.f32.gmra.mxu0 %v557
        %v559 = vpop.f32.mrf.mxu0
        %v560 = vadd.f32 %v513, %v559
        %v561 = vand.u32 %v470, 4294901760
        %562 = vmatmul.f32.gmra.mxu0 %v561
        %v563 = vpop.f32.mrf.mxu0
        %v564 = vadd.f32 %v521, %v563
        %565 = vdwg.mxu0
        %566 = vmatpush.msra.mxu0 0.0
        %567 = vmatpush.msra.mxu0 0.0
        %568 = vmatpush.msra.mxu0 0.0
        %569 = vmatpush.msra.mxu0 0.0
        %570 = vmatpush.msra.mxu0 0.0
        %571 = vmatpush.msra.mxu0 0.0
        %572 = vmatpush.msra.mxu0 0.0
        %573 = vmatpush.msra.mxu0 0.0
        %574 = vmatpush.msra.mxu0 0.0
        %575 = vmatpush.msra.mxu0 0.0
        %576 = vmatpush.msra.mxu0 0.0
        %577 = vmatpush.msra.mxu0 0.0
        %578 = vmatpush.msra.mxu0 0.0
        %579 = vmatpush.msra.mxu0 0.0
        %v580 = vand.u32 %v455, 4294901760
        %v581 = vsub.f32 %v455, %v580
        %582 = vmatpush.msra.mxu0 %v581
        %v583 = vand.u32 %v454, 4294901760
        %v584 = vsub.f32 %v454, %v583
        %585 = vmatpush.msra.mxu0 %v584
        %v586 = vand.u32 %v461, 4294901760
        %v587 = vsub.f32 %v461, %v586
        %588 = vmatmul.f32.gmra.mxu0 %v587
        %v589 = vpop.f32.mrf.mxu0
        %v590 = vadd.f32 %v552, %v589
        %v591 = vand.u32 %v464, 4294901760
        %v592 = vsub.f32 %v464, %v591
        %593 = vmatmul.f32.gmra.mxu0 %v592
        %v594 = vpop.f32.mrf.mxu0
        %v595 = vadd.f32 %v556, %v594
        %v596 = vand.u32 %v467, 4294901760
        %v597 = vsub.f32 %v467, %v596
        %598 = vmatmul.f32.gmra.mxu0 %v597
        %v599 = vpop.f32.mrf.mxu0
        %v600 = vadd.f32 %v560, %v599
        %v601 = vand.u32 %v470, 4294901760
        %v602 = vsub.f32 %v470, %v601
        %603 = vmatmul.f32.gmra.mxu0 %v602
        %v604 = vpop.f32.mrf.mxu0
        %v605 = vadd.f32 %v564, %v604
        %606 = vdwg.mxu0
        %607 = vmatpush.msra.mxu0 0.0
        %608 = vmatpush.msra.mxu0 0.0
        %609 = vmatpush.msra.mxu0 0.0
        %610 = vmatpush.msra.mxu0 0.0
        %611 = vmatpush.msra.mxu0 0.0
        %612 = vmatpush.msra.mxu0 0.0
        %613 = vmatpush.msra.mxu0 0.0
        %614 = vmatpush.msra.mxu0 0.0
        %615 = vmatpush.msra.mxu0 0.0
        %616 = vmatpush.msra.mxu0 0.0
        %617 = vmatpush.msra.mxu0 0.0
        %618 = vmatpush.msra.mxu0 0.0
        %619 = vmatpush.msra.mxu0 0.0
        %620 = vmatpush.msra.mxu0 0.0
        %v621 = vand.u32 %v455, 4294901760
        %622 = vmatpush.msra.mxu0 %v621
        %v623 = vand.u32 %v454, 4294901760
        %624 = vmatpush.msra.mxu0 %v623
        %v625 = vand.u32 %v461, 4294901760
        %v626 = vsub.f32 %v461, %v625
        %v627 = vand.u32 %v626, 4294901760
        %628 = vmatmul.f32.gmra.mxu0 %v627
        %v629 = vpop.f32.mrf.mxu0
        %v630 = vadd.f32 %v590, %v629
        %v631 = vand.u32 %v464, 4294901760
        %v632 = vsub.f32 %v464, %v631
        %v633 = vand.u32 %v632, 4294901760
        %634 = vmatmul.f32.gmra.mxu0 %v633
        %v635 = vpop.f32.mrf.mxu0
        %v636 = vadd.f32 %v595, %v635
        %v637 = vand.u32 %v467, 4294901760
        %v638 = vsub.f32 %v467, %v637
        %v639 = vand.u32 %v638, 4294901760
        %640 = vmatmul.f32.gmra.mxu0 %v639
        %v641 = vpop.f32.mrf.mxu0
        %v642 = vadd.f32 %v600, %v641
        %v643 = vand.u32 %v470, 4294901760
        %v644 = vsub.f32 %v470, %v643
        %v645 = vand.u32 %v644, 4294901760
        %646 = vmatmul.f32.gmra.mxu0 %v645
        %v647 = vpop.f32.mrf.mxu0
        %v648 = vadd.f32 %v605, %v647
        %649 = vdwg.mxu0
        %650 = vmatpush.msra.mxu0 0.0
        %651 = vmatpush.msra.mxu0 0.0
        %652 = vmatpush.msra.mxu0 0.0
        %653 = vmatpush.msra.mxu0 0.0
        %654 = vmatpush.msra.mxu0 0.0
        %655 = vmatpush.msra.mxu0 0.0
        %656 = vmatpush.msra.mxu0 0.0
        %657 = vmatpush.msra.mxu0 0.0
        %658 = vmatpush.msra.mxu0 0.0
        %659 = vmatpush.msra.mxu0 0.0
        %660 = vmatpush.msra.mxu0 0.0
        %661 = vmatpush.msra.mxu0 0.0
        %662 = vmatpush.msra.mxu0 0.0
        %663 = vmatpush.msra.mxu0 0.0
        %v664 = vand.u32 %v455, 4294901760
        %v665 = vsub.f32 %v455, %v664
        %v666 = vand.u32 %v665, 4294901760
        %667 = vmatpush.msra.mxu0 %v666
        %v668 = vand.u32 %v454, 4294901760
        %v669 = vsub.f32 %v454, %v668
        %v670 = vand.u32 %v669, 4294901760
        %671 = vmatpush.msra.mxu0 %v670
        %v672 = vand.u32 %v461, 4294901760
        %673 = vmatmul.f32.gmra.mxu0 %v672
        %v674 = vpop.f32.mrf.mxu0
        %v675 = vadd.f32 %v630, %v674
        %v676 = vand.u32 %v464, 4294901760
        %677 = vmatmul.f32.gmra.mxu0 %v676
        %v678 = vpop.f32.mrf.mxu0
        %v679 = vadd.f32 %v636, %v678
        %v680 = vand.u32 %v467, 4294901760
        %681 = vmatmul.f32.gmra.mxu0 %v680
        %v682 = vpop.f32.mrf.mxu0
        %v683 = vadd.f32 %v642, %v682
        %v684 = vand.u32 %v470, 4294901760
        %685 = vmatmul.f32.gmra.mxu0 %v684
        %v686 = vpop.f32.mrf.mxu0
        %v687 = vadd.f32 %v648, %v686
        %688 = vdwg.mxu0
        %689 = vmatpush.msra.mxu0 0.0
        %690 = vmatpush.msra.mxu0 0.0
        %691 = vmatpush.msra.mxu0 0.0
        %692 = vmatpush.msra.mxu0 0.0
        %693 = vmatpush.msra.mxu0 0.0
        %694 = vmatpush.msra.mxu0 0.0
        %695 = vmatpush.msra.mxu0 0.0
        %696 = vmatpush.msra.mxu0 0.0
        %697 = vmatpush.msra.mxu0 0.0
        %698 = vmatpush.msra.mxu0 0.0
        %699 = vmatpush.msra.mxu0 0.0
        %700 = vmatpush.msra.mxu0 0.0
        %701 = vmatpush.msra.mxu0 0.0
        %702 = vmatpush.msra.mxu0 0.0
        %v703 = vand.u32 %v455, 4294901760
        %704 = vmatpush.msra.mxu0 %v703
        %v705 = vand.u32 %v454, 4294901760
        %706 = vmatpush.msra.mxu0 %v705
        %v707 = vand.u32 %v461, 4294901760
        %708 = vmatmul.f32.gmra.mxu0 %v707
        %v709 = vpop.f32.mrf.mxu0
        %v710 = vadd.f32 %v675, %v709
        %v711 = vand.u32 %v464, 4294901760
        %712 = vmatmul.f32.gmra.mxu0 %v711
        %v713 = vpop.f32.mrf.mxu0
        %v714 = vadd.f32 %v679, %v713
        %v715 = vand.u32 %v467, 4294901760
        %716 = vmatmul.f32.gmra.mxu0 %v715
        %v717 = vpop.f32.mrf.mxu0
        %v718 = vadd.f32 %v683, %v717
        %v719 = vand.u32 %v470, 4294901760
        %720 = vmatmul.f32.gmra.mxu0 %v719
        %v721 = vpop.f32.mrf.mxu0
        %v722 = vadd.f32 %v687, %v721
        %723 = vdwg.mxu0
        %728 = vrot.lane.b32.xlu0 %v710, 112
        %v729 = vpop.permute.xlu0 %728
        %730 = vrot.lane.b32.xlu0 %v714, 112
        %v731 = vpop.permute.xlu0 %730
        %732 = vrot.lane.b32.xlu0 %v718, 112
        %v733 = vpop.permute.xlu0 %732
        %734 = vrot.lane.b32.xlu0 %v722, 112
        %v735 = vpop.permute.xlu0 %734
        %740 = vrot.lane.b32.xlu0 %v710, 96
        %v741 = vpop.permute.xlu0 %740
        %742 = vrot.lane.b32.xlu0 %v714, 96
        %v743 = vpop.permute.xlu0 %742
        %744 = vrot.lane.b32.xlu0 %v718, 96
        %v745 = vpop.permute.xlu0 %744
        %746 = vrot.lane.b32.xlu0 %v722, 96
        %v747 = vpop.permute.xlu0 %746
        %752 = vrot.lane.b32.xlu0 %v710, 80
        %v753 = vpop.permute.xlu0 %752
        %754 = vrot.lane.b32.xlu0 %v714, 80
        %v755 = vpop.permute.xlu0 %754
        %756 = vrot.lane.b32.xlu0 %v718, 80
        %v757 = vpop.permute.xlu0 %756
        %758 = vrot.lane.b32.xlu0 %v722, 80
        %v759 = vpop.permute.xlu0 %758
        %v764 = vrot.slane %v741, 4
        %v765 = vsel %vm203, %v764, %v710
        %v766 = vrot.slane %v710, 4
        %v767 = vsel %vm203, %v741, %v766
        %v769 = vunpack.c.l.s4 1983009808
        %v770 = vunpack.c.0.s8 %v769
        %v771 = vperm.slane %v765, %v770
        %v773 = vunpack.c.l.s4 1983009808
        %v774 = vunpack.c.0.s8 %v773
        %v775 = vperm.slane %v767, %v774
        %v776 = vrot.slane %v753, 4
        %v777 = vsel %vm203, %v776, %v729
        %v778 = vrot.slane %v729, 4
        %v779 = vsel %vm203, %v753, %v778
        %v781 = vunpack.c.l.s4 1983009808
        %v782 = vunpack.c.0.s8 %v781
        %v783 = vperm.slane %v777, %v782
        %v785 = vunpack.c.l.s4 1983009808
        %v786 = vunpack.c.0.s8 %v785
        %v787 = vperm.slane %v779, %v786
        %v788 = vrot.slane %v783, 4
        %v789 = vsel %vm203, %v788, %v771
        %v790 = vrot.slane %v771, 4
        %v791 = vsel %vm203, %v783, %v790
        %v793 = vunpack.c.l.s4 1934713408
        %v794 = vunpack.c.0.s8 %v793
        %v795 = vperm.slane %v789, %v794
        %v797 = vunpack.c.l.s4 1934713408
        %v798 = vunpack.c.0.s8 %v797
        %v799 = vperm.slane %v791, %v798
        %v800 = vrot.slane %v787, 4
        %v801 = vsel %vm203, %v800, %v775
        %v802 = vrot.slane %v775, 4
        %v803 = vsel %vm203, %v787, %v802
        %v805 = vunpack.c.l.s4 1934713408
        %v806 = vunpack.c.0.s8 %v805
        %v807 = vperm.slane %v801, %v806
        %v809 = vunpack.c.l.s4 1934713408
        %v810 = vunpack.c.0.s8 %v809
        %v811 = vperm.slane %v803, %v810
        %v812 = vrot.slane %v795, 4
        %v813 = vsel %vm203, 0.0, %v812
        %v814 = vrot.slane %v799, 4
        %v815 = vsel %vm203, 0.0, %v814
        %v816 = vrot.slane %v807, 4
        %v817 = vsel %vm203, 0.0, %v816
        %v818 = vrot.slane %v811, 4
        %v819 = vsel %vm203, 0.0, %v818
        %v820 = vrot.slane %v743, 4
        %v821 = vsel %vm203, %v820, %v714
        %v822 = vrot.slane %v714, 4
        %v823 = vsel %vm203, %v743, %v822
        %v825 = vunpack.c.l.s4 1983009808
        %v826 = vunpack.c.0.s8 %v825
        %v827 = vperm.slane %v821, %v826
        %v829 = vunpack.c.l.s4 1983009808
        %v830 = vunpack.c.0.s8 %v829
        %v831 = vperm.slane %v823, %v830
        %v832 = vrot.slane %v755, 4
        %v833 = vsel %vm203, %v832, %v731
        %v834 = vrot.slane %v731, 4
        %v835 = vsel %vm203, %v755, %v834
        %v837 = vunpack.c.l.s4 1983009808
        %v838 = vunpack.c.0.s8 %v837
        %v839 = vperm.slane %v833, %v838
        %v841 = vunpack.c.l.s4 1983009808
        %v842 = vunpack.c.0.s8 %v841
        %v843 = vperm.slane %v835, %v842
        %v844 = vrot.slane %v839, 4
        %v845 = vsel %vm203, %v844, %v827
        %v846 = vrot.slane %v827, 4
        %v847 = vsel %vm203, %v839, %v846
        %v849 = vunpack.c.l.s4 1934713408
        %v850 = vunpack.c.0.s8 %v849
        %v851 = vperm.slane %v845, %v850
        %v853 = vunpack.c.l.s4 1934713408
        %v854 = vunpack.c.0.s8 %v853
        %v855 = vperm.slane %v847, %v854
        %v856 = vrot.slane %v843, 4
        %v857 = vsel %vm203, %v856, %v831
        %v858 = vrot.slane %v831, 4
        %v859 = vsel %vm203, %v843, %v858
        %v861 = vunpack.c.l.s4 1934713408
        %v862 = vunpack.c.0.s8 %v861
        %v863 = vperm.slane %v857, %v862
        %v865 = vunpack.c.l.s4 1934713408
        %v866 = vunpack.c.0.s8 %v865
        %v867 = vperm.slane %v859, %v866
        %v868 = vrot.slane %v851, 4
        %v869 = vsel %vm203, 0.0, %v868
        %v870 = vrot.slane %v855, 4
        %v871 = vsel %vm203, 0.0, %v870
        %v872 = vrot.slane %v863, 4
        %v873 = vsel %vm203, 0.0, %v872
        %v874 = vrot.slane %v867, 4
        %v875 = vsel %vm203, 0.0, %v874
        %v876 = vrot.slane %v745, 4
        %v877 = vsel %vm203, %v876, %v718
        %v878 = vrot.slane %v718, 4
        %v879 = vsel %vm203, %v745, %v878
        %v881 = vunpack.c.l.s4 1983009808
        %v882 = vunpack.c.0.s8 %v881
        %v883 = vperm.slane %v877, %v882
        %v885 = vunpack.c.l.s4 1983009808
        %v886 = vunpack.c.0.s8 %v885
        %v887 = vperm.slane %v879, %v886
        %v888 = vrot.slane %v757, 4
        %v889 = vsel %vm203, %v888, %v733
        %v890 = vrot.slane %v733, 4
        %v891 = vsel %vm203, %v757, %v890
        %v893 = vunpack.c.l.s4 1983009808
        %v894 = vunpack.c.0.s8 %v893
        %v895 = vperm.slane %v889, %v894
        %v897 = vunpack.c.l.s4 1983009808
        %v898 = vunpack.c.0.s8 %v897
        %v899 = vperm.slane %v891, %v898
        %v900 = vrot.slane %v895, 4
        %v901 = vsel %vm203, %v900, %v883
        %v902 = vrot.slane %v883, 4
        %v903 = vsel %vm203, %v895, %v902
        %v905 = vunpack.c.l.s4 1934713408
        %v906 = vunpack.c.0.s8 %v905
        %v907 = vperm.slane %v901, %v906
        %v909 = vunpack.c.l.s4 1934713408
        %v910 = vunpack.c.0.s8 %v909
        %v911 = vperm.slane %v903, %v910
        %v912 = vrot.slane %v899, 4
        %v913 = vsel %vm203, %v912, %v887
        %v914 = vrot.slane %v887, 4
        %v915 = vsel %vm203, %v899, %v914
        %v917 = vunpack.c.l.s4 1934713408
        %v918 = vunpack.c.0.s8 %v917
        %v919 = vperm.slane %v913, %v918
        %v921 = vunpack.c.l.s4 1934713408
        %v922 = vunpack.c.0.s8 %v921
        %v923 = vperm.slane %v915, %v922
        %v924 = vrot.slane %v907, 4
        %v925 = vsel %vm203, 0.0, %v924
        %v926 = vrot.slane %v911, 4
        %v927 = vsel %vm203, 0.0, %v926
        %v928 = vrot.slane %v919, 4
        %v929 = vsel %vm203, 0.0, %v928
        %v930 = vrot.slane %v923, 4
        %v931 = vsel %vm203, 0.0, %v930
        %v932 = vrot.slane %v747, 4
        %v933 = vsel %vm203, %v932, %v722
        %v934 = vrot.slane %v722, 4
        %v935 = vsel %vm203, %v747, %v934
        %v937 = vunpack.c.l.s4 1983009808
        %v938 = vunpack.c.0.s8 %v937
        %v939 = vperm.slane %v933, %v938
        %v941 = vunpack.c.l.s4 1983009808
        %v942 = vunpack.c.0.s8 %v941
        %v943 = vperm.slane %v935, %v942
        %v944 = vrot.slane %v759, 4
        %v945 = vsel %vm203, %v944, %v735
        %v946 = vrot.slane %v735, 4
        %v947 = vsel %vm203, %v759, %v946
        %v949 = vunpack.c.l.s4 1983009808
        %v950 = vunpack.c.0.s8 %v949
        %v951 = vperm.slane %v945, %v950
        %v953 = vunpack.c.l.s4 1983009808
        %v954 = vunpack.c.0.s8 %v953
        %v955 = vperm.slane %v947, %v954
        %v956 = vrot.slane %v951, 4
        %v957 = vsel %vm203, %v956, %v939
        %v958 = vrot.slane %v939, 4
        %v959 = vsel %vm203, %v951, %v958
        %v961 = vunpack.c.l.s4 1934713408
        %v962 = vunpack.c.0.s8 %v961
        %v963 = vperm.slane %v957, %v962
        %v965 = vunpack.c.l.s4 1934713408
        %v966 = vunpack.c.0.s8 %v965
        %v967 = vperm.slane %v959, %v966
        %v968 = vrot.slane %v955, 4
        %v969 = vsel %vm203, %v968, %v943
        %v970 = vrot.slane %v943, 4
        %v971 = vsel %vm203, %v955, %v970
        %v973 = vunpack.c.l.s4 1934713408
        %v974 = vunpack.c.0.s8 %v973
        %v975 = vperm.slane %v969, %v974
        %v977 = vunpack.c.l.s4 1934713408
        %v978 = vunpack.c.0.s8 %v977
        %v979 = vperm.slane %v971, %v978
        %v980 = vrot.slane %v963, 4
        %v981 = vsel %vm203, 0.0, %v980
        %v982 = vrot.slane %v967, 4
        %v983 = vsel %vm203, 0.0, %v982
        %v984 = vrot.slane %v975, 4
        %v985 = vsel %vm203, 0.0, %v984
        %v986 = vrot.slane %v979, 4
        %v987 = vsel %vm203, 0.0, %v986
        %v988 = vsel %vm203, %v814, %v795
        %v990 = vunpack.c.l.s4 1983009808
        %v991 = vunpack.c.0.s8 %v990
        %v992 = vperm.slane %v988, %v991
        %v993 = vrot.slane %v815, 4
        %v994 = vsel %vm203, %v993, %v813
        %v996 = vunpack.c.l.s4 1983009808
        %v997 = vunpack.c.0.s8 %v996
        %v998 = vperm.slane %v994, %v997
        %v999 = vsel %vm203, %v818, %v807
        %v1001 = vunpack.c.l.s4 1983009808
        %v1002 = vunpack.c.0.s8 %v1001
        %v1003 = vperm.slane %v999, %v1002
        %v1004 = vrot.slane %v819, 4
        %v1005 = vsel %vm203, %v1004, %v817
        %v1007 = vunpack.c.l.s4 1983009808
        %v1008 = vunpack.c.0.s8 %v1007
        %v1009 = vperm.slane %v1005, %v1008
        %v1010 = vrot.slane %v998, 4
        %v1011 = vsel %vm203, %v1010, %v992
        %v1012 = vrot.slane %v992, 4
        %v1013 = vsel %vm203, %v998, %v1012
        %v1015 = vunpack.c.l.s4 1934713408
        %v1016 = vunpack.c.0.s8 %v1015
        %v1017 = vperm.slane %v1011, %v1016
        %v1019 = vunpack.c.l.s4 1934713408
        %v1020 = vunpack.c.0.s8 %v1019
        %v1021 = vperm.slane %v1013, %v1020
        %v1022 = vrot.slane %v1009, 4
        %v1023 = vsel %vm203, %v1022, %v1003
        %v1024 = vrot.slane %v1003, 4
        %v1025 = vsel %vm203, %v1009, %v1024
        %v1027 = vunpack.c.l.s4 1934713408
        %v1028 = vunpack.c.0.s8 %v1027
        %v1029 = vperm.slane %v1023, %v1028
        %v1031 = vunpack.c.l.s4 1934713408
        %v1032 = vunpack.c.0.s8 %v1031
        %v1033 = vperm.slane %v1025, %v1032
        %v1034 = vrot.slane %v1029, 4
        %v1035 = vsel %vm203, %v1034, %v1017
        %v1036 = vrot.slane %v1017, 4
        %v1037 = vsel %vm203, %v1029, %v1036
        %v1038 = vrot.slane %v1033, 4
        %v1039 = vsel %vm203, %v1038, %v1021
        %v1040 = vrot.slane %v1021, 4
        %v1041 = vsel %vm203, %v1033, %v1040
        %v1042 = vsel %vm203, %v870, %v851
        %v1044 = vunpack.c.l.s4 1983009808
        %v1045 = vunpack.c.0.s8 %v1044
        %v1046 = vperm.slane %v1042, %v1045
        %v1047 = vrot.slane %v871, 4
        %v1048 = vsel %vm203, %v1047, %v869
        %v1050 = vunpack.c.l.s4 1983009808
        %v1051 = vunpack.c.0.s8 %v1050
        %v1052 = vperm.slane %v1048, %v1051
        %v1053 = vsel %vm203, %v874, %v863
        %v1055 = vunpack.c.l.s4 1983009808
        %v1056 = vunpack.c.0.s8 %v1055
        %v1057 = vperm.slane %v1053, %v1056
        %v1058 = vrot.slane %v875, 4
        %v1059 = vsel %vm203, %v1058, %v873
        %v1061 = vunpack.c.l.s4 1983009808
        %v1062 = vunpack.c.0.s8 %v1061
        %v1063 = vperm.slane %v1059, %v1062
        %v1064 = vrot.slane %v1052, 4
        %v1065 = vsel %vm203, %v1064, %v1046
        %v1066 = vrot.slane %v1046, 4
        %v1067 = vsel %vm203, %v1052, %v1066
        %v1069 = vunpack.c.l.s4 1934713408
        %v1070 = vunpack.c.0.s8 %v1069
        %v1071 = vperm.slane %v1065, %v1070
        %v1073 = vunpack.c.l.s4 1934713408
        %v1074 = vunpack.c.0.s8 %v1073
        %v1075 = vperm.slane %v1067, %v1074
        %v1076 = vrot.slane %v1063, 4
        %v1077 = vsel %vm203, %v1076, %v1057
        %v1078 = vrot.slane %v1057, 4
        %v1079 = vsel %vm203, %v1063, %v1078
        %v1081 = vunpack.c.l.s4 1934713408
        %v1082 = vunpack.c.0.s8 %v1081
        %v1083 = vperm.slane %v1077, %v1082
        %v1085 = vunpack.c.l.s4 1934713408
        %v1086 = vunpack.c.0.s8 %v1085
        %v1087 = vperm.slane %v1079, %v1086
        %v1088 = vrot.slane %v1083, 4
        %v1089 = vsel %vm203, %v1088, %v1071
        %v1090 = vrot.slane %v1071, 4
        %v1091 = vsel %vm203, %v1083, %v1090
        %v1092 = vrot.slane %v1087, 4
        %v1093 = vsel %vm203, %v1092, %v1075
        %v1094 = vrot.slane %v1075, 4
        %v1095 = vsel %vm203, %v1087, %v1094
        %v1096 = vsel %vm203, %v926, %v907
        %v1098 = vunpack.c.l.s4 1983009808
        %v1099 = vunpack.c.0.s8 %v1098
        %v1100 = vperm.slane %v1096, %v1099
        %v1101 = vrot.slane %v927, 4
        %v1102 = vsel %vm203, %v1101, %v925
        %v1104 = vunpack.c.l.s4 1983009808
        %v1105 = vunpack.c.0.s8 %v1104
        %v1106 = vperm.slane %v1102, %v1105
        %v1107 = vsel %vm203, %v930, %v919
        %v1109 = vunpack.c.l.s4 1983009808
        %v1110 = vunpack.c.0.s8 %v1109
        %v1111 = vperm.slane %v1107, %v1110
        %v1112 = vrot.slane %v931, 4
        %v1113 = vsel %vm203, %v1112, %v929
        %v1115 = vunpack.c.l.s4 1983009808
        %v1116 = vunpack.c.0.s8 %v1115
        %v1117 = vperm.slane %v1113, %v1116
        %v1118 = vrot.slane %v1106, 4
        %v1119 = vsel %vm203, %v1118, %v1100
        %v1120 = vrot.slane %v1100, 4
        %v1121 = vsel %vm203, %v1106, %v1120
        %v1123 = vunpack.c.l.s4 1934713408
        %v1124 = vunpack.c.0.s8 %v1123
        %v1125 = vperm.slane %v1119, %v1124
        %v1127 = vunpack.c.l.s4 1934713408
        %v1128 = vunpack.c.0.s8 %v1127
        %v1129 = vperm.slane %v1121, %v1128
        %v1130 = vrot.slane %v1117, 4
        %v1131 = vsel %vm203, %v1130, %v1111
        %v1132 = vrot.slane %v1111, 4
        %v1133 = vsel %vm203, %v1117, %v1132
        %v1135 = vunpack.c.l.s4 1934713408
        %v1136 = vunpack.c.0.s8 %v1135
        %v1137 = vperm.slane %v1131, %v1136
        %v1139 = vunpack.c.l.s4 1934713408
        %v1140 = vunpack.c.0.s8 %v1139
        %v1141 = vperm.slane %v1133, %v1140
        %v1142 = vrot.slane %v1137, 4
        %v1143 = vsel %vm203, %v1142, %v1125
        %v1144 = vrot.slane %v1125, 4
        %v1145 = vsel %vm203, %v1137, %v1144
        %v1146 = vrot.slane %v1141, 4
        %v1147 = vsel %vm203, %v1146, %v1129
        %v1148 = vrot.slane %v1129, 4
        %v1149 = vsel %vm203, %v1141, %v1148
        %v1150 = vsel %vm203, %v982, %v963
        %v1152 = vunpack.c.l.s4 1983009808
        %v1153 = vunpack.c.0.s8 %v1152
        %v1154 = vperm.slane %v1150, %v1153
        %v1155 = vrot.slane %v983, 4
        %v1156 = vsel %vm203, %v1155, %v981
        %v1158 = vunpack.c.l.s4 1983009808
        %v1159 = vunpack.c.0.s8 %v1158
        %v1160 = vperm.slane %v1156, %v1159
        %v1161 = vsel %vm203, %v986, %v975
        %v1163 = vunpack.c.l.s4 1983009808
        %v1164 = vunpack.c.0.s8 %v1163
        %v1165 = vperm.slane %v1161, %v1164
        %v1166 = vrot.slane %v987, 4
        %v1167 = vsel %vm203, %v1166, %v985
        %v1169 = vunpack.c.l.s4 1983009808
        %v1170 = vunpack.c.0.s8 %v1169
        %v1171 = vperm.slane %v1167, %v1170
        %v1172 = vrot.slane %v1160, 4
        %v1173 = vsel %vm203, %v1172, %v1154
        %v1174 = vrot.slane %v1154, 4
        %v1175 = vsel %vm203, %v1160, %v1174
        %v1177 = vunpack.c.l.s4 1934713408
        %v1178 = vunpack.c.0.s8 %v1177
        %v1179 = vperm.slane %v1173, %v1178
        %v1181 = vunpack.c.l.s4 1934713408
        %v1182 = vunpack.c.0.s8 %v1181
        %v1183 = vperm.slane %v1175, %v1182
        %v1184 = vrot.slane %v1171, 4
        %v1185 = vsel %vm203, %v1184, %v1165
        %v1186 = vrot.slane %v1165, 4
        %v1187 = vsel %vm203, %v1171, %v1186
        %v1189 = vunpack.c.l.s4 1934713408
        %v1190 = vunpack.c.0.s8 %v1189
        %v1191 = vperm.slane %v1185, %v1190
        %v1193 = vunpack.c.l.s4 1934713408
        %v1194 = vunpack.c.0.s8 %v1193
        %v1195 = vperm.slane %v1187, %v1194
        %v1196 = vrot.slane %v1191, 4
        %v1197 = vsel %vm203, %v1196, %v1179
        %v1198 = vrot.slane %v1179, 4
        %v1199 = vsel %vm203, %v1191, %v1198
        %v1200 = vrot.slane %v1195, 4
        %v1201 = vsel %vm203, %v1200, %v1183
        %v1202 = vrot.slane %v1183, 4
        %v1203 = vsel %vm203, %v1195, %v1202
        %v1204 = vld [vmem:[%s2] sm:$0xff]
        %v1205 = vld [vmem:[%s2 + $0x8] sm:$0xff]
        %v1207 = vsel %vm447, %v1035, 0
        %v1210 = vsel %vm447, %v1089, 0
        %v1213 = vsel %vm447, %v1143, 0
        %v1216 = vsel %vm447, %v1197, 0
        %v1219 = vsel %vm447, %v1037, 0
        %v1222 = vsel %vm447, %v1091, 0
        %v1225 = vsel %vm447, %v1145, 0
        %v1228 = vsel %vm447, %v1199, 0
        %v1231 = vsel %vm447, %v1039, 0
        %v1234 = vsel %vm447, %v1093, 0
        %v1237 = vsel %vm447, %v1147, 0
        %v1240 = vsel %vm447, %v1201, 0
        %v1243 = vsel %vm447, %v1041, 0
        %v1246 = vsel %vm447, %v1095, 0
        %v1249 = vsel %vm447, %v1149, 0
        %v1252 = vsel %vm447, %v1203, 0
        %1254 = vmatpush.msra.mxu0 0.0
        %1255 = vmatpush.msra.mxu0 0.0
        %1256 = vmatpush.msra.mxu0 0.0
        %1257 = vmatpush.msra.mxu0 0.0
        %1258 = vmatpush.msra.mxu0 0.0
        %1259 = vmatpush.msra.mxu0 0.0
        %1260 = vmatpush.msra.mxu0 0.0
        %1261 = vmatpush.msra.mxu0 0.0
        %1262 = vmatpush.msra.mxu0 0.0
        %1263 = vmatpush.msra.mxu0 0.0
        %1264 = vmatpush.msra.mxu0 0.0
        %1265 = vmatpush.msra.mxu0 0.0
        %1266 = vmatpush.msra.mxu0 0.0
        %1267 = vmatpush.msra.mxu0 0.0
        %v1268 = vand.u32 %v1205, 4294901760
        %1269 = vmatpush.msra.mxu0 %v1268
        %v1270 = vand.u32 %v1204, 4294901760
        %1271 = vmatpush.msra.mxu0 %v1270
        %v1272 = vand.u32 %v1207, 4294901760
        %v1273 = vsub.f32 %v1207, %v1272
        %v1274 = vand.u32 %v1273, 4294901760
        %v1275 = vsub.f32 %v1273, %v1274
        %v1276 = vand.u32 %v1275, 4294901760
        %1277 = vmatmul.f32.gmra.mxu0 %v1276
        %v1278 = vpop.f32.mrf.mxu0
        %v1279 = vadd.f32 0.0, %v1278
        %v1280 = vand.u32 %v1210, 4294901760
        %v1281 = vsub.f32 %v1210, %v1280
        %v1282 = vand.u32 %v1281, 4294901760
        %v1283 = vsub.f32 %v1281, %v1282
        %v1284 = vand.u32 %v1283, 4294901760
        %1285 = vmatmul.f32.gmra.mxu0 %v1284
        %v1286 = vpop.f32.mrf.mxu0
        %v1287 = vadd.f32 0.0, %v1286
        %v1288 = vand.u32 %v1213, 4294901760
        %v1289 = vsub.f32 %v1213, %v1288
        %v1290 = vand.u32 %v1289, 4294901760
        %v1291 = vsub.f32 %v1289, %v1290
        %v1292 = vand.u32 %v1291, 4294901760
        %1293 = vmatmul.f32.gmra.mxu0 %v1292
        %v1294 = vpop.f32.mrf.mxu0
        %v1295 = vadd.f32 0.0, %v1294
        %v1296 = vand.u32 %v1216, 4294901760
        %v1297 = vsub.f32 %v1216, %v1296
        %v1298 = vand.u32 %v1297, 4294901760
        %v1299 = vsub.f32 %v1297, %v1298
        %v1300 = vand.u32 %v1299, 4294901760
        %1301 = vmatmul.f32.gmra.mxu0 %v1300
        %v1302 = vpop.f32.mrf.mxu0
        %v1303 = vadd.f32 0.0, %v1302
        %v1304 = vand.u32 %v1219, 4294901760
        %v1305 = vsub.f32 %v1219, %v1304
        %v1306 = vand.u32 %v1305, 4294901760
        %v1307 = vsub.f32 %v1305, %v1306
        %v1308 = vand.u32 %v1307, 4294901760
        %1309 = vmatmul.f32.gmra.mxu0 %v1308
        %v1310 = vpop.f32.mrf.mxu0
        %v1311 = vadd.f32 0.0, %v1310
        %v1312 = vand.u32 %v1222, 4294901760
        %v1313 = vsub.f32 %v1222, %v1312
        %v1314 = vand.u32 %v1313, 4294901760
        %v1315 = vsub.f32 %v1313, %v1314
        %v1316 = vand.u32 %v1315, 4294901760
        %1317 = vmatmul.f32.gmra.mxu0 %v1316
        %v1318 = vpop.f32.mrf.mxu0
        %v1319 = vadd.f32 0.0, %v1318
        %v1320 = vand.u32 %v1225, 4294901760
        %v1321 = vsub.f32 %v1225, %v1320
        %v1322 = vand.u32 %v1321, 4294901760
        %v1323 = vsub.f32 %v1321, %v1322
        %v1324 = vand.u32 %v1323, 4294901760
        %1325 = vmatmul.f32.gmra.mxu0 %v1324
        %v1326 = vpop.f32.mrf.mxu0
        %v1327 = vadd.f32 0.0, %v1326
        %v1328 = vand.u32 %v1228, 4294901760
        %v1329 = vsub.f32 %v1228, %v1328
        %v1330 = vand.u32 %v1329, 4294901760
        %v1331 = vsub.f32 %v1329, %v1330
        %v1332 = vand.u32 %v1331, 4294901760
        %1333 = vmatmul.f32.gmra.mxu0 %v1332
        %v1334 = vpop.f32.mrf.mxu0
        %v1335 = vadd.f32 0.0, %v1334
        %v1336 = vand.u32 %v1231, 4294901760
        %v1337 = vsub.f32 %v1231, %v1336
        %v1338 = vand.u32 %v1337, 4294901760
        %v1339 = vsub.f32 %v1337, %v1338
        %v1340 = vand.u32 %v1339, 4294901760
        %1341 = vmatmul.f32.gmra.mxu0 %v1340
        %v1342 = vpop.f32.mrf.mxu0
        %v1343 = vadd.f32 0.0, %v1342
        %v1344 = vand.u32 %v1234, 4294901760
        %v1345 = vsub.f32 %v1234, %v1344
        %v1346 = vand.u32 %v1345, 4294901760
        %v1347 = vsub.f32 %v1345, %v1346
        %v1348 = vand.u32 %v1347, 4294901760
        %1349 = vmatmul.f32.gmra.mxu0 %v1348
        %v1350 = vpop.f32.mrf.mxu0
        %v1351 = vadd.f32 0.0, %v1350
        %v1352 = vand.u32 %v1237, 4294901760
        %v1353 = vsub.f32 %v1237, %v1352
        %v1354 = vand.u32 %v1353, 4294901760
        %v1355 = vsub.f32 %v1353, %v1354
        %v1356 = vand.u32 %v1355, 4294901760
        %1357 = vmatmul.f32.gmra.mxu0 %v1356
        %v1358 = vpop.f32.mrf.mxu0
        %v1359 = vadd.f32 0.0, %v1358
        %v1360 = vand.u32 %v1240, 4294901760
        %v1361 = vsub.f32 %v1240, %v1360
        %v1362 = vand.u32 %v1361, 4294901760
        %v1363 = vsub.f32 %v1361, %v1362
        %v1364 = vand.u32 %v1363, 4294901760
        %1365 = vmatmul.f32.gmra.mxu0 %v1364
        %v1366 = vpop.f32.mrf.mxu0
        %v1367 = vadd.f32 0.0, %v1366
        %v1368 = vand.u32 %v1243, 4294901760
        %v1369 = vsub.f32 %v1243, %v1368
        %v1370 = vand.u32 %v1369, 4294901760
        %v1371 = vsub.f32 %v1369, %v1370
        %v1372 = vand.u32 %v1371, 4294901760
        %1373 = vmatmul.f32.gmra.mxu0 %v1372
        %v1374 = vpop.f32.mrf.mxu0
        %v1375 = vadd.f32 0.0, %v1374
        %v1376 = vand.u32 %v1246, 4294901760
        %v1377 = vsub.f32 %v1246, %v1376
        %v1378 = vand.u32 %v1377, 4294901760
        %v1379 = vsub.f32 %v1377, %v1378
        %v1380 = vand.u32 %v1379, 4294901760
        %1381 = vmatmul.f32.gmra.mxu0 %v1380
        %v1382 = vpop.f32.mrf.mxu0
        %v1383 = vadd.f32 0.0, %v1382
        %v1384 = vand.u32 %v1249, 4294901760
        %v1385 = vsub.f32 %v1249, %v1384
        %v1386 = vand.u32 %v1385, 4294901760
        %v1387 = vsub.f32 %v1385, %v1386
        %v1388 = vand.u32 %v1387, 4294901760
        %1389 = vmatmul.f32.gmra.mxu0 %v1388
        %v1390 = vpop.f32.mrf.mxu0
        %v1391 = vadd.f32 0.0, %v1390
        %v1392 = vand.u32 %v1252, 4294901760
        %v1393 = vsub.f32 %v1252, %v1392
        %v1394 = vand.u32 %v1393, 4294901760
        %v1395 = vsub.f32 %v1393, %v1394
        %v1396 = vand.u32 %v1395, 4294901760
        %1397 = vmatmul.f32.gmra.mxu0 %v1396
        %v1398 = vpop.f32.mrf.mxu0
        %v1399 = vadd.f32 0.0, %v1398
        %1400 = vdwg.mxu0
        %1401 = vmatpush.msra.mxu0 0.0
        %1402 = vmatpush.msra.mxu0 0.0
        %1403 = vmatpush.msra.mxu0 0.0
        %1404 = vmatpush.msra.mxu0 0.0
        %1405 = vmatpush.msra.mxu0 0.0
        %1406 = vmatpush.msra.mxu0 0.0
        %1407 = vmatpush.msra.mxu0 0.0
        %1408 = vmatpush.msra.mxu0 0.0
        %1409 = vmatpush.msra.mxu0 0.0
        %1410 = vmatpush.msra.mxu0 0.0
        %1411 = vmatpush.msra.mxu0 0.0
        %1412 = vmatpush.msra.mxu0 0.0
        %1413 = vmatpush.msra.mxu0 0.0
        %1414 = vmatpush.msra.mxu0 0.0
        %v1415 = vand.u32 %v1205, 4294901760
        %v1416 = vsub.f32 %v1205, %v1415
        %v1417 = vand.u32 %v1416, 4294901760
        %v1418 = vsub.f32 %v1416, %v1417
        %v1419 = vand.u32 %v1418, 4294901760
        %1420 = vmatpush.msra.mxu0 %v1419
        %v1421 = vand.u32 %v1204, 4294901760
        %v1422 = vsub.f32 %v1204, %v1421
        %v1423 = vand.u32 %v1422, 4294901760
        %v1424 = vsub.f32 %v1422, %v1423
        %v1425 = vand.u32 %v1424, 4294901760
        %1426 = vmatpush.msra.mxu0 %v1425
        %v1427 = vand.u32 %v1207, 4294901760
        %1428 = vmatmul.f32.gmra.mxu0 %v1427
        %v1429 = vpop.f32.mrf.mxu0
        %v1430 = vadd.f32 %v1279, %v1429
        %v1431 = vand.u32 %v1210, 4294901760
        %1432 = vmatmul.f32.gmra.mxu0 %v1431
        %v1433 = vpop.f32.mrf.mxu0
        %v1434 = vadd.f32 %v1287, %v1433
        %v1435 = vand.u32 %v1213, 4294901760
        %1436 = vmatmul.f32.gmra.mxu0 %v1435
        %v1437 = vpop.f32.mrf.mxu0
        %v1438 = vadd.f32 %v1295, %v1437
        %v1439 = vand.u32 %v1216, 4294901760
        %1440 = vmatmul.f32.gmra.mxu0 %v1439
        %v1441 = vpop.f32.mrf.mxu0
        %v1442 = vadd.f32 %v1303, %v1441
        %v1443 = vand.u32 %v1219, 4294901760
        %1444 = vmatmul.f32.gmra.mxu0 %v1443
        %v1445 = vpop.f32.mrf.mxu0
        %v1446 = vadd.f32 %v1311, %v1445
        %v1447 = vand.u32 %v1222, 4294901760
        %1448 = vmatmul.f32.gmra.mxu0 %v1447
        %v1449 = vpop.f32.mrf.mxu0
        %v1450 = vadd.f32 %v1319, %v1449
        %v1451 = vand.u32 %v1225, 4294901760
        %1452 = vmatmul.f32.gmra.mxu0 %v1451
        %v1453 = vpop.f32.mrf.mxu0
        %v1454 = vadd.f32 %v1327, %v1453
        %v1455 = vand.u32 %v1228, 4294901760
        %1456 = vmatmul.f32.gmra.mxu0 %v1455
        %v1457 = vpop.f32.mrf.mxu0
        %v1458 = vadd.f32 %v1335, %v1457
        %v1459 = vand.u32 %v1231, 4294901760
        %1460 = vmatmul.f32.gmra.mxu0 %v1459
        %v1461 = vpop.f32.mrf.mxu0
        %v1462 = vadd.f32 %v1343, %v1461
        %v1463 = vand.u32 %v1234, 4294901760
        %1464 = vmatmul.f32.gmra.mxu0 %v1463
        %v1465 = vpop.f32.mrf.mxu0
        %v1466 = vadd.f32 %v1351, %v1465
        %v1467 = vand.u32 %v1237, 4294901760
        %1468 = vmatmul.f32.gmra.mxu0 %v1467
        %v1469 = vpop.f32.mrf.mxu0
        %v1470 = vadd.f32 %v1359, %v1469
        %v1471 = vand.u32 %v1240, 4294901760
        %1472 = vmatmul.f32.gmra.mxu0 %v1471
        %v1473 = vpop.f32.mrf.mxu0
        %v1474 = vadd.f32 %v1367, %v1473
        %v1475 = vand.u32 %v1243, 4294901760
        %1476 = vmatmul.f32.gmra.mxu0 %v1475
        %v1477 = vpop.f32.mrf.mxu0
        %v1478 = vadd.f32 %v1375, %v1477
        %v1479 = vand.u32 %v1246, 4294901760
        %1480 = vmatmul.f32.gmra.mxu0 %v1479
        %v1481 = vpop.f32.mrf.mxu0
        %v1482 = vadd.f32 %v1383, %v1481
        %v1483 = vand.u32 %v1249, 4294901760
        %1484 = vmatmul.f32.gmra.mxu0 %v1483
        %v1485 = vpop.f32.mrf.mxu0
        %v1486 = vadd.f32 %v1391, %v1485
        %v1487 = vand.u32 %v1252, 4294901760
        %1488 = vmatmul.f32.gmra.mxu0 %v1487
        %v1489 = vpop.f32.mrf.mxu0
        %v1490 = vadd.f32 %v1399, %v1489
        %1491 = vdwg.mxu0
        %1492 = vmatpush.msra.mxu0 0.0
        %1493 = vmatpush.msra.mxu0 0.0
        %1494 = vmatpush.msra.mxu0 0.0
        %1495 = vmatpush.msra.mxu0 0.0
        %1496 = vmatpush.msra.mxu0 0.0
        %1497 = vmatpush.msra.mxu0 0.0
        %1498 = vmatpush.msra.mxu0 0.0
        %1499 = vmatpush.msra.mxu0 0.0
        %1500 = vmatpush.msra.mxu0 0.0
        %1501 = vmatpush.msra.mxu0 0.0
        %1502 = vmatpush.msra.mxu0 0.0
        %1503 = vmatpush.msra.mxu0 0.0
        %1504 = vmatpush.msra.mxu0 0.0
        %1505 = vmatpush.msra.mxu0 0.0
        %v1506 = vand.u32 %v1205, 4294901760
        %v1507 = vsub.f32 %v1205, %v1506
        %1508 = vmatpush.msra.mxu0 %v1507
        %v1509 = vand.u32 %v1204, 4294901760
        %v1510 = vsub.f32 %v1204, %v1509
        %1511 = vmatpush.msra.mxu0 %v1510
        %v1512 = vand.u32 %v1207, 4294901760
        %v1513 = vsub.f32 %v1207, %v1512
        %1514 = vmatmul.f32.gmra.mxu0 %v1513
        %v1515 = vpop.f32.mrf.mxu0
        %v1516 = vadd.f32 %v1430, %v1515
        %v1517 = vand.u32 %v1210, 4294901760
        %v1518 = vsub.f32 %v1210, %v1517
        %1519 = vmatmul.f32.gmra.mxu0 %v1518
        %v1520 = vpop.f32.mrf.mxu0
        %v1521 = vadd.f32 %v1434, %v1520
        %v1522 = vand.u32 %v1213, 4294901760
        %v1523 = vsub.f32 %v1213, %v1522
        %1524 = vmatmul.f32.gmra.mxu0 %v1523
        %v1525 = vpop.f32.mrf.mxu0
        %v1526 = vadd.f32 %v1438, %v1525
        %v1527 = vand.u32 %v1216, 4294901760
        %v1528 = vsub.f32 %v1216, %v1527
        %1529 = vmatmul.f32.gmra.mxu0 %v1528
        %v1530 = vpop.f32.mrf.mxu0
        %v1531 = vadd.f32 %v1442, %v1530
        %v1532 = vand.u32 %v1219, 4294901760
        %v1533 = vsub.f32 %v1219, %v1532
        %1534 = vmatmul.f32.gmra.mxu0 %v1533
        %v1535 = vpop.f32.mrf.mxu0
        %v1536 = vadd.f32 %v1446, %v1535
        %v1537 = vand.u32 %v1222, 4294901760
        %v1538 = vsub.f32 %v1222, %v1537
        %1539 = vmatmul.f32.gmra.mxu0 %v1538
        %v1540 = vpop.f32.mrf.mxu0
        %v1541 = vadd.f32 %v1450, %v1540
        %v1542 = vand.u32 %v1225, 4294901760
        %v1543 = vsub.f32 %v1225, %v1542
        %1544 = vmatmul.f32.gmra.mxu0 %v1543
        %v1545 = vpop.f32.mrf.mxu0
        %v1546 = vadd.f32 %v1454, %v1545
        %v1547 = vand.u32 %v1228, 4294901760
        %v1548 = vsub.f32 %v1228, %v1547
        %1549 = vmatmul.f32.gmra.mxu0 %v1548
        %v1550 = vpop.f32.mrf.mxu0
        %v1551 = vadd.f32 %v1458, %v1550
        %v1552 = vand.u32 %v1231, 4294901760
        %v1553 = vsub.f32 %v1231, %v1552
        %1554 = vmatmul.f32.gmra.mxu0 %v1553
        %v1555 = vpop.f32.mrf.mxu0
        %v1556 = vadd.f32 %v1462, %v1555
        %v1557 = vand.u32 %v1234, 4294901760
        %v1558 = vsub.f32 %v1234, %v1557
        %1559 = vmatmul.f32.gmra.mxu0 %v1558
        %v1560 = vpop.f32.mrf.mxu0
        %v1561 = vadd.f32 %v1466, %v1560
        %v1562 = vand.u32 %v1237, 4294901760
        %v1563 = vsub.f32 %v1237, %v1562
        %1564 = vmatmul.f32.gmra.mxu0 %v1563
        %v1565 = vpop.f32.mrf.mxu0
        %v1566 = vadd.f32 %v1470, %v1565
        %v1567 = vand.u32 %v1240, 4294901760
        %v1568 = vsub.f32 %v1240, %v1567
        %1569 = vmatmul.f32.gmra.mxu0 %v1568
        %v1570 = vpop.f32.mrf.mxu0
        %v1571 = vadd.f32 %v1474, %v1570
        %v1572 = vand.u32 %v1243, 4294901760
        %v1573 = vsub.f32 %v1243, %v1572
        %1574 = vmatmul.f32.gmra.mxu0 %v1573
        %v1575 = vpop.f32.mrf.mxu0
        %v1576 = vadd.f32 %v1478, %v1575
        %v1577 = vand.u32 %v1246, 4294901760
        %v1578 = vsub.f32 %v1246, %v1577
        %1579 = vmatmul.f32.gmra.mxu0 %v1578
        %v1580 = vpop.f32.mrf.mxu0
        %v1581 = vadd.f32 %v1482, %v1580
        %v1582 = vand.u32 %v1249, 4294901760
        %v1583 = vsub.f32 %v1249, %v1582
        %1584 = vmatmul.f32.gmra.mxu0 %v1583
        %v1585 = vpop.f32.mrf.mxu0
        %v1586 = vadd.f32 %v1486, %v1585
        %v1587 = vand.u32 %v1252, 4294901760
        %v1588 = vsub.f32 %v1252, %v1587
        %1589 = vmatmul.f32.gmra.mxu0 %v1588
        %v1590 = vpop.f32.mrf.mxu0
        %v1591 = vadd.f32 %v1490, %v1590
        %1592 = vdwg.mxu0
        %1593 = vmatpush.msra.mxu0 0.0
        %1594 = vmatpush.msra.mxu0 0.0
        %1595 = vmatpush.msra.mxu0 0.0
        %1596 = vmatpush.msra.mxu0 0.0
        %1597 = vmatpush.msra.mxu0 0.0
        %1598 = vmatpush.msra.mxu0 0.0
        %1599 = vmatpush.msra.mxu0 0.0
        %1600 = vmatpush.msra.mxu0 0.0
        %1601 = vmatpush.msra.mxu0 0.0
        %1602 = vmatpush.msra.mxu0 0.0
        %1603 = vmatpush.msra.mxu0 0.0
        %1604 = vmatpush.msra.mxu0 0.0
        %1605 = vmatpush.msra.mxu0 0.0
        %1606 = vmatpush.msra.mxu0 0.0
        %v1607 = vand.u32 %v1205, 4294901760
        %1608 = vmatpush.msra.mxu0 %v1607
        %v1609 = vand.u32 %v1204, 4294901760
        %1610 = vmatpush.msra.mxu0 %v1609
        %v1611 = vand.u32 %v1207, 4294901760
        %v1612 = vsub.f32 %v1207, %v1611
        %v1613 = vand.u32 %v1612, 4294901760
        %1614 = vmatmul.f32.gmra.mxu0 %v1613
        %v1615 = vpop.f32.mrf.mxu0
        %v1616 = vadd.f32 %v1516, %v1615
        %v1617 = vand.u32 %v1210, 4294901760
        %v1618 = vsub.f32 %v1210, %v1617
        %v1619 = vand.u32 %v1618, 4294901760
        %1620 = vmatmul.f32.gmra.mxu0 %v1619
        %v1621 = vpop.f32.mrf.mxu0
        %v1622 = vadd.f32 %v1521, %v1621
        %v1623 = vand.u32 %v1213, 4294901760
        %v1624 = vsub.f32 %v1213, %v1623
        %v1625 = vand.u32 %v1624, 4294901760
        %1626 = vmatmul.f32.gmra.mxu0 %v1625
        %v1627 = vpop.f32.mrf.mxu0
        %v1628 = vadd.f32 %v1526, %v1627
        %v1629 = vand.u32 %v1216, 4294901760
        %v1630 = vsub.f32 %v1216, %v1629
        %v1631 = vand.u32 %v1630, 4294901760
        %1632 = vmatmul.f32.gmra.mxu0 %v1631
        %v1633 = vpop.f32.mrf.mxu0
        %v1634 = vadd.f32 %v1531, %v1633
        %v1635 = vand.u32 %v1219, 4294901760
        %v1636 = vsub.f32 %v1219, %v1635
        %v1637 = vand.u32 %v1636, 4294901760
        %1638 = vmatmul.f32.gmra.mxu0 %v1637
        %v1639 = vpop.f32.mrf.mxu0
        %v1640 = vadd.f32 %v1536, %v1639
        %v1641 = vand.u32 %v1222, 4294901760
        %v1642 = vsub.f32 %v1222, %v1641
        %v1643 = vand.u32 %v1642, 4294901760
        %1644 = vmatmul.f32.gmra.mxu0 %v1643
        %v1645 = vpop.f32.mrf.mxu0
        %v1646 = vadd.f32 %v1541, %v1645
        %v1647 = vand.u32 %v1225, 4294901760
        %v1648 = vsub.f32 %v1225, %v1647
        %v1649 = vand.u32 %v1648, 4294901760
        %1650 = vmatmul.f32.gmra.mxu0 %v1649
        %v1651 = vpop.f32.mrf.mxu0
        %v1652 = vadd.f32 %v1546, %v1651
        %v1653 = vand.u32 %v1228, 4294901760
        %v1654 = vsub.f32 %v1228, %v1653
        %v1655 = vand.u32 %v1654, 4294901760
        %1656 = vmatmul.f32.gmra.mxu0 %v1655
        %v1657 = vpop.f32.mrf.mxu0
        %v1658 = vadd.f32 %v1551, %v1657
        %v1659 = vand.u32 %v1231, 4294901760
        %v1660 = vsub.f32 %v1231, %v1659
        %v1661 = vand.u32 %v1660, 4294901760
        %1662 = vmatmul.f32.gmra.mxu0 %v1661
        %v1663 = vpop.f32.mrf.mxu0
        %v1664 = vadd.f32 %v1556, %v1663
        %v1665 = vand.u32 %v1234, 4294901760
        %v1666 = vsub.f32 %v1234, %v1665
        %v1667 = vand.u32 %v1666, 4294901760
        %1668 = vmatmul.f32.gmra.mxu0 %v1667
        %v1669 = vpop.f32.mrf.mxu0
        %v1670 = vadd.f32 %v1561, %v1669
        %v1671 = vand.u32 %v1237, 4294901760
        %v1672 = vsub.f32 %v1237, %v1671
        %v1673 = vand.u32 %v1672, 4294901760
        %1674 = vmatmul.f32.gmra.mxu0 %v1673
        %v1675 = vpop.f32.mrf.mxu0
        %v1676 = vadd.f32 %v1566, %v1675
        %v1677 = vand.u32 %v1240, 4294901760
        %v1678 = vsub.f32 %v1240, %v1677
        %v1679 = vand.u32 %v1678, 4294901760
        %1680 = vmatmul.f32.gmra.mxu0 %v1679
        %v1681 = vpop.f32.mrf.mxu0
        %v1682 = vadd.f32 %v1571, %v1681
        %v1683 = vand.u32 %v1243, 4294901760
        %v1684 = vsub.f32 %v1243, %v1683
        %v1685 = vand.u32 %v1684, 4294901760
        %1686 = vmatmul.f32.gmra.mxu0 %v1685
        %v1687 = vpop.f32.mrf.mxu0
        %v1688 = vadd.f32 %v1576, %v1687
        %v1689 = vand.u32 %v1246, 4294901760
        %v1690 = vsub.f32 %v1246, %v1689
        %v1691 = vand.u32 %v1690, 4294901760
        %1692 = vmatmul.f32.gmra.mxu0 %v1691
        %v1693 = vpop.f32.mrf.mxu0
        %v1694 = vadd.f32 %v1581, %v1693
        %v1695 = vand.u32 %v1249, 4294901760
        %v1696 = vsub.f32 %v1249, %v1695
        %v1697 = vand.u32 %v1696, 4294901760
        %1698 = vmatmul.f32.gmra.mxu0 %v1697
        %v1699 = vpop.f32.mrf.mxu0
        %v1700 = vadd.f32 %v1586, %v1699
        %v1701 = vand.u32 %v1252, 4294901760
        %v1702 = vsub.f32 %v1252, %v1701
        %v1703 = vand.u32 %v1702, 4294901760
        %1704 = vmatmul.f32.gmra.mxu0 %v1703
        %v1705 = vpop.f32.mrf.mxu0
        %v1706 = vadd.f32 %v1591, %v1705
        %1707 = vdwg.mxu0
        %1708 = vmatpush.msra.mxu0 0.0
        %1709 = vmatpush.msra.mxu0 0.0
        %1710 = vmatpush.msra.mxu0 0.0
        %1711 = vmatpush.msra.mxu0 0.0
        %1712 = vmatpush.msra.mxu0 0.0
        %1713 = vmatpush.msra.mxu0 0.0
        %1714 = vmatpush.msra.mxu0 0.0
        %1715 = vmatpush.msra.mxu0 0.0
        %1716 = vmatpush.msra.mxu0 0.0
        %1717 = vmatpush.msra.mxu0 0.0
        %1718 = vmatpush.msra.mxu0 0.0
        %1719 = vmatpush.msra.mxu0 0.0
        %1720 = vmatpush.msra.mxu0 0.0
        %1721 = vmatpush.msra.mxu0 0.0
        %v1722 = vand.u32 %v1205, 4294901760
        %v1723 = vsub.f32 %v1205, %v1722
        %v1724 = vand.u32 %v1723, 4294901760
        %1725 = vmatpush.msra.mxu0 %v1724
        %v1726 = vand.u32 %v1204, 4294901760
        %v1727 = vsub.f32 %v1204, %v1726
        %v1728 = vand.u32 %v1727, 4294901760
        %1729 = vmatpush.msra.mxu0 %v1728
        %v1730 = vand.u32 %v1207, 4294901760
        %1731 = vmatmul.f32.gmra.mxu0 %v1730
        %v1732 = vpop.f32.mrf.mxu0
        %v1733 = vadd.f32 %v1616, %v1732
        %v1734 = vand.u32 %v1210, 4294901760
        %1735 = vmatmul.f32.gmra.mxu0 %v1734
        %v1736 = vpop.f32.mrf.mxu0
        %v1737 = vadd.f32 %v1622, %v1736
        %v1738 = vand.u32 %v1213, 4294901760
        %1739 = vmatmul.f32.gmra.mxu0 %v1738
        %v1740 = vpop.f32.mrf.mxu0
        %v1741 = vadd.f32 %v1628, %v1740
        %v1742 = vand.u32 %v1216, 4294901760
        %1743 = vmatmul.f32.gmra.mxu0 %v1742
        %v1744 = vpop.f32.mrf.mxu0
        %v1745 = vadd.f32 %v1634, %v1744
        %v1746 = vand.u32 %v1219, 4294901760
        %1747 = vmatmul.f32.gmra.mxu0 %v1746
        %v1748 = vpop.f32.mrf.mxu0
        %v1749 = vadd.f32 %v1640, %v1748
        %v1750 = vand.u32 %v1222, 4294901760
        %1751 = vmatmul.f32.gmra.mxu0 %v1750
        %v1752 = vpop.f32.mrf.mxu0
        %v1753 = vadd.f32 %v1646, %v1752
        %v1754 = vand.u32 %v1225, 4294901760
        %1755 = vmatmul.f32.gmra.mxu0 %v1754
        %v1756 = vpop.f32.mrf.mxu0
        %v1757 = vadd.f32 %v1652, %v1756
        %v1758 = vand.u32 %v1228, 4294901760
        %1759 = vmatmul.f32.gmra.mxu0 %v1758
        %v1760 = vpop.f32.mrf.mxu0
        %v1761 = vadd.f32 %v1658, %v1760
        %v1762 = vand.u32 %v1231, 4294901760
        %1763 = vmatmul.f32.gmra.mxu0 %v1762
        %v1764 = vpop.f32.mrf.mxu0
        %v1765 = vadd.f32 %v1664, %v1764
        %v1766 = vand.u32 %v1234, 4294901760
        %1767 = vmatmul.f32.gmra.mxu0 %v1766
        %v1768 = vpop.f32.mrf.mxu0
        %v1769 = vadd.f32 %v1670, %v1768
        %v1770 = vand.u32 %v1237, 4294901760
        %1771 = vmatmul.f32.gmra.mxu0 %v1770
        %v1772 = vpop.f32.mrf.mxu0
        %v1773 = vadd.f32 %v1676, %v1772
        %v1774 = vand.u32 %v1240, 4294901760
        %1775 = vmatmul.f32.gmra.mxu0 %v1774
        %v1776 = vpop.f32.mrf.mxu0
        %v1777 = vadd.f32 %v1682, %v1776
        %v1778 = vand.u32 %v1243, 4294901760
        %1779 = vmatmul.f32.gmra.mxu0 %v1778
        %v1780 = vpop.f32.mrf.mxu0
        %v1781 = vadd.f32 %v1688, %v1780
        %v1782 = vand.u32 %v1246, 4294901760
        %1783 = vmatmul.f32.gmra.mxu0 %v1782
        %v1784 = vpop.f32.mrf.mxu0
        %v1785 = vadd.f32 %v1694, %v1784
        %v1786 = vand.u32 %v1249, 4294901760
        %1787 = vmatmul.f32.gmra.mxu0 %v1786
        %v1788 = vpop.f32.mrf.mxu0
        %v1789 = vadd.f32 %v1700, %v1788
        %v1790 = vand.u32 %v1252, 4294901760
        %1791 = vmatmul.f32.gmra.mxu0 %v1790
        %v1792 = vpop.f32.mrf.mxu0
        %v1793 = vadd.f32 %v1706, %v1792
        %1794 = vdwg.mxu0
        %1795 = vmatpush.msra.mxu0 0.0
        %1796 = vmatpush.msra.mxu0 0.0
        %1797 = vmatpush.msra.mxu0 0.0
        %1798 = vmatpush.msra.mxu0 0.0
        %1799 = vmatpush.msra.mxu0 0.0
        %1800 = vmatpush.msra.mxu0 0.0
        %1801 = vmatpush.msra.mxu0 0.0
        %1802 = vmatpush.msra.mxu0 0.0
        %1803 = vmatpush.msra.mxu0 0.0
        %1804 = vmatpush.msra.mxu0 0.0
        %1805 = vmatpush.msra.mxu0 0.0
        %1806 = vmatpush.msra.mxu0 0.0
        %1807 = vmatpush.msra.mxu0 0.0
        %1808 = vmatpush.msra.mxu0 0.0
        %v1809 = vand.u32 %v1205, 4294901760
        %1810 = vmatpush.msra.mxu0 %v1809
        %v1811 = vand.u32 %v1204, 4294901760
        %1812 = vmatpush.msra.mxu0 %v1811
        %v1813 = vand.u32 %v1207, 4294901760
        %1814 = vmatmul.f32.gmra.mxu0 %v1813
        %v1815 = vpop.f32.mrf.mxu0
        %v1816 = vadd.f32 %v1733, %v1815
        %v1817 = vand.u32 %v1210, 4294901760
        %1818 = vmatmul.f32.gmra.mxu0 %v1817
        %v1819 = vpop.f32.mrf.mxu0
        %v1820 = vadd.f32 %v1737, %v1819
        %v1821 = vand.u32 %v1213, 4294901760
        %1822 = vmatmul.f32.gmra.mxu0 %v1821
        %v1823 = vpop.f32.mrf.mxu0
        %v1824 = vadd.f32 %v1741, %v1823
        %v1825 = vand.u32 %v1216, 4294901760
        %1826 = vmatmul.f32.gmra.mxu0 %v1825
        %v1827 = vpop.f32.mrf.mxu0
        %v1828 = vadd.f32 %v1745, %v1827
        %v1829 = vand.u32 %v1219, 4294901760
        %1830 = vmatmul.f32.gmra.mxu0 %v1829
        %v1831 = vpop.f32.mrf.mxu0
        %v1832 = vadd.f32 %v1749, %v1831
        %v1833 = vand.u32 %v1222, 4294901760
        %1834 = vmatmul.f32.gmra.mxu0 %v1833
        %v1835 = vpop.f32.mrf.mxu0
        %v1836 = vadd.f32 %v1753, %v1835
        %v1837 = vand.u32 %v1225, 4294901760
        %1838 = vmatmul.f32.gmra.mxu0 %v1837
        %v1839 = vpop.f32.mrf.mxu0
        %v1840 = vadd.f32 %v1757, %v1839
        %v1841 = vand.u32 %v1228, 4294901760
        %1842 = vmatmul.f32.gmra.mxu0 %v1841
        %v1843 = vpop.f32.mrf.mxu0
        %v1844 = vadd.f32 %v1761, %v1843
        %v1845 = vand.u32 %v1231, 4294901760
        %1846 = vmatmul.f32.gmra.mxu0 %v1845
        %v1847 = vpop.f32.mrf.mxu0
        %v1848 = vadd.f32 %v1765, %v1847
        %v1849 = vand.u32 %v1234, 4294901760
        %1850 = vmatmul.f32.gmra.mxu0 %v1849
        %v1851 = vpop.f32.mrf.mxu0
        %v1852 = vadd.f32 %v1769, %v1851
        %v1853 = vand.u32 %v1237, 4294901760
        %1854 = vmatmul.f32.gmra.mxu0 %v1853
        %v1855 = vpop.f32.mrf.mxu0
        %v1856 = vadd.f32 %v1773, %v1855
        %v1857 = vand.u32 %v1240, 4294901760
        %1858 = vmatmul.f32.gmra.mxu0 %v1857
        %v1859 = vpop.f32.mrf.mxu0
        %v1860 = vadd.f32 %v1777, %v1859
        %v1861 = vand.u32 %v1243, 4294901760
        %1862 = vmatmul.f32.gmra.mxu0 %v1861
        %v1863 = vpop.f32.mrf.mxu0
        %v1864 = vadd.f32 %v1781, %v1863
        %v1865 = vand.u32 %v1246, 4294901760
        %1866 = vmatmul.f32.gmra.mxu0 %v1865
        %v1867 = vpop.f32.mrf.mxu0
        %v1868 = vadd.f32 %v1785, %v1867
        %v1869 = vand.u32 %v1249, 4294901760
        %1870 = vmatmul.f32.gmra.mxu0 %v1869
        %v1871 = vpop.f32.mrf.mxu0
        %v1872 = vadd.f32 %v1789, %v1871
        %v1873 = vand.u32 %v1252, 4294901760
        %1874 = vmatmul.f32.gmra.mxu0 %v1873
        %v1875 = vpop.f32.mrf.mxu0
        %v1876 = vadd.f32 %v1793, %v1875
        %1877 = vdwg.mxu0
        %1878 = vst.msk [vmem:[%s191] sm:$0xff] %vm450, %v1816
        %1879 = vst.msk [vmem:[%s191 + $0x8] sm:$0xff] %vm450, %v1820
        %1880 = vst.msk [vmem:[%s191 + $0x10] sm:$0xff] %vm450, %v1824
        %1881 = vst.msk [vmem:[%s191 + $0x18] sm:$0xff] %vm450, %v1828
        %1882 = vst.msk [vmem:[%s191 + $0x20] sm:$0xff] %vm450, %v1832
        %1883 = vst.msk [vmem:[%s191 + $0x28] sm:$0xff] %vm450, %v1836
        %1884 = vst.msk [vmem:[%s191 + $0x30] sm:$0xff] %vm450, %v1840
        %1885 = vst.msk [vmem:[%s191 + $0x38] sm:$0xff] %vm450, %v1844
        %1886 = vst.msk [vmem:[%s191 + $0x40] sm:$0xff] %vm450, %v1848
        %1887 = vst.msk [vmem:[%s191 + $0x48] sm:$0xff] %vm450, %v1852
        %1888 = vst.msk [vmem:[%s191 + $0x50] sm:$0xff] %vm450, %v1856
        %1889 = vst.msk [vmem:[%s191 + $0x58] sm:$0xff] %vm450, %v1860
        %1890 = vst.msk [vmem:[%s191 + $0x60] sm:$0xff] %vm450, %v1864
        %1891 = vst.msk [vmem:[%s191 + $0x68] sm:$0xff] %vm450, %v1868
        %1892 = vst.msk [vmem:[%s191 + $0x70] sm:$0xff] %vm450, %v1872
        %1893 = vst.msk [vmem:[%s191 + $0x78] sm:$0xff] %vm450, %v1876
        %s1894 = sand.u32 %s96, 1
        %s1895 = scalar_lea.sflag [#allocation4], %s1894
        %s1896 = sand.u32 %s96, 1
        %s1897 = smul.addr %s1896, 128
        %s1898 = scalar_lea.vmem [#allocation5], %s1897
        // Predicated region
        $region37: #{tpu_custom_call.1} parent=31 // pred_check
          %p1899 = pneg %p106
        $region38: #{tpu_custom_call.1} parent=31 // pred_check_branch
          %1901 = sbr.rel (%p1899) target = $region40
        $region39: #{tpu_custom_call.1} parent=31 // pred_region
          %s1902 = smul.u32 4, %s20
          %1904 = vsyncadd %s1895, 0
          %s1905 = smul.addr %s1902, 4
          %s1906 = smul.addr %s1905, 8
          %s1907 = scalar_lea.hbm %s3, %s1906
          %s1908 = sshll.u32 %s1898, 4
          %s1909 = int_to_ptr.vmem [resolvable:$true] %s1908
          %s1910 = sshll.u32 %s1907, 4
          %s1911 = int_to_ptr.hbm [resolvable:$true] %s1910
          %1916 = dma.vmem_to_hbm [thread:$0]  %s1909, 2048, %s1911, %s1895, 128, 128, 8
        $region40: #{tpu_custom_call.1} parent=31 // pred_fallthru
          _
      $region32: #{tpu_custom_call.1} parent=5 // pred_fallthru
        _
      %p1917 = scmp.le.s32.totalorder 2, %s15
      // Predicated region
      $region41: #{tpu_custom_call.1} parent=5 // pred_check
        %p1918 = pneg %p1917
      $region42: #{tpu_custom_call.1} parent=5 // pred_check_branch
        %1920 = sbr.rel (%p1918) target = $region44
      $region43: #{tpu_custom_call.1} parent=5 // pred_region
        %s1921 = ssub.s32 %s15, 2
        // Predicated region
        $region45: #{tpu_custom_call.1} parent=43 // pred_check
          %p1922 = pneg %p112
        $region46: #{tpu_custom_call.1} parent=43 // pred_check_branch
          %1924 = sbr.rel (%p1922) target = $region48
        $region47: #{tpu_custom_call.1} parent=43 // pred_region
          %s1925 = sand.u32 %s97, 1
          %s1926 = scalar_lea.sflag [#allocation4], %s1925
          %s1927 = sand.u32 %s97, 1
          %s1928 = smul.addr %s1927, 128
          %s1929 = scalar_lea.vmem [#allocation5], %s1928
          %1931 = dma.done %s1926, 2048
        $region48: #{tpu_custom_call.1} parent=43 // pred_fallthru
          _
      $region44: #{tpu_custom_call.1} parent=5 // pred_fallthru
        _
    $region6: #{tpu_custom_call.1} parent=1 // loop_footer
      %s19 = sadd.s32 1, %s15
    $region7: #{tpu_custom_call.1} parent=1 // loop_footer_branch
      %14 = sbr.rel target = $region3
    $region8: #{tpu_custom_call.1} parent=1 // loop_exit
      _
    %1932 = vsyncpa [#allocation3], 1
    %s1933 = scalar_lea.sflag [#allocation3], 1
    %1934 = vsyncpa %s1933, 1
    %1935 = vsyncpa [#allocation4], 1
    %s1936 = scalar_lea.sflag [#allocation4], 1
    %1937 = vsyncpa %s1936, 1

// kernel: tpu_custom_call.1
$region0: #{tpu_custom_call.1}
  #allocation0 [shape = 'u32[]', space=smem, size = 0x4, offset = 0x4, fixed_abs, tag = 'smem constant byte address 0x4 - core index']
  #allocation1 [shape = 'u32[72,128]{1,0:T(1,128)}', space=vmem, size = 0x9000, scoped, tag = 'internal scratch']
  %s0 = inlined_call_operand.hbm [shape: f32[8,16,16], index: 0, kind: input, shape index: {}]
  %s1 = inlined_call_operand.vmem [shape: f32[32,16], index: 1, kind: input, shape index: {}]
  %s2 = inlined_call_operand.vmem [shape: f32[16,32], index: 2, kind: input, shape index: {}]
  %s3 = inlined_call_operand.hbm [shape: f32[8,32,32], index: 3, kind: output, shape index: {}]
  %s4 = sld [smem:[#allocation0]]
  $region49: #{tpu_custom_call.1} parent=0
    _
  %s6 = ssub.s32 1, %s4
  %s7 = scalar_select 0, %s6, %s4
  $region1: #{tpu_custom_call.1} parent=0
    #allocation2 [shape = 'u8[65536]{0}', space=vmem, size = 0x10000, scoped, tag = 'input window, operand 0']
    #allocation3 [shape = 's32[2]{0}', space=sflag, size = 0x8, scoped, tag = 'scoped memory for tpu_custom_call.1']
    #allocation4 [shape = 's32[2]{0}', space=sflag, size = 0x8, scoped, tag = 'scoped memory for tpu_custom_call.1']
    #allocation5 [shape = 'u8[131072]{0}', space=vmem, size = 0x20000, scoped, tag = 'output window, operand 0']
    %8 = vsyncpa [#allocation3], 0
    %s9 = scalar_lea.sflag [#allocation3], 1
    %10 = vsyncpa %s9, 0
    %11 = vsyncpa [#allocation4], 0
    %s12 = scalar_lea.sflag [#allocation4], 1
    %13 = vsyncpa %s12, 0
    loop: start=0, step=1, limit=4
    $region2: #{tpu_custom_call.1} parent=1 // loop_pre_header
      _
    $region3: #{tpu_custom_call.1} parent=1 // loop_header
      %s15 = sphi 0, %s19
      %p16 = scmp.ge.s32.totalorder %s15, 4
      %s25 = sphi 0, %s27
      %s28 = sphi 0, %s25
      %s29 = sphi 0, %s28
      %s45 = sphi 0, %s29
      %s49 = sphi 0, %s49
      %s51 = sphi 0, %s49
      %s52 = sphi 0, %s51
      %s66 = sphi 0, %s52
      %s70 = sphi 0, %s70
      %s72 = sphi 0, %s70
      %s73 = sphi 0, %s72
      %s87 = sphi 0, %s73
      %s93 = sphi 0, %s95
      %s96 = sphi 0, %s93
      %s97 = sphi 0, %s96
      %s113 = sphi 0, %s97
    $region4: #{tpu_custom_call.1} parent=1 // loop_header_branch
      %18 = sbr.rel (%p16) target = $region8
    $region5: #{tpu_custom_call.1} parent=1 // loop_body
      %s20 = ssub.s32 %s15, 1
      %s21 = ssub.s32 %s15, 2
      %s22 = sadd.s32 %s15, 1
      %s23 = ssub.s32 %s15, %s22
      %p24 = scmp.eq.s32.totalorder %s23, 0
      %s26 = sadd.s32 %s25, 1
      %s27 = scalar_select %p24, %s25, %s26
      %p30 = pneg %p24
      %p31 = scmp.eq.s32.totalorder %s15, 1
      %p32 = por %p30, %p31
      %p33 = scmp.ne.s32.totalorder %s25, %s28
      %p34 = scmp.eq.s32.totalorder %s15, 0
      %p35 = por %p33, %p34
      %p36 = scmp.ne.s32.totalorder %s25, %s28
      %p37 = scmp.eq.s32.totalorder %s20, 1
      %p38 = por %p36, %p37
      %p39 = scmp.ne.s32.totalorder %s28, %s29
      %p40 = scmp.eq.s32.totalorder %s20, 0
      %p41 = por %p39, %p40
      %p42 = scmp.ne.s32.totalorder %s28, %s29
      %p43 = scmp.eq.s32.totalorder %s21, 1
      %p44 = por %p42, %p43
      %p46 = scmp.ne.s32.totalorder %s29, %s45
      %p47 = scmp.eq.s32.totalorder %s21, 0
      %p48 = por %p46, %p47
      %s50 = sadd.s32 %s49, 1
      %p53 = scmp.eq.s32.totalorder %s15, 1
      %p54 = scmp.ne.s32.totalorder %s49, %s51
      %p55 = scmp.eq.s32.totalorder %s15, 0
      %p56 = por %p54, %p55
      %p57 = scmp.ne.s32.totalorder %s49, %s51
      %p58 = scmp.eq.s32.totalorder %s20, 1
      %p59 = por %p57, %p58
      %p60 = scmp.ne.s32.totalorder %s51, %s52
      %p61 = scmp.eq.s32.totalorder %s20, 0
      %p62 = por %p60, %p61
      %p63 = scmp.ne.s32.totalorder %s51, %s52
      %p64 = scmp.eq.s32.totalorder %s21, 1
      %p65 = por %p63, %p64
      %p67 = scmp.ne.s32.totalorder %s52, %s66
      %p68 = scmp.eq.s32.totalorder %s21, 0
      %p69 = por %p67, %p68
      %s71 = sadd.s32 %s70, 1
      %p74 = scmp.eq.s32.totalorder %s15, 1
      %p75 = scmp.ne.s32.totalorder %s70, %s72
      %p76 = scmp.eq.s32.totalorder %s15, 0
      %p77 = por %p75, %p76
      %p78 = scmp.ne.s32.totalorder %s70, %s72
      %p79 = scmp.eq.s32.totalorder %s20, 1
      %p80 = por %p78, %p79
      %p81 = scmp.ne.s32.totalorder %s72, %s73
      %p82 = scmp.eq.s32.totalorder %s20, 0
      %p83 = por %p81, %p82
      %p84 = scmp.ne.s32.totalorder %s72, %s73
      %p85 = scmp.eq.s32.totalorder %s21, 1
      %p86 = por %p84, %p85
      %p88 = scmp.ne.s32.totalorder %s73, %s87
      %p89 = scmp.eq.s32.totalorder %s21, 0
      %p90 = por %p88, %p89
      %s91 = ssub.s32 %s15, %s22
      %p92 = scmp.eq.s32.totalorder %s91, 0
      %s94 = sadd.s32 %s93, 1
      %s95 = scalar_select %p92, %s93, %s94
      %p98 = pneg %p92
      %p99 = scmp.eq.s32.totalorder %s15, 1
      %p100 = por %p98, %p99
      %p101 = scmp.ne.s32.totalorder %s93, %s96
      %p102 = scmp.eq.s32.totalorder %s15, 0
      %p103 = por %p101, %p102
      %p104 = scmp.ne.s32.totalorder %s93, %s96
      %p105 = scmp.eq.s32.totalorder %s20, 1
      %p106 = por %p104, %p105
      %p107 = scmp.ne.s32.totalorder %s96, %s97
      %p108 = scmp.eq.s32.totalorder %s20, 0
      %p109 = por %p107, %p108
      %p110 = scmp.ne.s32.totalorder %s96, %s97
      %p111 = scmp.eq.s32.totalorder %s21, 1
      %p112 = por %p110, %p111
      %p114 = scmp.ne.s32.totalorder %s97, %s113
      %p115 = scmp.eq.s32.totalorder %s21, 0
      %p116 = por %p114, %p115
      %p117 = scmp.le.s32.totalorder 1, %s15
      %p118 = scmp.lt.s32.totalorder %s15, 3
      %p119 = pnand %p117, %p118
      %p120 = pneg %p119
      // Predicated region
      $region9: #{tpu_custom_call.1} parent=5 // pred_check
        _
      $region10: #{tpu_custom_call.1} parent=5 // pred_check_branch
        %122 = sbr.rel (%p119) target = $region12
      $region11: #{tpu_custom_call.1} parent=5 // pred_region
        %s123 = ssub.s32 %s15, 1
        // Predicated region
        $region13: #{tpu_custom_call.1} parent=11 // pred_check
          %p124 = pneg %p62
        $region14: #{tpu_custom_call.1} parent=11 // pred_check_branch
          %126 = sbr.rel (%p124) target = $region16
        $region15: #{tpu_custom_call.1} parent=11 // pred_region
          _
        $region16: #{tpu_custom_call.1} parent=11 // pred_fallthru
          _
        // Predicated region
        $region17: #{tpu_custom_call.1} parent=11 // pred_check
          %p127 = pneg %p83
        $region18: #{tpu_custom_call.1} parent=11 // pred_check_branch
          %129 = sbr.rel (%p127) target = $region20
        $region19: #{tpu_custom_call.1} parent=11 // pred_region
          _
        $region20: #{tpu_custom_call.1} parent=11 // pred_fallthru
          _
      $region12: #{tpu_custom_call.1} parent=5 // pred_fallthru
        _
      %p130 = scmp.lt.s32.totalorder %s15, 2
      // Predicated region
      $region21: #{tpu_custom_call.1} parent=5 // pred_check
        %p131 = pneg %p130
      $region22: #{tpu_custom_call.1} parent=5 // pred_check_branch
        %133 = sbr.rel (%p131) target = $region24
      $region23: #{tpu_custom_call.1} parent=5 // pred_region
        // Predicated region
        $region25: #{tpu_custom_call.1} parent=23 // pred_check
          %p134 = pneg %p35
        $region26: #{tpu_custom_call.1} parent=23 // pred_check_branch
          %136 = sbr.rel (%p134) target = $region28
        $region27: #{tpu_custom_call.1} parent=23 // pred_region
          %s137 = sand.u32 %s25, 1
          %s138 = scalar_lea.sflag [#allocation3], %s137
          %s139 = sand.u32 %s25, 1
          %s140 = smul.addr %s139, 64
          %s141 = scalar_lea.vmem [#allocation2], %s140
          %s142 = smul.u32 4, %s15
          %144 = vsyncadd %s138, 0
          %s145 = smul.addr %s142, 2
          %s146 = smul.addr %s145, 8
          %s147 = scalar_lea.hbm %s0, %s146
          %s148 = sshll.u32 %s147, 4
          %s149 = int_to_ptr.hbm [resolvable:$true] %s148
          %s150 = sshll.u32 %s141, 4
          %s151 = int_to_ptr.vmem [resolvable:$true] %s150
          %156 = dma.hbm_to_vmem [thread:$0]  %s149, 1024, %s151, %s138, 128, 128, 8
        $region28: #{tpu_custom_call.1} parent=23 // pred_fallthru
          _
      $region24: #{tpu_custom_call.1} parent=5 // pred_fallthru
        _
      %p157 = scmp.le.s32.totalorder 1, %s15
      %p158 = scmp.lt.s32.totalorder %s15, 3
      %p159 = pnand %p157, %p158
      %p160 = pneg %p159
      // Predicated region
      $region29: #{tpu_custom_call.1} parent=5 // pred_check
        _
      $region30: #{tpu_custom_call.1} parent=5 // pred_check_branch
        %162 = sbr.rel (%p159) target = $region32
      $region31: #{tpu_custom_call.1} parent=5 // pred_region
        %s163 = ssub.s32 %s15, 1
        %s164 = sand.u32 %s28, 1
        %s165 = scalar_lea.sflag [#allocation3], %s164
        %s166 = sand.u32 %s28, 1
        %s167 = smul.addr %s166, 64
        %s168 = scalar_lea.vmem [#allocation2], %s167
        // Predicated region
        $region33: #{tpu_custom_call.1} parent=31 // pred_check
          %p169 = pneg %p41
        $region34: #{tpu_custom_call.1} parent=31 // pred_check_branch
          %171 = sbr.rel (%p169) target = $region36
        $region35: #{tpu_custom_call.1} parent=31 // pred_region
          %173 = dma.done %s165, 1024
        $region36: #{tpu_custom_call.1} parent=31 // pred_fallthru
          _
        %s174 = sand.u32 %s28, 1
        %s175 = scalar_lea.sflag [#allocation3], %s174
        %s176 = sand.u32 %s28, 1
        %s177 = smul.addr %s176, 64
        %s178 = scalar_lea.vmem [#allocation2], %s177
        %p179 = pneg %p41
        %p180 = pneg %p38
        %p181 = pneg %p62
        %p182 = pneg %p59
        %p183 = pneg %p83
        %p184 = pneg %p80
        %p185 = pneg %p109
        %p186 = pneg %p106
        %s187 = sand.u32 %s96, 1
        %s188 = scalar_lea.sflag [#allocation4], %s187
        %s189 = sand.u32 %s96, 1
        %s190 = smul.addr %s189, 128
        %s191 = scalar_lea.vmem [#allocation5], %s190
        %s192 = smul.u32 4, %s20
        %s193 = smul.u32 4, %s20
        %v194 = vld [vmem:[%s168] sm:$0xff]
        %v195 = vld [vmem:[%s168 + $0x8] sm:$0xff]
        %v196 = vld [vmem:[%s168 + $0x10] sm:$0xff]
        %v197 = vld [vmem:[%s168 + $0x18] sm:$0xff]
        %v198 = vld [vmem:[%s168 + $0x20] sm:$0xff]
        %v199 = vld [vmem:[%s168 + $0x28] sm:$0xff]
        %v200 = vld [vmem:[%s168 + $0x30] sm:$0xff]
        %v201 = vld [vmem:[%s168 + $0x38] sm:$0xff]
        %v202 = vrot.slane %v198, 4
        %vm203 = vcmask 1047556
        %v204 = vsel %vm203, %v202, %v194
        %v205 = vrot.slane %v194, 4
        %v206 = vsel %vm203, %v198, %v205
        %v208 = vunpack.c.l.s4 1983009808
        %v209 = vunpack.c.0.s8 %v208
        %v210 = vperm.slane %v204, %v209
        %v212 = vunpack.c.l.s4 1983009808
        %v213 = vunpack.c.0.s8 %v212
        %v214 = vperm.slane %v206, %v213
        %v215 = vrot.slane %v200, 4
        %v216 = vsel %vm203, %v215, %v196
        %v217 = vrot.slane %v196, 4
        %v218 = vsel %vm203, %v200, %v217
        %v220 = vunpack.c.l.s4 1983009808
        %v221 = vunpack.c.0.s8 %v220
        %v222 = vperm.slane %v216, %v221
        %v224 = vunpack.c.l.s4 1983009808
        %v225 = vunpack.c.0.s8 %v224
        %v226 = vperm.slane %v218, %v225
        %v227 = vrot.slane %v222, 4
        %v228 = vsel %vm203, %v227, %v210
        %v229 = vrot.slane %v210, 4
        %v230 = vsel %vm203, %v222, %v229
        %v232 = vunpack.c.l.s4 1934713408
        %v233 = vunpack.c.0.s8 %v232
        %v234 = vperm.slane %v228, %v233
        %v236 = vunpack.c.l.s4 1934713408
        %v237 = vunpack.c.0.s8 %v236
        %v238 = vperm.slane %v230, %v237
        %v239 = vrot.slane %v226, 4
        %v240 = vsel %vm203, %v239, %v214
        %v241 = vrot.slane %v214, 4
        %v242 = vsel %vm203, %v226, %v241
        %v244 = vunpack.c.l.s4 1934713408
        %v245 = vunpack.c.0.s8 %v244
        %v246 = vperm.slane %v240, %v245
        %v248 = vunpack.c.l.s4 1934713408
        %v249 = vunpack.c.0.s8 %v248
        %v250 = vperm.slane %v242, %v249
        %v251 = vrot.slane %v234, 4
        %v252 = vsel %vm203, 0.0, %v251
        %v253 = vrot.slane %v238, 4
        %v254 = vsel %vm203, 0.0, %v253
        %v255 = vrot.slane %v246, 4
        %v256 = vsel %vm203, 0.0, %v255
        %v257 = vrot.slane %v250, 4
        %v258 = vsel %vm203, 0.0, %v257
        %v259 = vrot.slane %v199, 4
        %v260 = vsel %vm203, %v259, %v195
        %v261 = vrot.slane %v195, 4
        %v262 = vsel %vm203, %v199, %v261
        %v264 = vunpack.c.l.s4 1983009808
        %v265 = vunpack.c.0.s8 %v264
        %v266 = vperm.slane %v260, %v265
        %v268 = vunpack.c.l.s4 1983009808
        %v269 = vunpack.c.0.s8 %v268
        %v270 = vperm.slane %v262, %v269
        %v271 = vrot.slane %v201, 4
        %v272 = vsel %vm203, %v271, %v197
        %v273 = vrot.slane %v197, 4
        %v274 = vsel %vm203, %v201, %v273
        %v276 = vunpack.c.l.s4 1983009808
        %v277 = vunpack.c.0.s8 %v276
        %v278 = vperm.slane %v272, %v277
        %v280 = vunpack.c.l.s4 1983009808
        %v281 = vunpack.c.0.s8 %v280
        %v282 = vperm.slane %v274, %v281
        %v283 = vrot.slane %v278, 4
        %v284 = vsel %vm203, %v283, %v266
        %v285 = vrot.slane %v266, 4
        %v286 = vsel %vm203, %v278, %v285
        %v288 = vunpack.c.l.s4 1934713408
        %v289 = vunpack.c.0.s8 %v288
        %v290 = vperm.slane %v284, %v289
        %v292 = vunpack.c.l.s4 1934713408
        %v293 = vunpack.c.0.s8 %v292
        %v294 = vperm.slane %v286, %v293
        %v295 = vrot.slane %v282, 4
        %v296 = vsel %vm203, %v295, %v270
        %v297 = vrot.slane %v270, 4
        %v298 = vsel %vm203, %v282, %v297
        %v300 = vunpack.c.l.s4 1934713408
        %v301 = vunpack.c.0.s8 %v300
        %v302 = vperm.slane %v296, %v301
        %v304 = vunpack.c.l.s4 1934713408
        %v305 = vunpack.c.0.s8 %v304
        %v306 = vperm.slane %v298, %v305
        %v307 = vrot.slane %v290, 4
        %v308 = vsel %vm203, 0.0, %v307
        %v309 = vrot.slane %v294, 4
        %v310 = vsel %vm203, 0.0, %v309
        %v311 = vrot.slane %v302, 4
        %v312 = vsel %vm203, 0.0, %v311
        %v313 = vrot.slane %v306, 4
        %v314 = vsel %vm203, 0.0, %v313
        %v315 = vsel %vm203, %v253, %v234
        %v317 = vunpack.c.l.s4 1983009808
        %v318 = vunpack.c.0.s8 %v317
        %v319 = vperm.slane %v315, %v318
        %v320 = vrot.slane %v254, 4
        %v321 = vsel %vm203, %v320, %v252
        %v323 = vunpack.c.l.s4 1983009808
        %v324 = vunpack.c.0.s8 %v323
        %v325 = vperm.slane %v321, %v324
        %v326 = vsel %vm203, %v257, %v246
        %v328 = vunpack.c.l.s4 1983009808
        %v329 = vunpack.c.0.s8 %v328
        %v330 = vperm.slane %v326, %v329
        %v331 = vrot.slane %v258, 4
        %v332 = vsel %vm203, %v331, %v256
        %v334 = vunpack.c.l.s4 1983009808
        %v335 = vunpack.c.0.s8 %v334
        %v336 = vperm.slane %v332, %v335
        %v337 = vrot.slane %v325, 4
        %v338 = vsel %vm203, %v337, %v319
        %v339 = vrot.slane %v319, 4
        %v340 = vsel %vm203, %v325, %v339
        %v342 = vunpack.c.l.s4 1934713408
        %v343 = vunpack.c.0.s8 %v342
        %v344 = vperm.slane %v338, %v343
        %v346 = vunpack.c.l.s4 1934713408
        %v347 = vunpack.c.0.s8 %v346
        %v348 = vperm.slane %v340, %v347
        %v349 = vrot.slane %v336, 4
        %v350 = vsel %vm203, %v349, %v330
        %v351 = vrot.slane %v330, 4
        %v352 = vsel %vm203, %v336, %v351
        %v354 = vunpack.c.l.s4 1934713408
        %v355 = vunpack.c.0.s8 %v354
        %v356 = vperm.slane %v350, %v355
        %v358 = vunpack.c.l.s4 1934713408
        %v359 = vunpack.c.0.s8 %v358
        %v360 = vperm.slane %v352, %v359
        %v361 = vrot.slane %v356, 4
        %v362 = vsel %vm203, %v361, %v344
        %v363 = vrot.slane %v344, 4
        %v364 = vsel %vm203, %v356, %v363
        %v365 = vrot.slane %v360, 4
        %v366 = vsel %vm203, %v365, %v348
        %v367 = vrot.slane %v348, 4
        %v368 = vsel %vm203, %v360, %v367
        %v369 = vsel %vm203, %v309, %v290
        %v371 = vunpack.c.l.s4 1983009808
        %v372 = vunpack.c.0.s8 %v371
        %v373 = vperm.slane %v369, %v372
        %v374 = vrot.slane %v310, 4
        %v375 = vsel %vm203, %v374, %v308
        %v377 = vunpack.c.l.s4 1983009808
        %v378 = vunpack.c.0.s8 %v377
        %v379 = vperm.slane %v375, %v378
        %v380 = vsel %vm203, %v313, %v302
        %v382 = vunpack.c.l.s4 1983009808
        %v383 = vunpack.c.0.s8 %v382
        %v384 = vperm.slane %v380, %v383
        %v385 = vrot.slane %v314, 4
        %v386 = vsel %vm203, %v385, %v312
        %v388 = vunpack.c.l.s4 1983009808
        %v389 = vunpack.c.0.s8 %v388
        %v390 = vperm.slane %v386, %v389
        %v391 = vrot.slane %v379, 4
        %v392 = vsel %vm203, %v391, %v373
        %v393 = vrot.slane %v373, 4
        %v394 = vsel %vm203, %v379, %v393
        %v396 = vunpack.c.l.s4 1934713408
        %v397 = vunpack.c.0.s8 %v396
        %v398 = vperm.slane %v392, %v397
        %v400 = vunpack.c.l.s4 1934713408
        %v401 = vunpack.c.0.s8 %v400
        %v402 = vperm.slane %v394, %v401
        %v403 = vrot.slane %v390, 4
        %v404 = vsel %vm203, %v403, %v384
        %v405 = vrot.slane %v384, 4
        %v406 = vsel %vm203, %v390, %v405
        %v408 = vunpack.c.l.s4 1934713408
        %v409 = vunpack.c.0.s8 %v408
        %v410 = vperm.slane %v404, %v409
        %v412 = vunpack.c.l.s4 1934713408
        %v413 = vunpack.c.0.s8 %v412
        %v414 = vperm.slane %v406, %v413
        %v415 = vrot.slane %v410, 4
        %v416 = vsel %vm203, %v415, %v398
        %v417 = vrot.slane %v398, 4
        %v418 = vsel %vm203, %v410, %v417
        %v419 = vrot.slane %v414, 4
        %v420 = vsel %vm203, %v419, %v402
        %v421 = vrot.slane %v402, 4
        %v422 = vsel %vm203, %v414, %v421
        %425 = vrot.lane.b32.xlu0 %v364, 16
        %v426 = vpop.permute.xlu0 %425
        %427 = vrot.lane.b32.xlu0 %v418, 16
        %v428 = vpop.permute.xlu0 %427
        %433 = vrot.lane.b32.xlu0 %v366, 32
        %v434 = vpop.permute.xlu0 %433
        %435 = vrot.lane.b32.xlu0 %v420, 32
        %v436 = vpop.permute.xlu0 %435
        %441 = vrot.lane.b32.xlu0 %v368, 48
        %v442 = vpop.permute.xlu0 %441
        %443 = vrot.lane.b32.xlu0 %v422, 48
        %v444 = vpop.permute.xlu0 %443
        %vm447 = vcmask 130048
        %v448 = vsel %vm447, %v362, %v426
        %v449 = vsel %vm447, %v416, %v428
        %vm450 = vcmask 261120
        %v451 = vsel %vm450, %v448, %v434
        %v452 = vsel %vm450, %v449, %v436
        %vm453 = vcmask 392192
        %v454 = vsel %vm453, %v451, %v442
        %v455 = vsel %vm453, %v452, %v444
        %v456 = vld [vmem:[%s1] sm:$0xff]
        %v457 = vld [vmem:[%s1 + $0x8] sm:$0xff]
        %v458 = vld [vmem:[%s1 + $0x10] sm:$0xff]
        %v459 = vld [vmem:[%s1 + $0x18] sm:$0xff]
        %v461 = vsel %vm447, %v456, 0
        %v464 = vsel %vm447, %v457, 0
        %v467 = vsel %vm447, %v458, 0
        %v470 = vsel %vm447, %v459, 0
        %472 = vmatpush.msra.mxu0 0.0
        %473 = vmatpush.msra.mxu0 0.0
        %474 = vmatpush.msra.mxu0 0.0
        %475 = vmatpush.msra.mxu0 0.0
        %476 = vmatpush.msra.mxu0 0.0
        %477 = vmatpush.msra.mxu0 0.0
        %478 = vmatpush.msra.mxu0 0.0
        %479 = vmatpush.msra.mxu0 0.0
        %480 = vmatpush.msra.mxu0 0.0
        %481 = vmatpush.msra.mxu0 0.0
        %482 = vmatpush.msra.mxu0 0.0
        %483 = vmatpush.msra.mxu0 0.0
        %484 = vmatpush.msra.mxu0 0.0
        %485 = vmatpush.msra.mxu0 0.0
        %v486 = vand.u32 %v455, 4294901760
        %487 = vmatpush.msra.mxu0 %v486
        %v488 = vand.u32 %v454, 4294901760
        %489 = vmatpush.msra.mxu0 %v488
        %v490 = vand.u32 %v461, 4294901760
        %v491 = vsub.f32 %v461, %v490
        %v492 = vand.u32 %v491, 4294901760
        %v493 = vsub.f32 %v491, %v492
        %v494 = vand.u32 %v493, 4294901760
        %495 = vmatmul.f32.gmra.mxu0 %v494
        %v496 = vpop.f32.mrf.mxu0
        %v497 = vadd.f32 0.0, %v496
        %v498 = vand.u32 %v464, 4294901760
        %v499 = vsub.f32 %v464, %v498
        %v500 = vand.u32 %v499, 4294901760
        %v501 = vsub.f32 %v499, %v500
        %v502 = vand.u32 %v501, 4294901760
        %503 = vmatmul.f32.gmra.mxu0 %v502
        %v504 = vpop.f32.mrf.mxu0
        %v505 = vadd.f32 0.0, %v504
        %v506 = vand.u32 %v467, 4294901760
        %v507 = vsub.f32 %v467, %v506
        %v508 = vand.u32 %v507, 4294901760
        %v509 = vsub.f32 %v507, %v508
        %v510 = vand.u32 %v509, 4294901760
        %511 = vmatmul.f32.gmra.mxu0 %v510
        %v512 = vpop.f32.mrf.mxu0
        %v513 = vadd.f32 0.0, %v512
        %v514 = vand.u32 %v470, 4294901760
        %v515 = vsub.f32 %v470, %v514
        %v516 = vand.u32 %v515, 4294901760
        %v517 = vsub.f32 %v515, %v516
        %v518 = vand.u32 %v517, 4294901760
        %519 = vmatmul.f32.gmra.mxu0 %v518
        %v520 = vpop.f32.mrf.mxu0
        %v521 = vadd.f32 0.0, %v520
        %522 = vdwg.mxu0
        %523 = vmatpush.msra.mxu0 0.0
        %524 = vmatpush.msra.mxu0 0.0
        %525 = vmatpush.msra.mxu0 0.0
        %526 = vmatpush.msra.mxu0 0.0
        %527 = vmatpush.msra.mxu0 0.0
        %528 = vmatpush.msra.mxu0 0.0
        %529 = vmatpush.msra.mxu0 0.0
        %530 = vmatpush.msra.mxu0 0.0
        %531 = vmatpush.msra.mxu0 0.0
        %532 = vmatpush.msra.mxu0 0.0
        %533 = vmatpush.msra.mxu0 0.0
        %534 = vmatpush.msra.mxu0 0.0
        %535 = vmatpush.msra.mxu0 0.0
        %536 = vmatpush.msra.mxu0 0.0
        %v537 = vand.u32 %v455, 4294901760
        %v538 = vsub.f32 %v455, %v537
        %v539 = vand.u32 %v538, 4294901760
        %v540 = vsub.f32 %v538, %v539
        %v541 = vand.u32 %v540, 4294901760
        %542 = vmatpush.msra.mxu0 %v541
        %v543 = vand.u32 %v454, 4294901760
        %v544 = vsub.f32 %v454, %v543
        %v545 = vand.u32 %v544, 4294901760
        %v546 = vsub.f32 %v544, %v545
        %v547 = vand.u32 %v546, 4294901760
        %548 = vmatpush.msra.mxu0 %v547
        %v549 = vand.u32 %v461, 4294901760
        %550 = vmatmul.f32.gmra.mxu0 %v549
        %v551 = vpop.f32.mrf.mxu0
        %v552 = vadd.f32 %v497, %v551
        %v553 = vand.u32 %v464, 4294901760
        %554 = vmatmul.f32.gmra.mxu0 %v553
        %v555 = vpop.f32.mrf.mxu0
        %v556 = vadd.f32 %v505, %v555
        %v557 = vand.u32 %v467, 4294901760
        %558 = vmatmul.f32.gmra.mxu0 %v557
        %v559 = vpop.f32.mrf.mxu0
        %v560 = vadd.f32 %v513, %v559
        %v561 = vand.u32 %v470, 4294901760
        %562 = vmatmul.f32.gmra.mxu0 %v561
        %v563 = vpop.f32.mrf.mxu0
        %v564 = vadd.f32 %v521, %v563
        %565 = vdwg.mxu0
        %566 = vmatpush.msra.mxu0 0.0
        %567 = vmatpush.msra.mxu0 0.0
        %568 = vmatpush.msra.mxu0 0.0
        %569 = vmatpush.msra.mxu0 0.0
        %570 = vmatpush.msra.mxu0 0.0
        %571 = vmatpush.msra.mxu0 0.0
        %572 = vmatpush.msra.mxu0 0.0
        %573 = vmatpush.msra.mxu0 0.0
        %574 = vmatpush.msra.mxu0 0.0
        %575 = vmatpush.msra.mxu0 0.0
        %576 = vmatpush.msra.mxu0 0.0
        %577 = vmatpush.msra.mxu0 0.0
        %578 = vmatpush.msra.mxu0 0.0
        %579 = vmatpush.msra.mxu0 0.0
        %v580 = vand.u32 %v455, 4294901760
        %v581 = vsub.f32 %v455, %v580
        %582 = vmatpush.msra.mxu0 %v581
        %v583 = vand.u32 %v454, 4294901760
        %v584 = vsub.f32 %v454, %v583
        %585 = vmatpush.msra.mxu0 %v584
        %v586 = vand.u32 %v461, 4294901760
        %v587 = vsub.f32 %v461, %v586
        %588 = vmatmul.f32.gmra.mxu0 %v587
        %v589 = vpop.f32.mrf.mxu0
        %v590 = vadd.f32 %v552, %v589
        %v591 = vand.u32 %v464, 4294901760
        %v592 = vsub.f32 %v464, %v591
        %593 = vmatmul.f32.gmra.mxu0 %v592
        %v594 = vpop.f32.mrf.mxu0
        %v595 = vadd.f32 %v556, %v594
        %v596 = vand.u32 %v467, 4294901760
        %v597 = vsub.f32 %v467, %v596
        %598 = vmatmul.f32.gmra.mxu0 %v597
        %v599 = vpop.f32.mrf.mxu0
        %v600 = vadd.f32 %v560, %v599
        %v601 = vand.u32 %v470, 4294901760
        %v602 = vsub.f32 %v470, %v601
        %603 = vmatmul.f32.gmra.mxu0 %v602
        %v604 = vpop.f32.mrf.mxu0
        %v605 = vadd.f32 %v564, %v604
        %606 = vdwg.mxu0
        %607 = vmatpush.msra.mxu0 0.0
        %608 = vmatpush.msra.mxu0 0.0
        %609 = vmatpush.msra.mxu0 0.0
        %610 = vmatpush.msra.mxu0 0.0
        %611 = vmatpush.msra.mxu0 0.0
        %612 = vmatpush.msra.mxu0 0.0
        %613 = vmatpush.msra.mxu0 0.0
        %614 = vmatpush.msra.mxu0 0.0
        %615 = vmatpush.msra.mxu0 0.0
        %616 = vmatpush.msra.mxu0 0.0
        %617 = vmatpush.msra.mxu0 0.0
        %618 = vmatpush.msra.mxu0 0.0
        %619 = vmatpush.msra.mxu0 0.0
        %620 = vmatpush.msra.mxu0 0.0
        %v621 = vand.u32 %v455, 4294901760
        %622 = vmatpush.msra.mxu0 %v621
        %v623 = vand.u32 %v454, 4294901760
        %624 = vmatpush.msra.mxu0 %v623
        %v625 = vand.u32 %v461, 4294901760
        %v626 = vsub.f32 %v461, %v625
        %v627 = vand.u32 %v626, 4294901760
        %628 = vmatmul.f32.gmra.mxu0 %v627
        %v629 = vpop.f32.mrf.mxu0
        %v630 = vadd.f32 %v590, %v629
        %v631 = vand.u32 %v464, 4294901760
        %v632 = vsub.f32 %v464, %v631
        %v633 = vand.u32 %v632, 4294901760
        %634 = vmatmul.f32.gmra.mxu0 %v633
        %v635 = vpop.f32.mrf.mxu0
        %v636 = vadd.f32 %v595, %v635
        %v637 = vand.u32 %v467, 4294901760
        %v638 = vsub.f32 %v467, %v637
        %v639 = vand.u32 %v638, 4294901760
        %640 = vmatmul.f32.gmra.mxu0 %v639
        %v641 = vpop.f32.mrf.mxu0
        %v642 = vadd.f32 %v600, %v641
        %v643 = vand.u32 %v470, 4294901760
        %v644 = vsub.f32 %v470, %v643
        %v645 = vand.u32 %v644, 4294901760
        %646 = vmatmul.f32.gmra.mxu0 %v645
        %v647 = vpop.f32.mrf.mxu0
        %v648 = vadd.f32 %v605, %v647
        %649 = vdwg.mxu0
        %650 = vmatpush.msra.mxu0 0.0
        %651 = vmatpush.msra.mxu0 0.0
        %652 = vmatpush.msra.mxu0 0.0
        %653 = vmatpush.msra.mxu0 0.0
        %654 = vmatpush.msra.mxu0 0.0
        %655 = vmatpush.msra.mxu0 0.0
        %656 = vmatpush.msra.mxu0 0.0
        %657 = vmatpush.msra.mxu0 0.0
        %658 = vmatpush.msra.mxu0 0.0
        %659 = vmatpush.msra.mxu0 0.0
        %660 = vmatpush.msra.mxu0 0.0
        %661 = vmatpush.msra.mxu0 0.0
        %662 = vmatpush.msra.mxu0 0.0
        %663 = vmatpush.msra.mxu0 0.0
        %v664 = vand.u32 %v455, 4294901760
        %v665 = vsub.f32 %v455, %v664
        %v666 = vand.u32 %v665, 4294901760
        %667 = vmatpush.msra.mxu0 %v666
        %v668 = vand.u32 %v454, 4294901760
        %v669 = vsub.f32 %v454, %v668
        %v670 = vand.u32 %v669, 4294901760
        %671 = vmatpush.msra.mxu0 %v670
        %v672 = vand.u32 %v461, 4294901760
        %673 = vmatmul.f32.gmra.mxu0 %v672
        %v674 = vpop.f32.mrf.mxu0
        %v675 = vadd.f32 %v630, %v674
        %v676 = vand.u32 %v464, 4294901760
        %677 = vmatmul.f32.gmra.mxu0 %v676
        %v678 = vpop.f32.mrf.mxu0
        %v679 = vadd.f32 %v636, %v678
        %v680 = vand.u32 %v467, 4294901760
        %681 = vmatmul.f32.gmra.mxu0 %v680
        %v682 = vpop.f32.mrf.mxu0
        %v683 = vadd.f32 %v642, %v682
        %v684 = vand.u32 %v470, 4294901760
        %685 = vmatmul.f32.gmra.mxu0 %v684
        %v686 = vpop.f32.mrf.mxu0
        %v687 = vadd.f32 %v648, %v686
        %688 = vdwg.mxu0
        %689 = vmatpush.msra.mxu0 0.0
        %690 = vmatpush.msra.mxu0 0.0
        %691 = vmatpush.msra.mxu0 0.0
        %692 = vmatpush.msra.mxu0 0.0
        %693 = vmatpush.msra.mxu0 0.0
        %694 = vmatpush.msra.mxu0 0.0
        %695 = vmatpush.msra.mxu0 0.0
        %696 = vmatpush.msra.mxu0 0.0
        %697 = vmatpush.msra.mxu0 0.0
        %698 = vmatpush.msra.mxu0 0.0
        %699 = vmatpush.msra.mxu0 0.0
        %700 = vmatpush.msra.mxu0 0.0
        %701 = vmatpush.msra.mxu0 0.0
        %702 = vmatpush.msra.mxu0 0.0
        %v703 = vand.u32 %v455, 4294901760
        %704 = vmatpush.msra.mxu0 %v703
        %v705 = vand.u32 %v454, 4294901760
        %706 = vmatpush.msra.mxu0 %v705
        %v707 = vand.u32 %v461, 4294901760
        %708 = vmatmul.f32.gmra.mxu0 %v707
        %v709 = vpop.f32.mrf.mxu0
        %v710 = vadd.f32 %v675, %v709
        %v711 = vand.u32 %v464, 4294901760
        %712 = vmatmul.f32.gmra.mxu0 %v711
        %v713 = vpop.f32.mrf.mxu0
        %v714 = vadd.f32 %v679, %v713
        %v715 = vand.u32 %v467, 4294901760
        %716 = vmatmul.f32.gmra.mxu0 %v715
        %v717 = vpop.f32.mrf.mxu0
        %v718 = vadd.f32 %v683, %v717
        %v719 = vand.u32 %v470, 4294901760
        %720 = vmatmul.f32.gmra.mxu0 %v719
        %v721 = vpop.f32.mrf.mxu0
        %v722 = vadd.f32 %v687, %v721
        %723 = vdwg.mxu0
        %728 = vrot.lane.b32.xlu0 %v710, 112
        %v729 = vpop.permute.xlu0 %728
        %730 = vrot.lane.b32.xlu0 %v714, 112
        %v731 = vpop.permute.xlu0 %730
        %732 = vrot.lane.b32.xlu0 %v718, 112
        %v733 = vpop.permute.xlu0 %732
        %734 = vrot.lane.b32.xlu0 %v722, 112
        %v735 = vpop.permute.xlu0 %734
        %740 = vrot.lane.b32.xlu0 %v710, 96
        %v741 = vpop.permute.xlu0 %740
        %742 = vrot.lane.b32.xlu0 %v714, 96
        %v743 = vpop.permute.xlu0 %742
        %744 = vrot.lane.b32.xlu0 %v718, 96
        %v745 = vpop.permute.xlu0 %744
        %746 = vrot.lane.b32.xlu0 %v722, 96
        %v747 = vpop.permute.xlu0 %746
        %752 = vrot.lane.b32.xlu0 %v710, 80
        %v753 = vpop.permute.xlu0 %752
        %754 = vrot.lane.b32.xlu0 %v714, 80
        %v755 = vpop.permute.xlu0 %754
        %756 = vrot.lane.b32.xlu0 %v718, 80
        %v757 = vpop.permute.xlu0 %756
        %758 = vrot.lane.b32.xlu0 %v722, 80
        %v759 = vpop.permute.xlu0 %758
        %v764 = vrot.slane %v741, 4
        %v765 = vsel %vm203, %v764, %v710
        %v766 = vrot.slane %v710, 4
        %v767 = vsel %vm203, %v741, %v766
        %v769 = vunpack.c.l.s4 1983009808
        %v770 = vunpack.c.0.s8 %v769
        %v771 = vperm.slane %v765, %v770
        %v773 = vunpack.c.l.s4 1983009808
        %v774 = vunpack.c.0.s8 %v773
        %v775 = vperm.slane %v767, %v774
        %v776 = vrot.slane %v753, 4
        %v777 = vsel %vm203, %v776, %v729
        %v778 = vrot.slane %v729, 4
        %v779 = vsel %vm203, %v753, %v778
        %v781 = vunpack.c.l.s4 1983009808
        %v782 = vunpack.c.0.s8 %v781
        %v783 = vperm.slane %v777, %v782
        %v785 = vunpack.c.l.s4 1983009808
        %v786 = vunpack.c.0.s8 %v785
        %v787 = vperm.slane %v779, %v786
        %v788 = vrot.slane %v783, 4
        %v789 = vsel %vm203, %v788, %v771
        %v790 = vrot.slane %v771, 4
        %v791 = vsel %vm203, %v783, %v790
        %v793 = vunpack.c.l.s4 1934713408
        %v794 = vunpack.c.0.s8 %v793
        %v795 = vperm.slane %v789, %v794
        %v797 = vunpack.c.l.s4 1934713408
        %v798 = vunpack.c.0.s8 %v797
        %v799 = vperm.slane %v791, %v798
        %v800 = vrot.slane %v787, 4
        %v801 = vsel %vm203, %v800, %v775
        %v802 = vrot.slane %v775, 4
        %v803 = vsel %vm203, %v787, %v802
        %v805 = vunpack.c.l.s4 1934713408
        %v806 = vunpack.c.0.s8 %v805
        %v807 = vperm.slane %v801, %v806
        %v809 = vunpack.c.l.s4 1934713408
        %v810 = vunpack.c.0.s8 %v809
        %v811 = vperm.slane %v803, %v810
        %v812 = vrot.slane %v795, 4
        %v813 = vsel %vm203, 0.0, %v812
        %v814 = vrot.slane %v799, 4
        %v815 = vsel %vm203, 0.0, %v814
        %v816 = vrot.slane %v807, 4
        %v817 = vsel %vm203, 0.0, %v816
        %v818 = vrot.slane %v811, 4
        %v819 = vsel %vm203, 0.0, %v818
        %v820 = vrot.slane %v743, 4
        %v821 = vsel %vm203, %v820, %v714
        %v822 = vrot.slane %v714, 4
        %v823 = vsel %vm203, %v743, %v822
        %v825 = vunpack.c.l.s4 1983009808
        %v826 = vunpack.c.0.s8 %v825
        %v827 = vperm.slane %v821, %v826
        %v829 = vunpack.c.l.s4 1983009808
        %v830 = vunpack.c.0.s8 %v829
        %v831 = vperm.slane %v823, %v830
        %v832 = vrot.slane %v755, 4
        %v833 = vsel %vm203, %v832, %v731
        %v834 = vrot.slane %v731, 4
        %v835 = vsel %vm203, %v755, %v834
        %v837 = vunpack.c.l.s4 1983009808
        %v838 = vunpack.c.0.s8 %v837
        %v839 = vperm.slane %v833, %v838
        %v841 = vunpack.c.l.s4 1983009808
        %v842 = vunpack.c.0.s8 %v841
        %v843 = vperm.slane %v835, %v842
        %v844 = vrot.slane %v839, 4
        %v845 = vsel %vm203, %v844, %v827
        %v846 = vrot.slane %v827, 4
        %v847 = vsel %vm203, %v839, %v846
        %v849 = vunpack.c.l.s4 1934713408
        %v850 = vunpack.c.0.s8 %v849
        %v851 = vperm.slane %v845, %v850
        %v853 = vunpack.c.l.s4 1934713408
        %v854 = vunpack.c.0.s8 %v853
        %v855 = vperm.slane %v847, %v854
        %v856 = vrot.slane %v843, 4
        %v857 = vsel %vm203, %v856, %v831
        %v858 = vrot.slane %v831, 4
        %v859 = vsel %vm203, %v843, %v858
        %v861 = vunpack.c.l.s4 1934713408
        %v862 = vunpack.c.0.s8 %v861
        %v863 = vperm.slane %v857, %v862
        %v865 = vunpack.c.l.s4 1934713408
        %v866 = vunpack.c.0.s8 %v865
        %v867 = vperm.slane %v859, %v866
        %v868 = vrot.slane %v851, 4
        %v869 = vsel %vm203, 0.0, %v868
        %v870 = vrot.slane %v855, 4
        %v871 = vsel %vm203, 0.0, %v870
        %v872 = vrot.slane %v863, 4
        %v873 = vsel %vm203, 0.0, %v872
        %v874 = vrot.slane %v867, 4
        %v875 = vsel %vm203, 0.0, %v874
        %v876 = vrot.slane %v745, 4
        %v877 = vsel %vm203, %v876, %v718
        %v878 = vrot.slane %v718, 4
        %v879 = vsel %vm203, %v745, %v878
        %v881 = vunpack.c.l.s4 1983009808
        %v882 = vunpack.c.0.s8 %v881
        %v883 = vperm.slane %v877, %v882
        %v885 = vunpack.c.l.s4 1983009808
        %v886 = vunpack.c.0.s8 %v885
        %v887 = vperm.slane %v879, %v886
        %v888 = vrot.slane %v757, 4
        %v889 = vsel %vm203, %v888, %v733
        %v890 = vrot.slane %v733, 4
        %v891 = vsel %vm203, %v757, %v890
        %v893 = vunpack.c.l.s4 1983009808
        %v894 = vunpack.c.0.s8 %v893
        %v895 = vperm.slane %v889, %v894
        %v897 = vunpack.c.l.s4 1983009808
        %v898 = vunpack.c.0.s8 %v897
        %v899 = vperm.slane %v891, %v898
        %v900 = vrot.slane %v895, 4
        %v901 = vsel %vm203, %v900, %v883
        %v902 = vrot.slane %v883, 4
        %v903 = vsel %vm203, %v895, %v902
        %v905 = vunpack.c.l.s4 1934713408
        %v906 = vunpack.c.0.s8 %v905
        %v907 = vperm.slane %v901, %v906
        %v909 = vunpack.c.l.s4 1934713408
        %v910 = vunpack.c.0.s8 %v909
        %v911 = vperm.slane %v903, %v910
        %v912 = vrot.slane %v899, 4
        %v913 = vsel %vm203, %v912, %v887
        %v914 = vrot.slane %v887, 4
        %v915 = vsel %vm203, %v899, %v914
        %v917 = vunpack.c.l.s4 1934713408
        %v918 = vunpack.c.0.s8 %v917
        %v919 = vperm.slane %v913, %v918
        %v921 = vunpack.c.l.s4 1934713408
        %v922 = vunpack.c.0.s8 %v921
        %v923 = vperm.slane %v915, %v922
        %v924 = vrot.slane %v907, 4
        %v925 = vsel %vm203, 0.0, %v924
        %v926 = vrot.slane %v911, 4
        %v927 = vsel %vm203, 0.0, %v926
        %v928 = vrot.slane %v919, 4
        %v929 = vsel %vm203, 0.0, %v928
        %v930 = vrot.slane %v923, 4
        %v931 = vsel %vm203, 0.0, %v930
        %v932 = vrot.slane %v747, 4
        %v933 = vsel %vm203, %v932, %v722
        %v934 = vrot.slane %v722, 4
        %v935 = vsel %vm203, %v747, %v934
        %v937 = vunpack.c.l.s4 1983009808
        %v938 = vunpack.c.0.s8 %v937
        %v939 = vperm.slane %v933, %v938
        %v941 = vunpack.c.l.s4 1983009808
        %v942 = vunpack.c.0.s8 %v941
        %v943 = vperm.slane %v935, %v942
        %v944 = vrot.slane %v759, 4
        %v945 = vsel %vm203, %v944, %v735
        %v946 = vrot.slane %v735, 4
        %v947 = vsel %vm203, %v759, %v946
        %v949 = vunpack.c.l.s4 1983009808
        %v950 = vunpack.c.0.s8 %v949
        %v951 = vperm.slane %v945, %v950
        %v953 = vunpack.c.l.s4 1983009808
        %v954 = vunpack.c.0.s8 %v953
        %v955 = vperm.slane %v947, %v954
        %v956 = vrot.slane %v951, 4
        %v957 = vsel %vm203, %v956, %v939
        %v958 = vrot.slane %v939, 4
        %v959 = vsel %vm203, %v951, %v958
        %v961 = vunpack.c.l.s4 1934713408
        %v962 = vunpack.c.0.s8 %v961
        %v963 = vperm.slane %v957, %v962
        %v965 = vunpack.c.l.s4 1934713408
        %v966 = vunpack.c.0.s8 %v965
        %v967 = vperm.slane %v959, %v966
        %v968 = vrot.slane %v955, 4
        %v969 = vsel %vm203, %v968, %v943
        %v970 = vrot.slane %v943, 4
        %v971 = vsel %vm203, %v955, %v970
        %v973 = vunpack.c.l.s4 1934713408
        %v974 = vunpack.c.0.s8 %v973
        %v975 = vperm.slane %v969, %v974
        %v977 = vunpack.c.l.s4 1934713408
        %v978 = vunpack.c.0.s8 %v977
        %v979 = vperm.slane %v971, %v978
        %v980 = vrot.slane %v963, 4
        %v981 = vsel %vm203, 0.0, %v980
        %v982 = vrot.slane %v967, 4
        %v983 = vsel %vm203, 0.0, %v982
        %v984 = vrot.slane %v975, 4
        %v985 = vsel %vm203, 0.0, %v984
        %v986 = vrot.slane %v979, 4
        %v987 = vsel %vm203, 0.0, %v986
        %v988 = vsel %vm203, %v814, %v795
        %v990 = vunpack.c.l.s4 1983009808
        %v991 = vunpack.c.0.s8 %v990
        %v992 = vperm.slane %v988, %v991
        %v993 = vrot.slane %v815, 4
        %v994 = vsel %vm203, %v993, %v813
        %v996 = vunpack.c.l.s4 1983009808
        %v997 = vunpack.c.0.s8 %v996
        %v998 = vperm.slane %v994, %v997
        %v999 = vsel %vm203, %v818, %v807
        %v1001 = vunpack.c.l.s4 1983009808
        %v1002 = vunpack.c.0.s8 %v1001
        %v1003 = vperm.slane %v999, %v1002
        %v1004 = vrot.slane %v819, 4
        %v1005 = vsel %vm203, %v1004, %v817
        %v1007 = vunpack.c.l.s4 1983009808
        %v1008 = vunpack.c.0.s8 %v1007
        %v1009 = vperm.slane %v1005, %v1008
        %v1010 = vrot.slane %v998, 4
        %v1011 = vsel %vm203, %v1010, %v992
        %v1012 = vrot.slane %v992, 4
        %v1013 = vsel %vm203, %v998, %v1012
        %v1015 = vunpack.c.l.s4 1934713408
        %v1016 = vunpack.c.0.s8 %v1015
        %v1017 = vperm.slane %v1011, %v1016
        %v1019 = vunpack.c.l.s4 1934713408
        %v1020 = vunpack.c.0.s8 %v1019
        %v1021 = vperm.slane %v1013, %v1020
        %v1022 = vrot.slane %v1009, 4
        %v1023 = vsel %vm203, %v1022, %v1003
        %v1024 = vrot.slane %v1003, 4
        %v1025 = vsel %vm203, %v1009, %v1024
        %v1027 = vunpack.c.l.s4 1934713408
        %v1028 = vunpack.c.0.s8 %v1027
        %v1029 = vperm.slane %v1023, %v1028
        %v1031 = vunpack.c.l.s4 1934713408
        %v1032 = vunpack.c.0.s8 %v1031
        %v1033 = vperm.slane %v1025, %v1032
        %v1034 = vrot.slane %v1029, 4
        %v1035 = vsel %vm203, %v1034, %v1017
        %v1036 = vrot.slane %v1017, 4
        %v1037 = vsel %vm203, %v1029, %v1036
        %v1038 = vrot.slane %v1033, 4
        %v1039 = vsel %vm203, %v1038, %v1021
        %v1040 = vrot.slane %v1021, 4
        %v1041 = vsel %vm203, %v1033, %v1040
        %v1042 = vsel %vm203, %v870, %v851
        %v1044 = vunpack.c.l.s4 1983009808
        %v1045 = vunpack.c.0.s8 %v1044
        %v1046 = vperm.slane %v1042, %v1045
        %v1047 = vrot.slane %v871, 4
        %v1048 = vsel %vm203, %v1047, %v869
        %v1050 = vunpack.c.l.s4 1983009808
        %v1051 = vunpack.c.0.s8 %v1050
        %v1052 = vperm.slane %v1048, %v1051
        %v1053 = vsel %vm203, %v874, %v863
        %v1055 = vunpack.c.l.s4 1983009808
        %v1056 = vunpack.c.0.s8 %v1055
        %v1057 = vperm.slane %v1053, %v1056
        %v1058 = vrot.slane %v875, 4
        %v1059 = vsel %vm203, %v1058, %v873
        %v1061 = vunpack.c.l.s4 1983009808
        %v1062 = vunpack.c.0.s8 %v1061
        %v1063 = vperm.slane %v1059, %v1062
        %v1064 = vrot.slane %v1052, 4
        %v1065 = vsel %vm203, %v1064, %v1046
        %v1066 = vrot.slane %v1046, 4
        %v1067 = vsel %vm203, %v1052, %v1066
        %v1069 = vunpack.c.l.s4 1934713408
        %v1070 = vunpack.c.0.s8 %v1069
        %v1071 = vperm.slane %v1065, %v1070
        %v1073 = vunpack.c.l.s4 1934713408
        %v1074 = vunpack.c.0.s8 %v1073
        %v1075 = vperm.slane %v1067, %v1074
        %v1076 = vrot.slane %v1063, 4
        %v1077 = vsel %vm203, %v1076, %v1057
        %v1078 = vrot.slane %v1057, 4
        %v1079 = vsel %vm203, %v1063, %v1078
        %v1081 = vunpack.c.l.s4 1934713408
        %v1082 = vunpack.c.0.s8 %v1081
        %v1083 = vperm.slane %v1077, %v1082
        %v1085 = vunpack.c.l.s4 1934713408
        %v1086 = vunpack.c.0.s8 %v1085
        %v1087 = vperm.slane %v1079, %v1086
        %v1088 = vrot.slane %v1083, 4
        %v1089 = vsel %vm203, %v1088, %v1071
        %v1090 = vrot.slane %v1071, 4
        %v1091 = vsel %vm203, %v1083, %v1090
        %v1092 = vrot.slane %v1087, 4
        %v1093 = vsel %vm203, %v1092, %v1075
        %v1094 = vrot.slane %v1075, 4
        %v1095 = vsel %vm203, %v1087, %v1094
        %v1096 = vsel %vm203, %v926, %v907
        %v1098 = vunpack.c.l.s4 1983009808
        %v1099 = vunpack.c.0.s8 %v1098
        %v1100 = vperm.slane %v1096, %v1099
        %v1101 = vrot.slane %v927, 4
        %v1102 = vsel %vm203, %v1101, %v925
        %v1104 = vunpack.c.l.s4 1983009808
        %v1105 = vunpack.c.0.s8 %v1104
        %v1106 = vperm.slane %v1102, %v1105
        %v1107 = vsel %vm203, %v930, %v919
        %v1109 = vunpack.c.l.s4 1983009808
        %v1110 = vunpack.c.0.s8 %v1109
        %v1111 = vperm.slane %v1107, %v1110
        %v1112 = vrot.slane %v931, 4
        %v1113 = vsel %vm203, %v1112, %v929
        %v1115 = vunpack.c.l.s4 1983009808
        %v1116 = vunpack.c.0.s8 %v1115
        %v1117 = vperm.slane %v1113, %v1116
        %v1118 = vrot.slane %v1106, 4
        %v1119 = vsel %vm203, %v1118, %v1100
        %v1120 = vrot.slane %v1100, 4
        %v1121 = vsel %vm203, %v1106, %v1120
        %v1123 = vunpack.c.l.s4 1934713408
        %v1124 = vunpack.c.0.s8 %v1123
        %v1125 = vperm.slane %v1119, %v1124
        %v1127 = vunpack.c.l.s4 1934713408
        %v1128 = vunpack.c.0.s8 %v1127
        %v1129 = vperm.slane %v1121, %v1128
        %v1130 = vrot.slane %v1117, 4
        %v1131 = vsel %vm203, %v1130, %v1111
        %v1132 = vrot.slane %v1111, 4
        %v1133 = vsel %vm203, %v1117, %v1132
        %v1135 = vunpack.c.l.s4 1934713408
        %v1136 = vunpack.c.0.s8 %v1135
        %v1137 = vperm.slane %v1131, %v1136
        %v1139 = vunpack.c.l.s4 1934713408
        %v1140 = vunpack.c.0.s8 %v1139
        %v1141 = vperm.slane %v1133, %v1140
        %v1142 = vrot.slane %v1137, 4
        %v1143 = vsel %vm203, %v1142, %v1125
        %v1144 = vrot.slane %v1125, 4
        %v1145 = vsel %vm203, %v1137, %v1144
        %v1146 = vrot.slane %v1141, 4
        %v1147 = vsel %vm203, %v1146, %v1129
        %v1148 = vrot.slane %v1129, 4
        %v1149 = vsel %vm203, %v1141, %v1148
        %v1150 = vsel %vm203, %v982, %v963
        %v1152 = vunpack.c.l.s4 1983009808
        %v1153 = vunpack.c.0.s8 %v1152
        %v1154 = vperm.slane %v1150, %v1153
        %v1155 = vrot.slane %v983, 4
        %v1156 = vsel %vm203, %v1155, %v981
        %v1158 = vunpack.c.l.s4 1983009808
        %v1159 = vunpack.c.0.s8 %v1158
        %v1160 = vperm.slane %v1156, %v1159
        %v1161 = vsel %vm203, %v986, %v975
        %v1163 = vunpack.c.l.s4 1983009808
        %v1164 = vunpack.c.0.s8 %v1163
        %v1165 = vperm.slane %v1161, %v1164
        %v1166 = vrot.slane %v987, 4
        %v1167 = vsel %vm203, %v1166, %v985
        %v1169 = vunpack.c.l.s4 1983009808
        %v1170 = vunpack.c.0.s8 %v1169
        %v1171 = vperm.slane %v1167, %v1170
        %v1172 = vrot.slane %v1160, 4
        %v1173 = vsel %vm203, %v1172, %v1154
        %v1174 = vrot.slane %v1154, 4
        %v1175 = vsel %vm203, %v1160, %v1174
        %v1177 = vunpack.c.l.s4 1934713408
        %v1178 = vunpack.c.0.s8 %v1177
        %v1179 = vperm.slane %v1173, %v1178
        %v1181 = vunpack.c.l.s4 1934713408
        %v1182 = vunpack.c.0.s8 %v1181
        %v1183 = vperm.slane %v1175, %v1182
        %v1184 = vrot.slane %v1171, 4
        %v1185 = vsel %vm203, %v1184, %v1165
        %v1186 = vrot.slane %v1165, 4
        %v1187 = vsel %vm203, %v1171, %v1186
        %v1189 = vunpack.c.l.s4 1934713408
        %v1190 = vunpack.c.0.s8 %v1189
        %v1191 = vperm.slane %v1185, %v1190
        %v1193 = vunpack.c.l.s4 1934713408
        %v1194 = vunpack.c.0.s8 %v1193
        %v1195 = vperm.slane %v1187, %v1194
        %v1196 = vrot.slane %v1191, 4
        %v1197 = vsel %vm203, %v1196, %v1179
        %v1198 = vrot.slane %v1179, 4
        %v1199 = vsel %vm203, %v1191, %v1198
        %v1200 = vrot.slane %v1195, 4
        %v1201 = vsel %vm203, %v1200, %v1183
        %v1202 = vrot.slane %v1183, 4
        %v1203 = vsel %vm203, %v1195, %v1202
        %v1204 = vld [vmem:[%s2] sm:$0xff]
        %v1205 = vld [vmem:[%s2 + $0x8] sm:$0xff]
        %v1207 = vsel %vm447, %v1035, 0
        %v1210 = vsel %vm447, %v1089, 0
        %v1213 = vsel %vm447, %v1143, 0
        %v1216 = vsel %vm447, %v1197, 0
        %v1219 = vsel %vm447, %v1037, 0
        %v1222 = vsel %vm447, %v1091, 0
        %v1225 = vsel %vm447, %v1145, 0
        %v1228 = vsel %vm447, %v1199, 0
        %v1231 = vsel %vm447, %v1039, 0
        %v1234 = vsel %vm447, %v1093, 0
        %v1237 = vsel %vm447, %v1147, 0
        %v1240 = vsel %vm447, %v1201, 0
        %v1243 = vsel %vm447, %v1041, 0
        %v1246 = vsel %vm447, %v1095, 0
        %v1249 = vsel %vm447, %v1149, 0
        %v1252 = vsel %vm447, %v1203, 0
        %1254 = vmatpush.msra.mxu0 0.0
        %1255 = vmatpush.msra.mxu0 0.0
        %1256 = vmatpush.msra.mxu0 0.0
        %1257 = vmatpush.msra.mxu0 0.0
        %1258 = vmatpush.msra.mxu0 0.0
        %1259 = vmatpush.msra.mxu0 0.0
        %1260 = vmatpush.msra.mxu0 0.0
        %1261 = vmatpush.msra.mxu0 0.0
        %1262 = vmatpush.msra.mxu0 0.0
        %1263 = vmatpush.msra.mxu0 0.0
        %1264 = vmatpush.msra.mxu0 0.0
        %1265 = vmatpush.msra.mxu0 0.0
        %1266 = vmatpush.msra.mxu0 0.0
        %1267 = vmatpush.msra.mxu0 0.0
        %v1268 = vand.u32 %v1205, 4294901760
        %1269 = vmatpush.msra.mxu0 %v1268
        %v1270 = vand.u32 %v1204, 4294901760
        %1271 = vmatpush.msra.mxu0 %v1270
        %v1272 = vand.u32 %v1207, 4294901760
        %v1273 = vsub.f32 %v1207, %v1272
        %v1274 = vand.u32 %v1273, 4294901760
        %v1275 = vsub.f32 %v1273, %v1274
        %v1276 = vand.u32 %v1275, 4294901760
        %1277 = vmatmul.f32.gmra.mxu0 %v1276
        %v1278 = vpop.f32.mrf.mxu0
        %v1279 = vadd.f32 0.0, %v1278
        %v1280 = vand.u32 %v1210, 4294901760
        %v1281 = vsub.f32 %v1210, %v1280
        %v1282 = vand.u32 %v1281, 4294901760
        %v1283 = vsub.f32 %v1281, %v1282
        %v1284 = vand.u32 %v1283, 4294901760
        %1285 = vmatmul.f32.gmra.mxu0 %v1284
        %v1286 = vpop.f32.mrf.mxu0
        %v1287 = vadd.f32 0.0, %v1286
        %v1288 = vand.u32 %v1213, 4294901760
        %v1289 = vsub.f32 %v1213, %v1288
        %v1290 = vand.u32 %v1289, 4294901760
        %v1291 = vsub.f32 %v1289, %v1290
        %v1292 = vand.u32 %v1291, 4294901760
        %1293 = vmatmul.f32.gmra.mxu0 %v1292
        %v1294 = vpop.f32.mrf.mxu0
        %v1295 = vadd.f32 0.0, %v1294
        %v1296 = vand.u32 %v1216, 4294901760
        %v1297 = vsub.f32 %v1216, %v1296
        %v1298 = vand.u32 %v1297, 4294901760
        %v1299 = vsub.f32 %v1297, %v1298
        %v1300 = vand.u32 %v1299, 4294901760
        %1301 = vmatmul.f32.gmra.mxu0 %v1300
        %v1302 = vpop.f32.mrf.mxu0
        %v1303 = vadd.f32 0.0, %v1302
        %v1304 = vand.u32 %v1219, 4294901760
        %v1305 = vsub.f32 %v1219, %v1304
        %v1306 = vand.u32 %v1305, 4294901760
        %v1307 = vsub.f32 %v1305, %v1306
        %v1308 = vand.u32 %v1307, 4294901760
        %1309 = vmatmul.f32.gmra.mxu0 %v1308
        %v1310 = vpop.f32.mrf.mxu0
        %v1311 = vadd.f32 0.0, %v1310
        %v1312 = vand.u32 %v1222, 4294901760
        %v1313 = vsub.f32 %v1222, %v1312
        %v1314 = vand.u32 %v1313, 4294901760
        %v1315 = vsub.f32 %v1313, %v1314
        %v1316 = vand.u32 %v1315, 4294901760
        %1317 = vmatmul.f32.gmra.mxu0 %v1316
        %v1318 = vpop.f32.mrf.mxu0
        %v1319 = vadd.f32 0.0, %v1318
        %v1320 = vand.u32 %v1225, 4294901760
        %v1321 = vsub.f32 %v1225, %v1320
        %v1322 = vand.u32 %v1321, 4294901760
        %v1323 = vsub.f32 %v1321, %v1322
        %v1324 = vand.u32 %v1323, 4294901760
        %1325 = vmatmul.f32.gmra.mxu0 %v1324
        %v1326 = vpop.f32.mrf.mxu0
        %v1327 = vadd.f32 0.0, %v1326
        %v1328 = vand.u32 %v1228, 4294901760
        %v1329 = vsub.f32 %v1228, %v1328
        %v1330 = vand.u32 %v1329, 4294901760
        %v1331 = vsub.f32 %v1329, %v1330
        %v1332 = vand.u32 %v1331, 4294901760
        %1333 = vmatmul.f32.gmra.mxu0 %v1332
        %v1334 = vpop.f32.mrf.mxu0
        %v1335 = vadd.f32 0.0, %v1334
        %v1336 = vand.u32 %v1231, 4294901760
        %v1337 = vsub.f32 %v1231, %v1336
        %v1338 = vand.u32 %v1337, 4294901760
        %v1339 = vsub.f32 %v1337, %v1338
        %v1340 = vand.u32 %v1339, 4294901760
        %1341 = vmatmul.f32.gmra.mxu0 %v1340
        %v1342 = vpop.f32.mrf.mxu0
        %v1343 = vadd.f32 0.0, %v1342
        %v1344 = vand.u32 %v1234, 4294901760
        %v1345 = vsub.f32 %v1234, %v1344
        %v1346 = vand.u32 %v1345, 4294901760
        %v1347 = vsub.f32 %v1345, %v1346
        %v1348 = vand.u32 %v1347, 4294901760
        %1349 = vmatmul.f32.gmra.mxu0 %v1348
        %v1350 = vpop.f32.mrf.mxu0
        %v1351 = vadd.f32 0.0, %v1350
        %v1352 = vand.u32 %v1237, 4294901760
        %v1353 = vsub.f32 %v1237, %v1352
        %v1354 = vand.u32 %v1353, 4294901760
        %v1355 = vsub.f32 %v1353, %v1354
        %v1356 = vand.u32 %v1355, 4294901760
        %1357 = vmatmul.f32.gmra.mxu0 %v1356
        %v1358 = vpop.f32.mrf.mxu0
        %v1359 = vadd.f32 0.0, %v1358
        %v1360 = vand.u32 %v1240, 4294901760
        %v1361 = vsub.f32 %v1240, %v1360
        %v1362 = vand.u32 %v1361, 4294901760
        %v1363 = vsub.f32 %v1361, %v1362
        %v1364 = vand.u32 %v1363, 4294901760
        %1365 = vmatmul.f32.gmra.mxu0 %v1364
        %v1366 = vpop.f32.mrf.mxu0
        %v1367 = vadd.f32 0.0, %v1366
        %v1368 = vand.u32 %v1243, 4294901760
        %v1369 = vsub.f32 %v1243, %v1368
        %v1370 = vand.u32 %v1369, 4294901760
        %v1371 = vsub.f32 %v1369, %v1370
        %v1372 = vand.u32 %v1371, 4294901760
        %1373 = vmatmul.f32.gmra.mxu0 %v1372
        %v1374 = vpop.f32.mrf.mxu0
        %v1375 = vadd.f32 0.0, %v1374
        %v1376 = vand.u32 %v1246, 4294901760
        %v1377 = vsub.f32 %v1246, %v1376
        %v1378 = vand.u32 %v1377, 4294901760
        %v1379 = vsub.f32 %v1377, %v1378
        %v1380 = vand.u32 %v1379, 4294901760
        %1381 = vmatmul.f32.gmra.mxu0 %v1380
        %v1382 = vpop.f32.mrf.mxu0
        %v1383 = vadd.f32 0.0, %v1382
        %v1384 = vand.u32 %v1249, 4294901760
        %v1385 = vsub.f32 %v1249, %v1384
        %v1386 = vand.u32 %v1385, 4294901760
        %v1387 = vsub.f32 %v1385, %v1386
        %v1388 = vand.u32 %v1387, 4294901760
        %1389 = vmatmul.f32.gmra.mxu0 %v1388
        %v1390 = vpop.f32.mrf.mxu0
        %v1391 = vadd.f32 0.0, %v1390
        %v1392 = vand.u32 %v1252, 4294901760
        %v1393 = vsub.f32 %v1252, %v1392
        %v1394 = vand.u32 %v1393, 4294901760
        %v1395 = vsub.f32 %v1393, %v1394
        %v1396 = vand.u32 %v1395, 4294901760
        %1397 = vmatmul.f32.gmra.mxu0 %v1396
        %v1398 = vpop.f32.mrf.mxu0
        %v1399 = vadd.f32 0.0, %v1398
        %1400 = vdwg.mxu0
        %1401 = vmatpush.msra.mxu0 0.0
        %1402 = vmatpush.msra.mxu0 0.0
        %1403 = vmatpush.msra.mxu0 0.0
        %1404 = vmatpush.msra.mxu0 0.0
        %1405 = vmatpush.msra.mxu0 0.0
        %1406 = vmatpush.msra.mxu0 0.0
        %1407 = vmatpush.msra.mxu0 0.0
        %1408 = vmatpush.msra.mxu0 0.0
        %1409 = vmatpush.msra.mxu0 0.0
        %1410 = vmatpush.msra.mxu0 0.0
        %1411 = vmatpush.msra.mxu0 0.0
        %1412 = vmatpush.msra.mxu0 0.0
        %1413 = vmatpush.msra.mxu0 0.0
        %1414 = vmatpush.msra.mxu0 0.0
        %v1415 = vand.u32 %v1205, 4294901760
        %v1416 = vsub.f32 %v1205, %v1415
        %v1417 = vand.u32 %v1416, 4294901760
        %v1418 = vsub.f32 %v1416, %v1417
        %v1419 = vand.u32 %v1418, 4294901760
        %1420 = vmatpush.msra.mxu0 %v1419
        %v1421 = vand.u32 %v1204, 4294901760
        %v1422 = vsub.f32 %v1204, %v1421
        %v1423 = vand.u32 %v1422, 4294901760
        %v1424 = vsub.f32 %v1422, %v1423
        %v1425 = vand.u32 %v1424, 4294901760
        %1426 = vmatpush.msra.mxu0 %v1425
        %v1427 = vand.u32 %v1207, 4294901760
        %1428 = vmatmul.f32.gmra.mxu0 %v1427
        %v1429 = vpop.f32.mrf.mxu0
        %v1430 = vadd.f32 %v1279, %v1429
        %v1431 = vand.u32 %v1210, 4294901760
        %1432 = vmatmul.f32.gmra.mxu0 %v1431
        %v1433 = vpop.f32.mrf.mxu0
        %v1434 = vadd.f32 %v1287, %v1433
        %v1435 = vand.u32 %v1213, 4294901760
        %1436 = vmatmul.f32.gmra.mxu0 %v1435
        %v1437 = vpop.f32.mrf.mxu0
        %v1438 = vadd.f32 %v1295, %v1437
        %v1439 = vand.u32 %v1216, 4294901760
        %1440 = vmatmul.f32.gmra.mxu0 %v1439
        %v1441 = vpop.f32.mrf.mxu0
        %v1442 = vadd.f32 %v1303, %v1441
        %v1443 = vand.u32 %v1219, 4294901760
        %1444 = vmatmul.f32.gmra.mxu0 %v1443
        %v1445 = vpop.f32.mrf.mxu0
        %v1446 = vadd.f32 %v1311, %v1445
        %v1447 = vand.u32 %v1222, 4294901760
        %1448 = vmatmul.f32.gmra.mxu0 %v1447
        %v1449 = vpop.f32.mrf.mxu0
        %v1450 = vadd.f32 %v1319, %v1449
        %v1451 = vand.u32 %v1225, 4294901760
        %1452 = vmatmul.f32.gmra.mxu0 %v1451
        %v1453 = vpop.f32.mrf.mxu0
        %v1454 = vadd.f32 %v1327, %v1453
        %v1455 = vand.u32 %v1228, 4294901760
        %1456 = vmatmul.f32.gmra.mxu0 %v1455
        %v1457 = vpop.f32.mrf.mxu0
        %v1458 = vadd.f32 %v1335, %v1457
        %v1459 = vand.u32 %v1231, 4294901760
        %1460 = vmatmul.f32.gmra.mxu0 %v1459
        %v1461 = vpop.f32.mrf.mxu0
        %v1462 = vadd.f32 %v1343, %v1461
        %v1463 = vand.u32 %v1234, 4294901760
        %1464 = vmatmul.f32.gmra.mxu0 %v1463
        %v1465 = vpop.f32.mrf.mxu0
        %v1466 = vadd.f32 %v1351, %v1465
        %v1467 = vand.u32 %v1237, 4294901760
        %1468 = vmatmul.f32.gmra.mxu0 %v1467
        %v1469 = vpop.f32.mrf.mxu0
        %v1470 = vadd.f32 %v1359, %v1469
        %v1471 = vand.u32 %v1240, 4294901760
        %1472 = vmatmul.f32.gmra.mxu0 %v1471
        %v1473 = vpop.f32.mrf.mxu0
        %v1474 = vadd.f32 %v1367, %v1473
        %v1475 = vand.u32 %v1243, 4294901760
        %1476 = vmatmul.f32.gmra.mxu0 %v1475
        %v1477 = vpop.f32.mrf.mxu0
        %v1478 = vadd.f32 %v1375, %v1477
        %v1479 = vand.u32 %v1246, 4294901760
        %1480 = vmatmul.f32.gmra.mxu0 %v1479
        %v1481 = vpop.f32.mrf.mxu0
        %v1482 = vadd.f32 %v1383, %v1481
        %v1483 = vand.u32 %v1249, 4294901760
        %1484 = vmatmul.f32.gmra.mxu0 %v1483
        %v1485 = vpop.f32.mrf.mxu0
        %v1486 = vadd.f32 %v1391, %v1485
        %v1487 = vand.u32 %v1252, 4294901760
        %1488 = vmatmul.f32.gmra.mxu0 %v1487
        %v1489 = vpop.f32.mrf.mxu0
        %v1490 = vadd.f32 %v1399, %v1489
        %1491 = vdwg.mxu0
        %1492 = vmatpush.msra.mxu0 0.0
        %1493 = vmatpush.msra.mxu0 0.0
        %1494 = vmatpush.msra.mxu0 0.0
        %1495 = vmatpush.msra.mxu0 0.0
        %1496 = vmatpush.msra.mxu0 0.0
        %1497 = vmatpush.msra.mxu0 0.0
        %1498 = vmatpush.msra.mxu0 0.0
        %1499 = vmatpush.msra.mxu0 0.0
        %1500 = vmatpush.msra.mxu0 0.0
        %1501 = vmatpush.msra.mxu0 0.0
        %1502 = vmatpush.msra.mxu0 0.0
        %1503 = vmatpush.msra.mxu0 0.0
        %1504 = vmatpush.msra.mxu0 0.0
        %1505 = vmatpush.msra.mxu0 0.0
        %v1506 = vand.u32 %v1205, 4294901760
        %v1507 = vsub.f32 %v1205, %v1506
        %1508 = vmatpush.msra.mxu0 %v1507
        %v1509 = vand.u32 %v1204, 4294901760
        %v1510 = vsub.f32 %v1204, %v1509
        %1511 = vmatpush.msra.mxu0 %v1510
        %v1512 = vand.u32 %v1207, 4294901760
        %v1513 = vsub.f32 %v1207, %v1512
        %1514 = vmatmul.f32.gmra.mxu0 %v1513
        %v1515 = vpop.f32.mrf.mxu0
        %v1516 = vadd.f32 %v1430, %v1515
        %v1517 = vand.u32 %v1210, 4294901760
        %v1518 = vsub.f32 %v1210, %v1517
        %1519 = vmatmul.f32.gmra.mxu0 %v1518
        %v1520 = vpop.f32.mrf.mxu0
        %v1521 = vadd.f32 %v1434, %v1520
        %v1522 = vand.u32 %v1213, 4294901760
        %v1523 = vsub.f32 %v1213, %v1522
        %1524 = vmatmul.f32.gmra.mxu0 %v1523
        %v1525 = vpop.f32.mrf.mxu0
        %v1526 = vadd.f32 %v1438, %v1525
        %v1527 = vand.u32 %v1216, 4294901760
        %v1528 = vsub.f32 %v1216, %v1527
        %1529 = vmatmul.f32.gmra.mxu0 %v1528
        %v1530 = vpop.f32.mrf.mxu0
        %v1531 = vadd.f32 %v1442, %v1530
        %v1532 = vand.u32 %v1219, 4294901760
        %v1533 = vsub.f32 %v1219, %v1532
        %1534 = vmatmul.f32.gmra.mxu0 %v1533
        %v1535 = vpop.f32.mrf.mxu0
        %v1536 = vadd.f32 %v1446, %v1535
        %v1537 = vand.u32 %v1222, 4294901760
        %v1538 = vsub.f32 %v1222, %v1537
        %1539 = vmatmul.f32.gmra.mxu0 %v1538
        %v1540 = vpop.f32.mrf.mxu0
        %v1541 = vadd.f32 %v1450, %v1540
        %v1542 = vand.u32 %v1225, 4294901760
        %v1543 = vsub.f32 %v1225, %v1542
        %1544 = vmatmul.f32.gmra.mxu0 %v1543
        %v1545 = vpop.f32.mrf.mxu0
        %v1546 = vadd.f32 %v1454, %v1545
        %v1547 = vand.u32 %v1228, 4294901760
        %v1548 = vsub.f32 %v1228, %v1547
        %1549 = vmatmul.f32.gmra.mxu0 %v1548
        %v1550 = vpop.f32.mrf.mxu0
        %v1551 = vadd.f32 %v1458, %v1550
        %v1552 = vand.u32 %v1231, 4294901760
        %v1553 = vsub.f32 %v1231, %v1552
        %1554 = vmatmul.f32.gmra.mxu0 %v1553
        %v1555 = vpop.f32.mrf.mxu0
        %v1556 = vadd.f32 %v1462, %v1555
        %v1557 = vand.u32 %v1234, 4294901760
        %v1558 = vsub.f32 %v1234, %v1557
        %1559 = vmatmul.f32.gmra.mxu0 %v1558
        %v1560 = vpop.f32.mrf.mxu0
        %v1561 = vadd.f32 %v1466, %v1560
        %v1562 = vand.u32 %v1237, 4294901760
        %v1563 = vsub.f32 %v1237, %v1562
        %1564 = vmatmul.f32.gmra.mxu0 %v1563
        %v1565 = vpop.f32.mrf.mxu0
        %v1566 = vadd.f32 %v1470, %v1565
        %v1567 = vand.u32 %v1240, 4294901760
        %v1568 = vsub.f32 %v1240, %v1567
        %1569 = vmatmul.f32.gmra.mxu0 %v1568
        %v1570 = vpop.f32.mrf.mxu0
        %v1571 = vadd.f32 %v1474, %v1570
        %v1572 = vand.u32 %v1243, 4294901760
        %v1573 = vsub.f32 %v1243, %v1572
        %1574 = vmatmul.f32.gmra.mxu0 %v1573
        %v1575 = vpop.f32.mrf.mxu0
        %v1576 = vadd.f32 %v1478, %v1575
        %v1577 = vand.u32 %v1246, 4294901760
        %v1578 = vsub.f32 %v1246, %v1577
        %1579 = vmatmul.f32.gmra.mxu0 %v1578
        %v1580 = vpop.f32.mrf.mxu0
        %v1581 = vadd.f32 %v1482, %v1580
        %v1582 = vand.u32 %v1249, 4294901760
        %v1583 = vsub.f32 %v1249, %v1582
        %1584 = vmatmul.f32.gmra.mxu0 %v1583
        %v1585 = vpop.f32.mrf.mxu0
        %v1586 = vadd.f32 %v1486, %v1585
        %v1587 = vand.u32 %v1252, 4294901760
        %v1588 = vsub.f32 %v1252, %v1587
        %1589 = vmatmul.f32.gmra.mxu0 %v1588
        %v1590 = vpop.f32.mrf.mxu0
        %v1591 = vadd.f32 %v1490, %v1590
        %1592 = vdwg.mxu0
        %1593 = vmatpush.msra.mxu0 0.0
        %1594 = vmatpush.msra.mxu0 0.0
        %1595 = vmatpush.msra.mxu0 0.0
        %1596 = vmatpush.msra.mxu0 0.0
        %1597 = vmatpush.msra.mxu0 0.0
        %1598 = vmatpush.msra.mxu0 0.0
        %1599 = vmatpush.msra.mxu0 0.0
        %1600 = vmatpush.msra.mxu0 0.0
        %1601 = vmatpush.msra.mxu0 0.0
        %1602 = vmatpush.msra.mxu0 0.0
        %1603 = vmatpush.msra.mxu0 0.0
        %1604 = vmatpush.msra.mxu0 0.0
        %1605 = vmatpush.msra.mxu0 0.0
        %1606 = vmatpush.msra.mxu0 0.0
        %v1607 = vand.u32 %v1205, 4294901760
        %1608 = vmatpush.msra.mxu0 %v1607
        %v1609 = vand.u32 %v1204, 4294901760
        %1610 = vmatpush.msra.mxu0 %v1609
        %v1611 = vand.u32 %v1207, 4294901760
        %v1612 = vsub.f32 %v1207, %v1611
        %v1613 = vand.u32 %v1612, 4294901760
        %1614 = vmatmul.f32.gmra.mxu0 %v1613
        %v1615 = vpop.f32.mrf.mxu0
        %v1616 = vadd.f32 %v1516, %v1615
        %v1617 = vand.u32 %v1210, 4294901760
        %v1618 = vsub.f32 %v1210, %v1617
        %v1619 = vand.u32 %v1618, 4294901760
        %1620 = vmatmul.f32.gmra.mxu0 %v1619
        %v1621 = vpop.f32.mrf.mxu0
        %v1622 = vadd.f32 %v1521, %v1621
        %v1623 = vand.u32 %v1213, 4294901760
        %v1624 = vsub.f32 %v1213, %v1623
        %v1625 = vand.u32 %v1624, 4294901760
        %1626 = vmatmul.f32.gmra.mxu0 %v1625
        %v1627 = vpop.f32.mrf.mxu0
        %v1628 = vadd.f32 %v1526, %v1627
        %v1629 = vand.u32 %v1216, 4294901760
        %v1630 = vsub.f32 %v1216, %v1629
        %v1631 = vand.u32 %v1630, 4294901760
        %1632 = vmatmul.f32.gmra.mxu0 %v1631
        %v1633 = vpop.f32.mrf.mxu0
        %v1634 = vadd.f32 %v1531, %v1633
        %v1635 = vand.u32 %v1219, 4294901760
        %v1636 = vsub.f32 %v1219, %v1635
        %v1637 = vand.u32 %v1636, 4294901760
        %1638 = vmatmul.f32.gmra.mxu0 %v1637
        %v1639 = vpop.f32.mrf.mxu0
        %v1640 = vadd.f32 %v1536, %v1639
        %v1641 = vand.u32 %v1222, 4294901760
        %v1642 = vsub.f32 %v1222, %v1641
        %v1643 = vand.u32 %v1642, 4294901760
        %1644 = vmatmul.f32.gmra.mxu0 %v1643
        %v1645 = vpop.f32.mrf.mxu0
        %v1646 = vadd.f32 %v1541, %v1645
        %v1647 = vand.u32 %v1225, 4294901760
        %v1648 = vsub.f32 %v1225, %v1647
        %v1649 = vand.u32 %v1648, 4294901760
        %1650 = vmatmul.f32.gmra.mxu0 %v1649
        %v1651 = vpop.f32.mrf.mxu0
        %v1652 = vadd.f32 %v1546, %v1651
        %v1653 = vand.u32 %v1228, 4294901760
        %v1654 = vsub.f32 %v1228, %v1653
        %v1655 = vand.u32 %v1654, 4294901760
        %1656 = vmatmul.f32.gmra.mxu0 %v1655
        %v1657 = vpop.f32.mrf.mxu0
        %v1658 = vadd.f32 %v1551, %v1657
        %v1659 = vand.u32 %v1231, 4294901760
        %v1660 = vsub.f32 %v1231, %v1659
        %v1661 = vand.u32 %v1660, 4294901760
        %1662 = vmatmul.f32.gmra.mxu0 %v1661
        %v1663 = vpop.f32.mrf.mxu0
        %v1664 = vadd.f32 %v1556, %v1663
        %v1665 = vand.u32 %v1234, 4294901760
        %v1666 = vsub.f32 %v1234, %v1665
        %v1667 = vand.u32 %v1666, 4294901760
        %1668 = vmatmul.f32.gmra.mxu0 %v1667
        %v1669 = vpop.f32.mrf.mxu0
        %v1670 = vadd.f32 %v1561, %v1669
        %v1671 = vand.u32 %v1237, 4294901760
        %v1672 = vsub.f32 %v1237, %v1671
        %v1673 = vand.u32 %v1672, 4294901760
        %1674 = vmatmul.f32.gmra.mxu0 %v1673
        %v1675 = vpop.f32.mrf.mxu0
        %v1676 = vadd.f32 %v1566, %v1675
        %v1677 = vand.u32 %v1240, 4294901760
        %v1678 = vsub.f32 %v1240, %v1677
        %v1679 = vand.u32 %v1678, 4294901760
        %1680 = vmatmul.f32.gmra.mxu0 %v1679
        %v1681 = vpop.f32.mrf.mxu0
        %v1682 = vadd.f32 %v1571, %v1681
        %v1683 = vand.u32 %v1243, 4294901760
        %v1684 = vsub.f32 %v1243, %v1683
        %v1685 = vand.u32 %v1684, 4294901760
        %1686 = vmatmul.f32.gmra.mxu0 %v1685
        %v1687 = vpop.f32.mrf.mxu0
        %v1688 = vadd.f32 %v1576, %v1687
        %v1689 = vand.u32 %v1246, 4294901760
        %v1690 = vsub.f32 %v1246, %v1689
        %v1691 = vand.u32 %v1690, 4294901760
        %1692 = vmatmul.f32.gmra.mxu0 %v1691
        %v1693 = vpop.f32.mrf.mxu0
        %v1694 = vadd.f32 %v1581, %v1693
        %v1695 = vand.u32 %v1249, 4294901760
        %v1696 = vsub.f32 %v1249, %v1695
        %v1697 = vand.u32 %v1696, 4294901760
        %1698 = vmatmul.f32.gmra.mxu0 %v1697
        %v1699 = vpop.f32.mrf.mxu0
        %v1700 = vadd.f32 %v1586, %v1699
        %v1701 = vand.u32 %v1252, 4294901760
        %v1702 = vsub.f32 %v1252, %v1701
        %v1703 = vand.u32 %v1702, 4294901760
        %1704 = vmatmul.f32.gmra.mxu0 %v1703
        %v1705 = vpop.f32.mrf.mxu0
        %v1706 = vadd.f32 %v1591, %v1705
        %1707 = vdwg.mxu0
        %1708 = vmatpush.msra.mxu0 0.0
        %1709 = vmatpush.msra.mxu0 0.0
        %1710 = vmatpush.msra.mxu0 0.0
        %1711 = vmatpush.msra.mxu0 0.0
        %1712 = vmatpush.msra.mxu0 0.0
        %1713 = vmatpush.msra.mxu0 0.0
        %1714 = vmatpush.msra.mxu0 0.0
        %1715 = vmatpush.msra.mxu0 0.0
        %1716 = vmatpush.msra.mxu0 0.0
        %1717 = vmatpush.msra.mxu0 0.0
        %1718 = vmatpush.msra.mxu0 0.0
        %1719 = vmatpush.msra.mxu0 0.0
        %1720 = vmatpush.msra.mxu0 0.0
        %1721 = vmatpush.msra.mxu0 0.0
        %v1722 = vand.u32 %v1205, 4294901760
        %v1723 = vsub.f32 %v1205, %v1722
        %v1724 = vand.u32 %v1723, 4294901760
        %1725 = vmatpush.msra.mxu0 %v1724
        %v1726 = vand.u32 %v1204, 4294901760
        %v1727 = vsub.f32 %v1204, %v1726
        %v1728 = vand.u32 %v1727, 4294901760
        %1729 = vmatpush.msra.mxu0 %v1728
        %v1730 = vand.u32 %v1207, 4294901760
        %1731 = vmatmul.f32.gmra.mxu0 %v1730
        %v1732 = vpop.f32.mrf.mxu0
        %v1733 = vadd.f32 %v1616, %v1732
        %v1734 = vand.u32 %v1210, 4294901760
        %1735 = vmatmul.f32.gmra.mxu0 %v1734
        %v1736 = vpop.f32.mrf.mxu0
        %v1737 = vadd.f32 %v1622, %v1736
        %v1738 = vand.u32 %v1213, 4294901760
        %1739 = vmatmul.f32.gmra.mxu0 %v1738
        %v1740 = vpop.f32.mrf.mxu0
        %v1741 = vadd.f32 %v1628, %v1740
        %v1742 = vand.u32 %v1216, 4294901760
        %1743 = vmatmul.f32.gmra.mxu0 %v1742
        %v1744 = vpop.f32.mrf.mxu0
        %v1745 = vadd.f32 %v1634, %v1744
        %v1746 = vand.u32 %v1219, 4294901760
        %1747 = vmatmul.f32.gmra.mxu0 %v1746
        %v1748 = vpop.f32.mrf.mxu0
        %v1749 = vadd.f32 %v1640, %v1748
        %v1750 = vand.u32 %v1222, 4294901760
        %1751 = vmatmul.f32.gmra.mxu0 %v1750
        %v1752 = vpop.f32.mrf.mxu0
        %v1753 = vadd.f32 %v1646, %v1752
        %v1754 = vand.u32 %v1225, 4294901760
        %1755 = vmatmul.f32.gmra.mxu0 %v1754
        %v1756 = vpop.f32.mrf.mxu0
        %v1757 = vadd.f32 %v1652, %v1756
        %v1758 = vand.u32 %v1228, 4294901760
        %1759 = vmatmul.f32.gmra.mxu0 %v1758
        %v1760 = vpop.f32.mrf.mxu0
        %v1761 = vadd.f32 %v1658, %v1760
        %v1762 = vand.u32 %v1231, 4294901760
        %1763 = vmatmul.f32.gmra.mxu0 %v1762
        %v1764 = vpop.f32.mrf.mxu0
        %v1765 = vadd.f32 %v1664, %v1764
        %v1766 = vand.u32 %v1234, 4294901760
        %1767 = vmatmul.f32.gmra.mxu0 %v1766
        %v1768 = vpop.f32.mrf.mxu0
        %v1769 = vadd.f32 %v1670, %v1768
        %v1770 = vand.u32 %v1237, 4294901760
        %1771 = vmatmul.f32.gmra.mxu0 %v1770
        %v1772 = vpop.f32.mrf.mxu0
        %v1773 = vadd.f32 %v1676, %v1772
        %v1774 = vand.u32 %v1240, 4294901760
        %1775 = vmatmul.f32.gmra.mxu0 %v1774
        %v1776 = vpop.f32.mrf.mxu0
        %v1777 = vadd.f32 %v1682, %v1776
        %v1778 = vand.u32 %v1243, 4294901760
        %1779 = vmatmul.f32.gmra.mxu0 %v1778
        %v1780 = vpop.f32.mrf.mxu0
        %v1781 = vadd.f32 %v1688, %v1780
        %v1782 = vand.u32 %v1246, 4294901760
        %1783 = vmatmul.f32.gmra.mxu0 %v1782
        %v1784 = vpop.f32.mrf.mxu0
        %v1785 = vadd.f32 %v1694, %v1784
        %v1786 = vand.u32 %v1249, 4294901760
        %1787 = vmatmul.f32.gmra.mxu0 %v1786
        %v1788 = vpop.f32.mrf.mxu0
        %v1789 = vadd.f32 %v1700, %v1788
        %v1790 = vand.u32 %v1252, 4294901760
        %1791 = vmatmul.f32.gmra.mxu0 %v1790
        %v1792 = vpop.f32.mrf.mxu0
        %v1793 = vadd.f32 %v1706, %v1792
        %1794 = vdwg.mxu0
        %1795 = vmatpush.msra.mxu0 0.0
        %1796 = vmatpush.msra.mxu0 0.0
        %1797 = vmatpush.msra.mxu0 0.0
        %1798 = vmatpush.msra.mxu0 0.0
        %1799 = vmatpush.msra.mxu0 0.0
        %1800 = vmatpush.msra.mxu0 0.0
        %1801 = vmatpush.msra.mxu0 0.0
        %1802 = vmatpush.msra.mxu0 0.0
        %1803 = vmatpush.msra.mxu0 0.0
        %1804 = vmatpush.msra.mxu0 0.0
        %1805 = vmatpush.msra.mxu0 0.0
        %1806 = vmatpush.msra.mxu0 0.0
        %1807 = vmatpush.msra.mxu0 0.0
        %1808 = vmatpush.msra.mxu0 0.0
        %v1809 = vand.u32 %v1205, 4294901760
        %1810 = vmatpush.msra.mxu0 %v1809
        %v1811 = vand.u32 %v1204, 4294901760
        %1812 = vmatpush.msra.mxu0 %v1811
        %v1813 = vand.u32 %v1207, 4294901760
        %1814 = vmatmul.f32.gmra.mxu0 %v1813
        %v1815 = vpop.f32.mrf.mxu0
        %v1816 = vadd.f32 %v1733, %v1815
        %v1817 = vand.u32 %v1210, 4294901760
        %1818 = vmatmul.f32.gmra.mxu0 %v1817
        %v1819 = vpop.f32.mrf.mxu0
        %v1820 = vadd.f32 %v1737, %v1819
        %v1821 = vand.u32 %v1213, 4294901760
        %1822 = vmatmul.f32.gmra.mxu0 %v1821
        %v1823 = vpop.f32.mrf.mxu0
        %v1824 = vadd.f32 %v1741, %v1823
        %v1825 = vand.u32 %v1216, 4294901760
        %1826 = vmatmul.f32.gmra.mxu0 %v1825
        %v1827 = vpop.f32.mrf.mxu0
        %v1828 = vadd.f32 %v1745, %v1827
        %v1829 = vand.u32 %v1219, 4294901760
        %1830 = vmatmul.f32.gmra.mxu0 %v1829
        %v1831 = vpop.f32.mrf.mxu0
        %v1832 = vadd.f32 %v1749, %v1831
        %v1833 = vand.u32 %v1222, 4294901760
        %1834 = vmatmul.f32.gmra.mxu0 %v1833
        %v1835 = vpop.f32.mrf.mxu0
        %v1836 = vadd.f32 %v1753, %v1835
        %v1837 = vand.u32 %v1225, 4294901760
        %1838 = vmatmul.f32.gmra.mxu0 %v1837
        %v1839 = vpop.f32.mrf.mxu0
        %v1840 = vadd.f32 %v1757, %v1839
        %v1841 = vand.u32 %v1228, 4294901760
        %1842 = vmatmul.f32.gmra.mxu0 %v1841
        %v1843 = vpop.f32.mrf.mxu0
        %v1844 = vadd.f32 %v1761, %v1843
        %v1845 = vand.u32 %v1231, 4294901760
        %1846 = vmatmul.f32.gmra.mxu0 %v1845
        %v1847 = vpop.f32.mrf.mxu0
        %v1848 = vadd.f32 %v1765, %v1847
        %v1849 = vand.u32 %v1234, 4294901760
        %1850 = vmatmul.f32.gmra.mxu0 %v1849
        %v1851 = vpop.f32.mrf.mxu0
        %v1852 = vadd.f32 %v1769, %v1851
        %v1853 = vand.u32 %v1237, 4294901760
        %1854 = vmatmul.f32.gmra.mxu0 %v1853
        %v1855 = vpop.f32.mrf.mxu0
        %v1856 = vadd.f32 %v1773, %v1855
        %v1857 = vand.u32 %v1240, 4294901760
        %1858 = vmatmul.f32.gmra.mxu0 %v1857
        %v1859 = vpop.f32.mrf.mxu0
        %v1860 = vadd.f32 %v1777, %v1859
        %v1861 = vand.u32 %v1243, 4294901760
        %1862 = vmatmul.f32.gmra.mxu0 %v1861
        %v1863 = vpop.f32.mrf.mxu0
        %v1864 = vadd.f32 %v1781, %v1863
        %v1865 = vand.u32 %v1246, 4294901760
        %1866 = vmatmul.f32.gmra.mxu0 %v1865
        %v1867 = vpop.f32.mrf.mxu0
        %v1868 = vadd.f32 %v1785, %v1867
        %v1869 = vand.u32 %v1249, 4294901760
        %1870 = vmatmul.f32.gmra.mxu0 %v1869
        %v1871 = vpop.f32.mrf.mxu0
        %v1872 = vadd.f32 %v1789, %v1871
        %v1873 = vand.u32 %v1252, 4294901760
        %1874 = vmatmul.f32.gmra.mxu0 %v1873
        %v1875 = vpop.f32.mrf.mxu0
        %v1876 = vadd.f32 %v1793, %v1875
        %1877 = vdwg.mxu0
        %1878 = vst.msk [vmem:[%s191] sm:$0xff] %vm450, %v1816
        %1879 = vst.msk [vmem:[%s191 + $0x8] sm:$0xff] %vm450, %v1820
        %1880 = vst.msk [vmem:[%s191 + $0x10] sm:$0xff] %vm450, %v1824
        %1881 = vst.msk [vmem:[%s191 + $0x18] sm:$0xff] %vm450, %v1828
        %1882 = vst.msk [vmem:[%s191 + $0x20] sm:$0xff] %vm450, %v1832
        %1883 = vst.msk [vmem:[%s191 + $0x28] sm:$0xff] %vm450, %v1836
        %1884 = vst.msk [vmem:[%s191 + $0x30] sm:$0xff] %vm450, %v1840
        %1885 = vst.msk [vmem:[%s191 + $0x38] sm:$0xff] %vm450, %v1844
        %1886 = vst.msk [vmem:[%s191 + $0x40] sm:$0xff] %vm450, %v1848
        %1887 = vst.msk [vmem:[%s191 + $0x48] sm:$0xff] %vm450, %v1852
        %1888 = vst.msk [vmem:[%s191 + $0x50] sm:$0xff] %vm450, %v1856
        %1889 = vst.msk [vmem:[%s191 + $0x58] sm:$0xff] %vm450, %v1860
        %1890 = vst.msk [vmem:[%s191 + $0x60] sm:$0xff] %vm450, %v1864
        %1891 = vst.msk [vmem:[%s191 + $0x68] sm:$0xff] %vm450, %v1868
        %1892 = vst.msk [vmem:[%s191 + $0x70] sm:$0xff] %vm450, %v1872
        %1893 = vst.msk [vmem:[%s191 + $0x78] sm:$0xff] %vm450, %v1876
        %s1894 = sand.u32 %s96, 1
        %s1895 = scalar_lea.sflag [#allocation4], %s1894
        %s1896 = sand.u32 %s96, 1
        %s1897 = smul.addr %s1896, 128
        %s1898 = scalar_lea.vmem [#allocation5], %s1897
        // Predicated region
        $region37: #{tpu_custom_call.1} parent=31 // pred_check
          %p1899 = pneg %p106
        $region38: #{tpu_custom_call.1} parent=31 // pred_check_branch
          %1901 = sbr.rel (%p1899) target = $region40
        $region39: #{tpu_custom_call.1} parent=31 // pred_region
          %s1902 = smul.u32 4, %s20
          %1904 = vsyncadd %s1895, 0
          %s1905 = smul.addr %s1902, 4
          %s1906 = smul.addr %s1905, 8
          %s1907 = scalar_lea.hbm %s3, %s1906
          %s1908 = sshll.u32 %s1898, 4
          %s1909 = int_to_ptr.vmem [resolvable:$true] %s1908
          %s1910 = sshll.u32 %s1907, 4
          %s1911 = int_to_ptr.hbm [resolvable:$true] %s1910
          %1916 = dma.vmem_to_hbm [thread:$0]  %s1909, 2048, %s1911, %s1895, 128, 128, 8
        $region40: #{tpu_custom_call.1} parent=31 // pred_fallthru
          _
      $region32: #{tpu_custom_call.1} parent=5 // pred_fallthru
        _
      %p1917 = scmp.le.s32.totalorder 2, %s15
      // Predicated region
      $region41: #{tpu_custom_call.1} parent=5 // pred_check
        %p1918 = pneg %p1917
      $region42: #{tpu_custom_call.1} parent=5 // pred_check_branch
        %1920 = sbr.rel (%p1918) target = $region44
      $region43: #{tpu_custom_call.1} parent=5 // pred_region
        %s1921 = ssub.s32 %s15, 2
        // Predicated region
        $region45: #{tpu_custom_call.1} parent=43 // pred_check
          %p1922 = pneg %p112
        $region46: #{tpu_custom_call.1} parent=43 // pred_check_branch
          %1924 = sbr.rel (%p1922) target = $region48
        $region47: #{tpu_custom_call.1} parent=43 // pred_region
          %s1925 = sand.u32 %s97, 1
          %s1926 = scalar_lea.sflag [#allocation4], %s1925
          %s1927 = sand.u32 %s97, 1
          %s1928 = smul.addr %s1927, 128
          %s1929 = scalar_lea.vmem [#allocation5], %s1928
          %1931 = dma.done %s1926, 2048
        $region48: #{tpu_custom_call.1} parent=43 // pred_fallthru
          _
      $region44: #{tpu_custom_call.1} parent=5 // pred_fallthru
        _
    $region6: #{tpu_custom_call.1} parent=1 // loop_footer
      %s19 = sadd.s32 1, %s15
    $region7: #{tpu_custom_call.1} parent=1 // loop_footer_branch
      %14 = sbr.rel target = $region3
    $region8: #{tpu_custom_call.1} parent=1 // loop_exit
      _
    %1932 = vsyncpa [#allocation3], 1
    %s1933 = scalar_lea.sflag [#allocation3], 1
    %1934 = vsyncpa %s1933, 1
    %1935 = vsyncpa [#allocation4], 1
    %s1936 = scalar_lea.sflag [#allocation4], 1
    %1937 = vsyncpa %s1936, 1

</llo_original>
